<compile_context>
chip_gen: v7x
topology: tpu7x:2x2x1
jax: 0.10.0
libtpu: 0.0.40
codegen_flags: <defaults>
</compile_context>

<pallas_src>
import math

import jax
import jax.numpy as jnp
from jax import lax
from jax.experimental import pallas as pl
from jax.experimental.pallas import tpu as pltpu

# ---- model hyper-parameters (match the PyTorch module defaults) -------------
INPUT_DIM = 16
HIDDEN_DIM = 64
NUM_HEADS = 4
HEAD_DIM = HIDDEN_DIM // NUM_HEADS
NUM_LAYERS = 2
OUTPUT_DIM = 2
DIM_FEEDFORWARD = 2048        # nn.TransformerEncoderLayer default
REDUCED_DIM = 5               # dim_reduction output
LN_EPS = 1e-5
BATCH = 8


# ---------------------------- in-kernel math helpers --------------------------
def _layer_norm(x, gamma, beta):
    mean = jnp.mean(x, axis=-1, keepdims=True)
    var = jnp.mean((x - mean) ** 2, axis=-1, keepdims=True)
    return (x - mean) * jax.lax.rsqrt(var + LN_EPS) * gamma + beta


def _softmax(x):
    m = jnp.max(x, axis=-1, keepdims=True)
    e = jnp.exp(x - m)
    return e / jnp.sum(e, axis=-1, keepdims=True)


# ------------------------------- Pallas kernel --------------------------------
def transformer_kernel(x_ref, wi_ref, gvec_ref, ff1b_ref,
                       attnw_ref, vec_ref, ff1w_ref, ff2wt_ref,
                       out_ref, xs_ref):
    """One grid step == one encoder layer.  xs_ref carries the (B, H) activation."""
    l = pl.program_id(0)

    # ---- layer 0 prologue: input projection ------------------------------------
    @pl.when(l == 0)
    def _():
        xs_ref[...] = (jnp.dot(x_ref[...], wi_ref[...],
                               preferred_element_type=jnp.float32)
                       + gvec_ref[0, :HIDDEN_DIM])

    x = xs_ref[...]                                   # (B, 64) f32

    attn_w = attnw_ref[0]                             # (64, 256) = [in_w(q scaled)|k|v|out_w]
    vec = vec_ref[0]                                  # (8, 256) packed biases / LN params

    # ---- multi-head self-attention (seq axis == batch axis, torch N=1) ---------
    # One fused K=64 matmul; cols 0:192 = q|k|v (+in_b), cols 192:256 unused here.
    qkv = jnp.dot(x, attn_w, preferred_element_type=jnp.float32) + vec[0, :]
    ctxs = []
    for h in range(NUM_HEADS):
        lo = h * HEAD_DIM
        qh = qkv[:, lo:lo + HEAD_DIM]
        kh = qkv[:, HIDDEN_DIM + lo:HIDDEN_DIM + lo + HEAD_DIM]
        vh = qkv[:, 2 * HIDDEN_DIM + lo:2 * HIDDEN_DIM + lo + HEAD_DIM]
        # contract last axes of q and k directly (no explicit transpose); scale is
        # pre-folded into the Q columns of attn_w / vec row 0.
        s = lax.dot_general(qh, kh, (((1,), (1,)), ((), ())),
                            preferred_element_type=jnp.float32)
        p = _softmax(s)
        ctxs.append(jnp.dot(p, vh, preferred_element_type=jnp.float32))
    ctx = jnp.concatenate(ctxs, axis=-1)              # (B, 64)
    attn = (jnp.dot(ctx, attn_w[:, 3 * HIDDEN_DIM:], preferred_element_type=jnp.float32)
            + vec[0, 3 * HIDDEN_DIM:])

    ln1_w = vec[1, 0:HIDDEN_DIM]
    ln1_b = vec[1, HIDDEN_DIM:2 * HIDDEN_DIM]
    ln2_w = vec[1, 2 * HIDDEN_DIM:3 * HIDDEN_DIM]
    ln2_b = vec[1, 3 * HIDDEN_DIM:4 * HIDDEN_DIM]
    ff2_b = vec[2, 0:HIDDEN_DIM]

    # ---- post-norm feed-forward (bf16 weights, bf16 activations, f32 accum) ----
    x1 = _layer_norm(x + attn, ln1_w, ln1_b)
    ff1_b = ff1b_ref[pl.ds(l, 1), :]                  # (1, 2048)
    hdn = jnp.maximum(
        jnp.dot(x1.astype(jnp.bfloat16), ff1w_ref[0],
                preferred_element_type=jnp.float32) + ff1_b, 0.0)
    ff = lax.dot_general(hdn.astype(jnp.bfloat16), ff2wt_ref[0],
                         (((1,), (1,)), ((), ())),
                         preferred_element_type=jnp.float32) + ff2_b
    x2 = _layer_norm(x1 + ff, ln2_w, ln2_b)
    xs_ref[...] = x2

    # ---- last layer epilogue: folded dim_reduction @ dim_expansion -------------
    @pl.when(l == NUM_LAYERS - 1)
    def _():
        tail_wt = gvec_ref[1:3, :HIDDEN_DIM]          # (2, 64) == (wr @ we)^T
        tail_b = gvec_ref[3, :OUTPUT_DIM]             # (2,)
        out_ref[...] = (lax.dot_general(x2, tail_wt, (((1,), (1,)), ((), ())),
                                        preferred_element_type=jnp.float32)
                        + tail_b)


# --------------------------- parameter packing ---------------------------------
def pack_params(params):
    """Pack the canonical parameter list into lane-dense, layer-stacked slabs."""
    scale = 1.0 / math.sqrt(HEAD_DIM)
    it = iter(params)
    wi, bi = next(it), next(it)

    attn_ws, vecs, ff1_ws, ff2_wts, ff1_bs = [], [], [], [], []
    for _ in range(NUM_LAYERS):
        in_w, in_b, out_w, out_b = next(it), next(it), next(it), next(it)
        ln1_w, ln1_b, ln2_w, ln2_b = next(it), next(it), next(it), next(it)
        ff1_w, ff1_b, ff2_w, ff2_b = next(it), next(it), next(it), next(it)

        # fold 1/sqrt(head_dim) into the Q section of the in-projection
        in_w_s = jnp.concatenate([in_w[:, :HIDDEN_DIM] * scale, in_w[:, HIDDEN_DIM:]], axis=1)
        in_b_s = jnp.concatenate([in_b[:, :HIDDEN_DIM] * scale, in_b[:, HIDDEN_DIM:]], axis=1)

        attn_ws.append(jnp.concatenate([in_w_s, out_w], axis=1))          # (64, 256)
        row0 = jnp.concatenate([in_b_s, out_b], axis=1)                   # (1, 256)
        row1 = jnp.concatenate([ln1_w, ln1_b, ln2_w, ln2_b], axis=1)      # (1, 256)
        row2 = jnp.concatenate([ff2_b, jnp.zeros((1, 3 * HIDDEN_DIM), jnp.float32)], axis=1)
        vecs.append(jnp.concatenate(
            [row0, row1, row2, jnp.zeros((5, 4 * HIDDEN_DIM), jnp.float32)], axis=0))
        ff1_ws.append(ff1_w)                                              # (64, 2048) bf16
        ff2_wts.append(ff2_w.T)                                           # (64, 2048) bf16
        ff1_bs.append(ff1_b[0])                                           # (2048,) f32

    # fold dim_reduction -> dim_expansion (no nonlinearity between them in the module)
    wr, br, we, be = next(it), next(it), next(it), next(it)
    tail_w = wr @ we                                                      # (64, 2)
    tail_b = br @ we + be                                                 # (1, 2)

    gvec = jnp.zeros((8, 128), jnp.float32)
    gvec = gvec.at[0, :HIDDEN_DIM].set(bi[0])
    gvec = gvec.at[1, :HIDDEN_DIM].set(tail_w[:, 0])
    gvec = gvec.at[2, :HIDDEN_DIM].set(tail_w[:, 1])
    gvec = gvec.at[3, :OUTPUT_DIM].set(tail_b[0])

    return dict(
        wi=wi,                                    # (16, 64)  f32
        gvec=gvec,                                # (8, 128)  f32
        ff1_b=jnp.stack(ff1_bs),                  # (L, 2048) f32
        attn_w=jnp.stack(attn_ws),                # (L, 64, 256) f32
        vec=jnp.stack(vecs),                      # (L, 8, 256)  f32
        ff1_w=jnp.stack(ff1_ws),                  # (L, 64, 2048) bf16
        ff2_wt=jnp.stack(ff2_wts),                # (L, 64, 2048) bf16
    )


# ------------------------------- JAX wrapper -----------------------------------
def transformer_forward(x, p):
    grid_spec = pltpu.PrefetchScalarGridSpec(
        num_scalar_prefetch=0,
        grid=(NUM_LAYERS,),
        in_specs=[
            pl.BlockSpec((BATCH, INPUT_DIM), lambda l: (0, 0)),              # x
            pl.BlockSpec((INPUT_DIM, HIDDEN_DIM), lambda l: (0, 0)),         # wi
            pl.BlockSpec((8, 128), lambda l: (0, 0)),                        # gvec
            pl.BlockSpec((NUM_LAYERS, DIM_FEEDFORWARD), lambda l: (0, 0)),   # ff1_b
            pl.BlockSpec((1, HIDDEN_DIM, 4 * HIDDEN_DIM), lambda l: (l, 0, 0)),       # attn_w
            pl.BlockSpec((1, 8, 4 * HIDDEN_DIM), lambda l: (l, 0, 0)),                # vec
            pl.BlockSpec((1, HIDDEN_DIM, DIM_FEEDFORWARD), lambda l: (l, 0, 0)),      # ff1_w
            pl.BlockSpec((1, HIDDEN_DIM, DIM_FEEDFORWARD), lambda l: (l, 0, 0)),      # ff2_wt
        ],
        out_specs=pl.BlockSpec((BATCH, OUTPUT_DIM), lambda l: (0, 0)),
        scratch_shapes=[pltpu.VMEM((BATCH, HIDDEN_DIM), jnp.float32)],
    )
    return pl.pallas_call(
        transformer_kernel,
        out_shape=jax.ShapeDtypeStruct((BATCH, OUTPUT_DIM), jnp.float32),
        grid_spec=grid_spec,
        compiler_params=pltpu.CompilerParams(
            dimension_semantics=("arbitrary",),
            vmem_limit_bytes=8 << 20),
    )(x, p["wi"], p["gvec"], p["ff1_b"], p["attn_w"], p["vec"], p["ff1_w"], p["ff2_wt"])


# --------------------------- parameter construction ----------------------------
def init_params(key):
    """Deterministic synthetic weights in the canonical order.  Linear weights are
    pre-transposed to (in, out) so y = x @ W + b.  FF matrices are bfloat16."""
    params = []

    def dense(k, in_dim, out_dim, scale=0.05, w_dtype=jnp.float32):
        kw, kb = jax.random.split(k)
        w = (jax.random.normal(kw, (in_dim, out_dim), jnp.float32) * scale).astype(w_dtype)
        b = jax.random.normal(kb, (1, out_dim), jnp.float32) * scale
        return w, b

    keys = jax.random.split(key, 3 + NUM_LAYERS)

    w, b = dense(keys[0], INPUT_DIM, HIDDEN_DIM)                       # input_projection
    params += [w, b]

    for l in range(NUM_LAYERS):
        lk = jax.random.split(keys[1 + l], 4)
        w, b = dense(lk[0], HIDDEN_DIM, 3 * HIDDEN_DIM)                # in_proj (q|k|v)
        params += [w, b]
        w, b = dense(lk[1], HIDDEN_DIM, HIDDEN_DIM)                    # out_proj
        params += [w, b]
        params += [jnp.ones((1, HIDDEN_DIM), jnp.float32),             # norm1
                   jnp.zeros((1, HIDDEN_DIM), jnp.float32)]
        params += [jnp.ones((1, HIDDEN_DIM), jnp.float32),             # norm2
                   jnp.zeros((1, HIDDEN_DIM), jnp.float32)]
        w, b = dense(lk[2], HIDDEN_DIM, DIM_FEEDFORWARD, w_dtype=jnp.bfloat16)   # linear1
        params += [w, b]
        w, b = dense(lk[3], DIM_FEEDFORWARD, HIDDEN_DIM, w_dtype=jnp.bfloat16)   # linear2
        params += [w, b]

    w, b = dense(keys[1 + NUM_LAYERS], HIDDEN_DIM, REDUCED_DIM)        # dim_reduction
    params += [w, b]
    w, b = dense(keys[2 + NUM_LAYERS], REDUCED_DIM, OUTPUT_DIM)        # dim_expansion
    params += [w, b]
    return params


# ------------------------------ pure-JAX reference ------------------------------
def reference_forward(x, params):
    p = [jnp.asarray(a, jnp.float32) for a in params]   # same (bf16-rounded) values
    it = iter(p)
    wi, bi = next(it), next(it)
    x = x @ wi + bi
    scale = 1.0 / math.sqrt(HEAD_DIM)
    for _ in range(NUM_LAYERS):
        in_w, in_b, out_w, out_b = next(it), next(it), next(it), next(it)
        ln1_w, ln1_b, ln2_w, ln2_b = next(it), next(it), next(it), next(it)
        ff1_w, ff1_b, ff2_w, ff2_b = next(it), next(it), next(it), next(it)

        q = x @ in_w[:, :HIDDEN_DIM] + in_b[:, :HIDDEN_DIM]
        k = x @ in_w[:, HIDDEN_DIM:2 * HIDDEN_DIM] + in_b[:, HIDDEN_DIM:2 * HIDDEN_DIM]
        v = x @ in_w[:, 2 * HIDDEN_DIM:] + in_b[:, 2 * HIDDEN_DIM:]
        ctxs = []
        for h in range(NUM_HEADS):
            lo, hi = h * HEAD_DIM, (h + 1) * HEAD_DIM
            s = (q[:, lo:hi] @ k[:, lo:hi].T) * scale
            a = jax.nn.softmax(s, axis=-1)
            ctxs.append(a @ v[:, lo:hi])
        attn = jnp.concatenate(ctxs, axis=-1) @ out_w + out_b
        x = _layer_norm(x + attn, ln1_w, ln1_b)
        ff = jnp.maximum(x @ ff1_w + ff1_b, 0.0) @ ff2_w + ff2_b
        x = _layer_norm(x + ff, ln2_w, ln2_b)
    wr, br = next(it), next(it)
    we, be = next(it), next(it)
    return (x @ wr + br) @ we + be


# ------------------------------------ main --------------------------------------
if __name__ == "__main__":
    key = jax.random.PRNGKey(0)
    kx, kp = jax.random.split(key)
    x = jax.random.normal(kx, (BATCH, INPUT_DIM), jnp.float32)
    params = init_params(kp)
    packed = pack_params(params)          # one-time lane-dense packing (outside jit)

    out = jax.jit(transformer_forward)(x, packed)
    out = jax.block_until_ready(out)

    assert out.shape == (BATCH, OUTPUT_DIM), out.shape
    ref = reference_forward(x, params)
    if not jnp.allclose(out, ref, rtol=1e-2, atol=1e-2):
        raise AssertionError("Pallas kernel output does not match JAX reference")

    print("KERNEL_OK")
</pallas_src>

<mosaic_0001>
module attributes {stable_mosaic.version = 11 : i64} {
  func.func @transformer_kernel(%arg0: i32, %arg1: memref<8x16xf32, #tpu.memory_space<vmem>>, %arg2: memref<16x64xf32, #tpu.memory_space<vmem>>, %arg3: memref<8x128xf32, #tpu.memory_space<vmem>>, %arg4: memref<2x2048xf32, #tpu.memory_space<vmem>>, %arg5: memref<1x64x256xf32, #tpu.memory_space<vmem>>, %arg6: memref<1x8x256xf32, #tpu.memory_space<vmem>>, %arg7: memref<1x64x2048xbf16, #tpu.memory_space<vmem>>, %arg8: memref<1x64x2048xbf16, #tpu.memory_space<vmem>>, %arg9: memref<8x2xf32, #tpu.memory_space<vmem>>, %arg10: memref<8x64xf32, #tpu.memory_space<vmem>>) attributes {dimension_semantics = [#tpu.dimension_semantics<arbitrary>], iteration_bounds = array<i64: 2>, scalar_prefetch = 0 : i64, scratch_operands = 1 : i64, tpu.core_type = #tpu.core_type<tc>, window_params = [{pipeline_mode = #tpu.pipeline_mode<synchronous>, transform_indices = @transform_0, window_bounds = array<i64: 8, 16>}, {pipeline_mode = #tpu.pipeline_mode<synchronous>, transform_indices = @transform_1, window_bounds = array<i64: 16, 64>}, {pipeline_mode = #tpu.pipeline_mode<synchronous>, transform_indices = @transform_2, window_bounds = array<i64: 8, 128>}, {pipeline_mode = #tpu.pipeline_mode<synchronous>, transform_indices = @transform_3, window_bounds = array<i64: 2, 2048>}, {transform_indices = @transform_4, window_bounds = array<i64: 1, 64, 256>}, {transform_indices = @transform_5, window_bounds = array<i64: 1, 8, 256>}, {transform_indices = @transform_6, window_bounds = array<i64: 1, 64, 2048>}, {transform_indices = @transform_7, window_bounds = array<i64: 1, 64, 2048>}, {pipeline_mode = #tpu.pipeline_mode<synchronous>, transform_indices = @transform_8, window_bounds = array<i64: 8, 2>}]} {
    %c0_i32 = arith.constant 0 : i32
    %0 = arith.cmpi eq, %arg0, %c0_i32 : i32
    %1 = arith.extui %0 : i1 to i32
    %c0_i32_0 = arith.constant 0 : i32
    %2 = arith.cmpi ne, %1, %c0_i32_0 : i32
    scf.if %2 {
      %c0_48 = arith.constant 0 : index
      %c0_49 = arith.constant 0 : index
      %159 = vector.load %arg1[%c0_48, %c0_49] : memref<8x16xf32, #tpu.memory_space<vmem>>, vector<8x16xf32>
      %c0_50 = arith.constant 0 : index
      %c0_51 = arith.constant 0 : index
      %160 = vector.load %arg2[%c0_50, %c0_51] : memref<16x64xf32, #tpu.memory_space<vmem>>, vector<16x64xf32>
      %cst_52 = arith.constant dense<0.000000e+00> : vector<8x64xf32>
      %161 = tpu.matmul %159, %160, %cst_52 {dimension_numbers = #tpu.dot_dimension_numbers<[1], [0], [0], [1], [0, 0, 1, 1], [], []>} : vector<8x16xf32>, vector<16x64xf32>, vector<8x64xf32> -> vector<8x64xf32>
      %c0_53 = arith.constant 0 : index
      %c0_54 = arith.constant 0 : index
      %162 = vector.load %arg3[%c0_53, %c0_54] : memref<8x128xf32, #tpu.memory_space<vmem>>, vector<1x64xf32>
      %163 = vector.shape_cast %162 : vector<1x64xf32> to vector<64xf32>
      %164 = vector.shape_cast %163 : vector<64xf32> to vector<1x64xf32>
      %165 = vector.broadcast %164 : vector<1x64xf32> to vector<8x64xf32>
      %166 = arith.addf %161, %165 : vector<8x64xf32>
      %c0_55 = arith.constant 0 : index
      %c0_56 = arith.constant 0 : index
      %167 = vector.load %arg10[%c0_55, %c0_56] : memref<8x64xf32, #tpu.memory_space<vmem>>, vector<8x64xf32>
      tpu.vector_store %arg10[%c0_55, %c0_56], %166 {strides = array<i32>} : memref<8x64xf32, #tpu.memory_space<vmem>>, vector<8x64xf32>,
    } else {
    }
    %c0 = arith.constant 0 : index
    %c0_1 = arith.constant 0 : index
    %3 = vector.load %arg10[%c0, %c0_1] : memref<8x64xf32, #tpu.memory_space<vmem>>, vector<8x64xf32>
    %c0_2 = arith.constant 0 : index
    %c0_3 = arith.constant 0 : index
    %c0_4 = arith.constant 0 : index
    %4 = vector.load %arg5[%c0_2, %c0_3, %c0_4] : memref<1x64x256xf32, #tpu.memory_space<vmem>>, vector<1x64x256xf32>
    %5 = vector.shape_cast %4 : vector<1x64x256xf32> to vector<64x256xf32>
    %c0_5 = arith.constant 0 : index
    %c0_6 = arith.constant 0 : index
    %c0_7 = arith.constant 0 : index
    %6 = vector.load %arg6[%c0_5, %c0_6, %c0_7] : memref<1x8x256xf32, #tpu.memory_space<vmem>>, vector<1x8x256xf32>
    %7 = vector.shape_cast %6 : vector<1x8x256xf32> to vector<8x256xf32>
    %cst = arith.constant dense<0.000000e+00> : vector<8x256xf32>
    %8 = tpu.matmul %3, %5, %cst {dimension_numbers = #tpu.dot_dimension_numbers<[1], [0], [0], [1], [0, 0, 1, 1], [], []>} : vector<8x64xf32>, vector<64x256xf32>, vector<8x256xf32> -> vector<8x256xf32>
    %9 = vector.extract_strided_slice %7 {offsets = [0, 0], sizes = [1, 256], strides = [1, 1]} : vector<8x256xf32> to vector<1x256xf32>
    %10 = vector.shape_cast %9 : vector<1x256xf32> to vector<256xf32>
    %11 = vector.shape_cast %10 : vector<256xf32> to vector<1x256xf32>
    %12 = vector.broadcast %11 : vector<1x256xf32> to vector<8x256xf32>
    %13 = arith.addf %8, %12 : vector<8x256xf32>
    %14 = vector.extract_strided_slice %13 {offsets = [0, 0], sizes = [8, 16], strides = [1, 1]} : vector<8x256xf32> to vector<8x16xf32>
    %15 = vector.extract_strided_slice %13 {offsets = [0, 64], sizes = [8, 16], strides = [1, 1]} : vector<8x256xf32> to vector<8x16xf32>
    %16 = vector.extract_strided_slice %13 {offsets = [0, 128], sizes = [8, 16], strides = [1, 1]} : vector<8x256xf32> to vector<8x16xf32>
    %cst_8 = arith.constant dense<0.000000e+00> : vector<8x8xf32>
    %17 = tpu.matmul %14, %15, %cst_8 {dimension_numbers = #tpu.dot_dimension_numbers<[1], [1], [0], [0], [0, 0, 1, 0], [], []>} : vector<8x16xf32>, vector<8x16xf32>, vector<8x8xf32> -> vector<8x8xf32>
    %cst_9 = arith.constant dense<0xFF800000> : vector<8xf32>
    %18 = vector.multi_reduction <maximumf>, %17, %cst_9 [1] : vector<8x8xf32> to vector<8xf32>
    %19 = vector.shape_cast %18 : vector<8xf32> to vector<8x1xf32>
    %20 = vector.broadcast %19 : vector<8x1xf32> to vector<8x8xf32>
    %21 = arith.subf %17, %20 : vector<8x8xf32>
    %22 = math.exp %21 : vector<8x8xf32>
    %cst_10 = arith.constant dense<0.000000e+00> : vector<8xf32>
    %23 = vector.multi_reduction <add>, %22, %cst_10 [1] : vector<8x8xf32> to vector<8xf32>
    %24 = vector.shape_cast %23 : vector<8xf32> to vector<8x1xf32>
    %25 = vector.broadcast %24 : vector<8x1xf32> to vector<8x8xf32>
    %26 = arith.divf %22, %25 : vector<8x8xf32>
    %cst_11 = arith.constant dense<0.000000e+00> : vector<8x16xf32>
    %27 = tpu.matmul %26, %16, %cst_11 {dimension_numbers = #tpu.dot_dimension_numbers<[1], [0], [0], [1], [0, 0, 1, 1], [], []>} : vector<8x8xf32>, vector<8x16xf32>, vector<8x16xf32> -> vector<8x16xf32>
    %28 = vector.extract_strided_slice %13 {offsets = [0, 16], sizes = [8, 16], strides = [1, 1]} : vector<8x256xf32> to vector<8x16xf32>
    %29 = vector.extract_strided_slice %13 {offsets = [0, 80], sizes = [8, 16], strides = [1, 1]} : vector<8x256xf32> to vector<8x16xf32>
    %30 = vector.extract_strided_slice %13 {offsets = [0, 144], sizes = [8, 16], strides = [1, 1]} : vector<8x256xf32> to vector<8x16xf32>
    %cst_12 = arith.constant dense<0.000000e+00> : vector<8x8xf32>
    %31 = tpu.matmul %28, %29, %cst_12 {dimension_numbers = #tpu.dot_dimension_numbers<[1], [1], [0], [0], [0, 0, 1, 0], [], []>} : vector<8x16xf32>, vector<8x16xf32>, vector<8x8xf32> -> vector<8x8xf32>
    %cst_13 = arith.constant dense<0xFF800000> : vector<8xf32>
    %32 = vector.multi_reduction <maximumf>, %31, %cst_13 [1] : vector<8x8xf32> to vector<8xf32>
    %33 = vector.shape_cast %32 : vector<8xf32> to vector<8x1xf32>
    %34 = vector.broadcast %33 : vector<8x1xf32> to vector<8x8xf32>
    %35 = arith.subf %31, %34 : vector<8x8xf32>
    %36 = math.exp %35 : vector<8x8xf32>
    %cst_14 = arith.constant dense<0.000000e+00> : vector<8xf32>
    %37 = vector.multi_reduction <add>, %36, %cst_14 [1] : vector<8x8xf32> to vector<8xf32>
    %38 = vector.shape_cast %37 : vector<8xf32> to vector<8x1xf32>
    %39 = vector.broadcast %38 : vector<8x1xf32> to vector<8x8xf32>
    %40 = arith.divf %36, %39 : vector<8x8xf32>
    %cst_15 = arith.constant dense<0.000000e+00> : vector<8x16xf32>
    %41 = tpu.matmul %40, %30, %cst_15 {dimension_numbers = #tpu.dot_dimension_numbers<[1], [0], [0], [1], [0, 0, 1, 1], [], []>} : vector<8x8xf32>, vector<8x16xf32>, vector<8x16xf32> -> vector<8x16xf32>
    %42 = vector.extract_strided_slice %13 {offsets = [0, 32], sizes = [8, 16], strides = [1, 1]} : vector<8x256xf32> to vector<8x16xf32>
    %43 = vector.extract_strided_slice %13 {offsets = [0, 96], sizes = [8, 16], strides = [1, 1]} : vector<8x256xf32> to vector<8x16xf32>
    %44 = vector.extract_strided_slice %13 {offsets = [0, 160], sizes = [8, 16], strides = [1, 1]} : vector<8x256xf32> to vector<8x16xf32>
    %cst_16 = arith.constant dense<0.000000e+00> : vector<8x8xf32>
    %45 = tpu.matmul %42, %43, %cst_16 {dimension_numbers = #tpu.dot_dimension_numbers<[1], [1], [0], [0], [0, 0, 1, 0], [], []>} : vector<8x16xf32>, vector<8x16xf32>, vector<8x8xf32> -> vector<8x8xf32>
    %cst_17 = arith.constant dense<0xFF800000> : vector<8xf32>
    %46 = vector.multi_reduction <maximumf>, %45, %cst_17 [1] : vector<8x8xf32> to vector<8xf32>
    %47 = vector.shape_cast %46 : vector<8xf32> to vector<8x1xf32>
    %48 = vector.broadcast %47 : vector<8x1xf32> to vector<8x8xf32>
    %49 = arith.subf %45, %48 : vector<8x8xf32>
    %50 = math.exp %49 : vector<8x8xf32>
    %cst_18 = arith.constant dense<0.000000e+00> : vector<8xf32>
    %51 = vector.multi_reduction <add>, %50, %cst_18 [1] : vector<8x8xf32> to vector<8xf32>
    %52 = vector.shape_cast %51 : vector<8xf32> to vector<8x1xf32>
    %53 = vector.broadcast %52 : vector<8x1xf32> to vector<8x8xf32>
    %54 = arith.divf %50, %53 : vector<8x8xf32>
    %cst_19 = arith.constant dense<0.000000e+00> : vector<8x16xf32>
    %55 = tpu.matmul %54, %44, %cst_19 {dimension_numbers = #tpu.dot_dimension_numbers<[1], [0], [0], [1], [0, 0, 1, 1], [], []>} : vector<8x8xf32>, vector<8x16xf32>, vector<8x16xf32> -> vector<8x16xf32>
    %56 = vector.extract_strided_slice %13 {offsets = [0, 48], sizes = [8, 16], strides = [1, 1]} : vector<8x256xf32> to vector<8x16xf32>
    %57 = vector.extract_strided_slice %13 {offsets = [0, 112], sizes = [8, 16], strides = [1, 1]} : vector<8x256xf32> to vector<8x16xf32>
    %58 = vector.extract_strided_slice %13 {offsets = [0, 176], sizes = [8, 16], strides = [1, 1]} : vector<8x256xf32> to vector<8x16xf32>
    %cst_20 = arith.constant dense<0.000000e+00> : vector<8x8xf32>
    %59 = tpu.matmul %56, %57, %cst_20 {dimension_numbers = #tpu.dot_dimension_numbers<[1], [1], [0], [0], [0, 0, 1, 0], [], []>} : vector<8x16xf32>, vector<8x16xf32>, vector<8x8xf32> -> vector<8x8xf32>
    %cst_21 = arith.constant dense<0xFF800000> : vector<8xf32>
    %60 = vector.multi_reduction <maximumf>, %59, %cst_21 [1] : vector<8x8xf32> to vector<8xf32>
    %61 = vector.shape_cast %60 : vector<8xf32> to vector<8x1xf32>
    %62 = vector.broadcast %61 : vector<8x1xf32> to vector<8x8xf32>
    %63 = arith.subf %59, %62 : vector<8x8xf32>
    %64 = math.exp %63 : vector<8x8xf32>
    %cst_22 = arith.constant dense<0.000000e+00> : vector<8xf32>
    %65 = vector.multi_reduction <add>, %64, %cst_22 [1] : vector<8x8xf32> to vector<8xf32>
    %66 = vector.shape_cast %65 : vector<8xf32> to vector<8x1xf32>
    %67 = vector.broadcast %66 : vector<8x1xf32> to vector<8x8xf32>
    %68 = arith.divf %64, %67 : vector<8x8xf32>
    %cst_23 = arith.constant dense<0.000000e+00> : vector<8x16xf32>
    %69 = tpu.matmul %68, %58, %cst_23 {dimension_numbers = #tpu.dot_dimension_numbers<[1], [0], [0], [1], [0, 0, 1, 1], [], []>} : vector<8x8xf32>, vector<8x16xf32>, vector<8x16xf32> -> vector<8x16xf32>
    %70 = tpu.concatenate %27, %41, %55, %69 in 1 : vector<8x16xf32>, vector<8x16xf32>, vector<8x16xf32>, vector<8x16xf32> -> vector<8x64xf32>
    %71 = vector.extract_strided_slice %5 {offsets = [0, 192], sizes = [64, 64], strides = [1, 1]} : vector<64x256xf32> to vector<64x64xf32>
    %cst_24 = arith.constant dense<0.000000e+00> : vector<8x64xf32>
    %72 = tpu.matmul %70, %71, %cst_24 {dimension_numbers = #tpu.dot_dimension_numbers<[1], [0], [0], [1], [0, 0, 1, 1], [], []>} : vector<8x64xf32>, vector<64x64xf32>, vector<8x64xf32> -> vector<8x64xf32>
    %73 = vector.extract_strided_slice %7 {offsets = [0, 192], sizes = [1, 64], strides = [1, 1]} : vector<8x256xf32> to vector<1x64xf32>
    %74 = vector.shape_cast %73 : vector<1x64xf32> to vector<64xf32>
    %75 = vector.shape_cast %74 : vector<64xf32> to vector<1x64xf32>
    %76 = vector.broadcast %75 : vector<1x64xf32> to vector<8x64xf32>
    %77 = arith.addf %72, %76 : vector<8x64xf32>
    %78 = vector.extract_strided_slice %7 {offsets = [1, 0], sizes = [1, 64], strides = [1, 1]} : vector<8x256xf32> to vector<1x64xf32>
    %79 = vector.shape_cast %78 : vector<1x64xf32> to vector<64xf32>
    %80 = vector.extract_strided_slice %7 {offsets = [1, 64], sizes = [1, 64], strides = [1, 1]} : vector<8x256xf32> to vector<1x64xf32>
    %81 = vector.shape_cast %80 : vector<1x64xf32> to vector<64xf32>
    %82 = vector.extract_strided_slice %7 {offsets = [1, 128], sizes = [1, 64], strides = [1, 1]} : vector<8x256xf32> to vector<1x64xf32>
    %83 = vector.shape_cast %82 : vector<1x64xf32> to vector<64xf32>
    %84 = vector.extract_strided_slice %7 {offsets = [1, 192], sizes = [1, 64], strides = [1, 1]} : vector<8x256xf32> to vector<1x64xf32>
    %85 = vector.shape_cast %84 : vector<1x64xf32> to vector<64xf32>
    %86 = vector.extract_strided_slice %7 {offsets = [2, 0], sizes = [1, 64], strides = [1, 1]} : vector<8x256xf32> to vector<1x64xf32>
    %87 = vector.shape_cast %86 : vector<1x64xf32> to vector<64xf32>
    %88 = arith.addf %3, %77 : vector<8x64xf32>
    %cst_25 = arith.constant dense<0.000000e+00> : vector<8xf32>
    %89 = vector.multi_reduction <add>, %88, %cst_25 [1] : vector<8x64xf32> to vector<8xf32>
    %90 = vector.shape_cast %89 : vector<8xf32> to vector<8x1xf32>
    %cst_26 = arith.constant 6.400000e+01 : f32
    %91 = vector.broadcast %cst_26 : f32 to vector<8x1xf32>
    %92 = arith.divf %90, %91 : vector<8x1xf32>
    %93 = vector.broadcast %92 : vector<8x1xf32> to vector<8x64xf32>
    %94 = arith.subf %88, %93 : vector<8x64xf32>
    %95 = arith.mulf %94, %94 : vector<8x64xf32>
    %cst_27 = arith.constant dense<0.000000e+00> : vector<8xf32>
    %96 = vector.multi_reduction <add>, %95, %cst_27 [1] : vector<8x64xf32> to vector<8xf32>
    %97 = vector.shape_cast %96 : vector<8xf32> to vector<8x1xf32>
    %cst_28 = arith.constant 6.400000e+01 : f32
    %98 = vector.broadcast %cst_28 : f32 to vector<8x1xf32>
    %99 = arith.divf %97, %98 : vector<8x1xf32>
    %100 = vector.broadcast %92 : vector<8x1xf32> to vector<8x64xf32>
    %101 = arith.subf %88, %100 : vector<8x64xf32>
    %cst_29 = arith.constant 9.99999974E-6 : f32
    %102 = vector.broadcast %cst_29 : f32 to vector<8x1xf32>
    %103 = arith.addf %99, %102 : vector<8x1xf32>
    %104 = math.rsqrt %103 : vector<8x1xf32>
    %105 = vector.broadcast %104 : vector<8x1xf32> to vector<8x64xf32>
    %106 = arith.mulf %101, %105 : vector<8x64xf32>
    %107 = vector.shape_cast %79 : vector<64xf32> to vector<1x64xf32>
    %108 = vector.broadcast %107 : vector<1x64xf32> to vector<8x64xf32>
    %109 = arith.mulf %106, %108 : vector<8x64xf32>
    %110 = vector.shape_cast %81 : vector<64xf32> to vector<1x64xf32>
    %111 = vector.broadcast %110 : vector<1x64xf32> to vector<8x64xf32>
    %112 = arith.addf %109, %111 : vector<8x64xf32>
    %113 = arith.index_cast %arg0 : i32 to index
    %c0_30 = arith.constant 0 : index
    %114 = vector.load %arg4[%113, %c0_30] : memref<2x2048xf32, #tpu.memory_space<vmem>>, vector<1x2048xf32>
    %115 = arith.truncf %112 : vector<8x64xf32> to vector<8x64xbf16>
    %c0_31 = arith.constant 0 : index
    %c0_32 = arith.constant 0 : index
    %c0_33 = arith.constant 0 : index
    %116 = vector.load %arg7[%c0_31, %c0_32, %c0_33] : memref<1x64x2048xbf16, #tpu.memory_space<vmem>>, vector<1x64x2048xbf16>
    %117 = vector.shape_cast %116 : vector<1x64x2048xbf16> to vector<64x2048xbf16>
    %cst_34 = arith.constant dense<0.000000e+00> : vector<8x2048xf32>
    %118 = tpu.matmul %115, %117, %cst_34 {dimension_numbers = #tpu.dot_dimension_numbers<[1], [0], [0], [1], [0, 0, 1, 1], [], []>} : vector<8x64xbf16>, vector<64x2048xbf16>, vector<8x2048xf32> -> vector<8x2048xf32>
    %119 = vector.broadcast %114 : vector<1x2048xf32> to vector<8x2048xf32>
    %120 = arith.addf %118, %119 : vector<8x2048xf32>
    %cst_35 = arith.constant 0.000000e+00 : f32
    %121 = vector.broadcast %cst_35 : f32 to vector<8x2048xf32>
    %122 = arith.maximumf %120, %121 : vector<8x2048xf32>
    %123 = arith.truncf %122 : vector<8x2048xf32> to vector<8x2048xbf16>
    %c0_36 = arith.constant 0 : index
    %c0_37 = arith.constant 0 : index
    %c0_38 = arith.constant 0 : index
    %124 = vector.load %arg8[%c0_36, %c0_37, %c0_38] : memref<1x64x2048xbf16, #tpu.memory_space<vmem>>, vector<1x64x2048xbf16>
    %125 = vector.shape_cast %124 : vector<1x64x2048xbf16> to vector<64x2048xbf16>
    %cst_39 = arith.constant dense<0.000000e+00> : vector<8x64xf32>
    %126 = tpu.matmul %123, %125, %cst_39 {dimension_numbers = #tpu.dot_dimension_numbers<[1], [1], [0], [0], [0, 0, 1, 0], [], []>} : vector<8x2048xbf16>, vector<64x2048xbf16>, vector<8x64xf32> -> vector<8x64xf32>
    %127 = vector.shape_cast %87 : vector<64xf32> to vector<1x64xf32>
    %128 = vector.broadcast %127 : vector<1x64xf32> to vector<8x64xf32>
    %129 = arith.addf %126, %128 : vector<8x64xf32>
    %130 = arith.addf %112, %129 : vector<8x64xf32>
    %cst_40 = arith.constant dense<0.000000e+00> : vector<8xf32>
    %131 = vector.multi_reduction <add>, %130, %cst_40 [1] : vector<8x64xf32> to vector<8xf32>
    %132 = vector.shape_cast %131 : vector<8xf32> to vector<8x1xf32>
    %cst_41 = arith.constant 6.400000e+01 : f32
    %133 = vector.broadcast %cst_41 : f32 to vector<8x1xf32>
    %134 = arith.divf %132, %133 : vector<8x1xf32>
    %135 = vector.broadcast %134 : vector<8x1xf32> to vector<8x64xf32>
    %136 = arith.subf %130, %135 : vector<8x64xf32>
    %137 = arith.mulf %136, %136 : vector<8x64xf32>
    %cst_42 = arith.constant dense<0.000000e+00> : vector<8xf32>
    %138 = vector.multi_reduction <add>, %137, %cst_42 [1] : vector<8x64xf32> to vector<8xf32>
    %139 = vector.shape_cast %138 : vector<8xf32> to vector<8x1xf32>
    %cst_43 = arith.constant 6.400000e+01 : f32
    %140 = vector.broadcast %cst_43 : f32 to vector<8x1xf32>
    %141 = arith.divf %139, %140 : vector<8x1xf32>
    %142 = vector.broadcast %134 : vector<8x1xf32> to vector<8x64xf32>
    %143 = arith.subf %130, %142 : vector<8x64xf32>
    %cst_44 = arith.constant 9.99999974E-6 : f32
    %144 = vector.broadcast %cst_44 : f32 to vector<8x1xf32>
    %145 = arith.addf %141, %144 : vector<8x1xf32>
    %146 = math.rsqrt %145 : vector<8x1xf32>
    %147 = vector.broadcast %146 : vector<8x1xf32> to vector<8x64xf32>
    %148 = arith.mulf %143, %147 : vector<8x64xf32>
    %149 = vector.shape_cast %83 : vector<64xf32> to vector<1x64xf32>
    %150 = vector.broadcast %149 : vector<1x64xf32> to vector<8x64xf32>
    %151 = arith.mulf %148, %150 : vector<8x64xf32>
    %152 = vector.shape_cast %85 : vector<64xf32> to vector<1x64xf32>
    %153 = vector.broadcast %152 : vector<1x64xf32> to vector<8x64xf32>
    %154 = arith.addf %151, %153 : vector<8x64xf32>
    %c0_45 = arith.constant 0 : index
    %c0_46 = arith.constant 0 : index
    %155 = vector.load %arg10[%c0_45, %c0_46] : memref<8x64xf32, #tpu.memory_space<vmem>>, vector<8x64xf32>
    tpu.vector_store %arg10[%c0_45, %c0_46], %154 {strides = array<i32>} : memref<8x64xf32, #tpu.memory_space<vmem>>, vector<8x64xf32>,
    %c1_i32 = arith.constant 1 : i32
    %156 = arith.cmpi eq, %arg0, %c1_i32 : i32
    %157 = arith.extui %156 : i1 to i32
    %c0_i32_47 = arith.constant 0 : i32
    %158 = arith.cmpi ne, %157, %c0_i32_47 : i32
    scf.if %158 {
      %c1 = arith.constant 1 : index
      %c0_48 = arith.constant 0 : index
      %159 = vector.load %arg3[%c1, %c0_48] : memref<8x128xf32, #tpu.memory_space<vmem>>, vector<2x64xf32>
      %c3 = arith.constant 3 : index
      %c0_49 = arith.constant 0 : index
      %160 = vector.load %arg3[%c3, %c0_49] : memref<8x128xf32, #tpu.memory_space<vmem>>, vector<1x2xf32>
      %161 = vector.shape_cast %160 : vector<1x2xf32> to vector<2xf32>
      %cst_50 = arith.constant dense<0.000000e+00> : vector<8x2xf32>
      %162 = tpu.matmul %154, %159, %cst_50 {dimension_numbers = #tpu.dot_dimension_numbers<[1], [1], [0], [0], [0, 0, 1, 0], [], []>} : vector<8x64xf32>, vector<2x64xf32>, vector<8x2xf32> -> vector<8x2xf32>
      %163 = vector.shape_cast %161 : vector<2xf32> to vector<1x2xf32>
      %164 = vector.broadcast %163 : vector<1x2xf32> to vector<8x2xf32>
      %165 = arith.addf %162, %164 : vector<8x2xf32>
      %c0_51 = arith.constant 0 : index
      %c0_52 = arith.constant 0 : index
      %166 = vector.load %arg9[%c0_51, %c0_52] : memref<8x2xf32, #tpu.memory_space<vmem>>, vector<8x2xf32>
      tpu.vector_store %arg9[%c0_51, %c0_52], %165 {strides = array<i32>} : memref<8x2xf32, #tpu.memory_space<vmem>>, vector<8x2xf32>,
    } else {
    }
    return
  }
  func.func @transform_0(%arg0: i32) -> (i32, i32) {
    %c0_i32 = arith.constant 0 : i32
    %c0_i32_0 = arith.constant 0 : i32
    %c0_i32_1 = arith.constant 0 : i32
    return %c0_i32, %c0_i32_0 : i32, i32
  }
  func.func @transform_1(%arg0: i32) -> (i32, i32) {
    %c0_i32 = arith.constant 0 : i32
    %c0_i32_0 = arith.constant 0 : i32
    %c0_i32_1 = arith.constant 0 : i32
    return %c0_i32, %c0_i32_0 : i32, i32
  }
  func.func @transform_2(%arg0: i32) -> (i32, i32) {
    %c0_i32 = arith.constant 0 : i32
    %c0_i32_0 = arith.constant 0 : i32
    %c0_i32_1 = arith.constant 0 : i32
    return %c0_i32, %c0_i32_0 : i32, i32
  }
  func.func @transform_3(%arg0: i32) -> (i32, i32) {
    %c0_i32 = arith.constant 0 : i32
    %c0_i32_0 = arith.constant 0 : i32
    %c0_i32_1 = arith.constant 0 : i32
    return %c0_i32, %c0_i32_0 : i32, i32
  }
  func.func @transform_4(%arg0: i32) -> (i32, i32, i32) {
    %c0_i32 = arith.constant 0 : i32
    %c0_i32_0 = arith.constant 0 : i32
    %c0_i32_1 = arith.constant 0 : i32
    return %arg0, %c0_i32, %c0_i32_0 : i32, i32, i32
  }
  func.func @transform_5(%arg0: i32) -> (i32, i32, i32) {
    %c0_i32 = arith.constant 0 : i32
    %c0_i32_0 = arith.constant 0 : i32
    %c0_i32_1 = arith.constant 0 : i32
    return %arg0, %c0_i32, %c0_i32_0 : i32, i32, i32
  }
  func.func @transform_6(%arg0: i32) -> (i32, i32, i32) {
    %c0_i32 = arith.constant 0 : i32
    %c0_i32_0 = arith.constant 0 : i32
    %c0_i32_1 = arith.constant 0 : i32
    return %arg0, %c0_i32, %c0_i32_0 : i32, i32, i32
  }
  func.func @transform_7(%arg0: i32) -> (i32, i32, i32) {
    %c0_i32 = arith.constant 0 : i32
    %c0_i32_0 = arith.constant 0 : i32
    %c0_i32_1 = arith.constant 0 : i32
    return %arg0, %c0_i32, %c0_i32_0 : i32, i32, i32
  }
  func.func @transform_8(%arg0: i32) -> (i32, i32) {
    %c0_i32 = arith.constant 0 : i32
    %c0_i32_0 = arith.constant 0 : i32
    %c0_i32_1 = arith.constant 0 : i32
    return %c0_i32, %c0_i32_0 : i32, i32
  }
}

</mosaic_0001>

<llo_original>
// kernel: transformer_forward.1
$region0: #{transformer_forward.1}
  #allocation0 [shape = 'u32[]', space=smem, size = 0x4, offset = 0x4, fixed_abs, tag = 'smem constant byte address 0x4 - core index']
  #allocation1 [shape = 'u32[144,128]{1,0:T(1,128)}', space=vmem, size = 0x12000, scoped, tag = 'internal scratch']
  #allocation2 [shape = 'f32[8,64]{1,0:T(8,128)}', space=vmem, size = 0x1000, scoped, tag = 'scratch operand']
  %s0 = inlined_call_operand.hbm [shape: f32[8,16], index: 0, kind: input, shape index: {}]
  %s1 = inlined_call_operand.vmem [shape: f32[16,64], index: 1, kind: input, shape index: {}]
  %s2 = inlined_call_operand.vmem [shape: f32[8,128], index: 2, kind: input, shape index: {}]
  %s3 = inlined_call_operand.hbm [shape: f32[2,2048], index: 3, kind: input, shape index: {}]
  %s4 = inlined_call_operand.hbm [shape: f32[2,64,256], index: 4, kind: input, shape index: {}]
  %s5 = inlined_call_operand.hbm [shape: f32[2,8,256], index: 5, kind: input, shape index: {}]
  %s6 = inlined_call_operand.hbm [shape: bf16[2,64,2048], index: 6, kind: input, shape index: {}]
  %s7 = inlined_call_operand.hbm [shape: bf16[2,64,2048], index: 7, kind: input, shape index: {}]
  %s8 = inlined_call_operand.vmem [shape: f32[8,2], index: 8, kind: output, shape index: {}]
  %s9 = sld [smem:[#allocation0]]
  $region97: #{transformer_forward.1} parent=0
    _
  %s11 = ssub.s32 1, %s9
  %s12 = scalar_select 0, %s11, %s9
  $region1: #{transformer_forward.1} parent=0
    #allocation3 [shape = 'u8[4096]{0}', space=vmem, size = 0x1000, scoped, tag = 'input window, operand 0, single buffered']
    #allocation4 [shape = 's32[2]{0}', space=sflag, size = 0x8, scoped, tag = 'scoped memory for transformer_forward.1']
    #allocation5 [shape = 'u8[16384]{0}', space=vmem, size = 0x4000, scoped, tag = 'input window, operand 3, single buffered']
    #allocation6 [shape = 's32[1]{0}', space=sflag, size = 0x4, scoped, tag = 'scoped memory for transformer_forward.1']
    #allocation7 [shape = 'u8[131072]{0}', space=vmem, size = 0x20000, scoped, tag = 'input window, operand 4']
    #allocation8 [shape = 'u8[16384]{0}', space=vmem, size = 0x4000, scoped, tag = 'input window, operand 5']
    #allocation9 [shape = 'u8[524288]{0}', space=vmem, size = 0x80000, scoped, tag = 'input window, operand 6']
    #allocation10 [shape = 'u8[524288]{0}', space=vmem, size = 0x80000, scoped, tag = 'input window, operand 7']
    %13 = vsyncpa [#allocation4], 0
    %14 = vsyncpa [#allocation6], 0
    loop: start=0, step=1, limit=4
    $region2: #{transformer_forward.1} parent=1 // loop_pre_header
      _
    $region3: #{transformer_forward.1} parent=1 // loop_header
      %s16 = sphi 0, %s20
      %p17 = scmp.ge.s32.totalorder %s16, 4
      %s24 = sphi 0, %s24
      %s26 = sphi 0, %s24
      %s27 = sphi 0, %s26
      %s41 = sphi 0, %s27
      %s45 = sphi 0, %s45
      %s47 = sphi 0, %s45
      %s48 = sphi 0, %s47
      %s62 = sphi 0, %s48
      %s66 = sphi 0, %s66
      %s68 = sphi 0, %s66
      %s69 = sphi 0, %s68
      %s83 = sphi 0, %s69
      %s87 = sphi 0, %s87
      %s89 = sphi 0, %s87
      %s90 = sphi 0, %s89
      %s104 = sphi 0, %s90
      %s110 = sphi 0, %s112
      %s113 = sphi 0, %s110
      %s114 = sphi 0, %s113
      %s130 = sphi 0, %s114
      %s136 = sphi 0, %s138
      %s139 = sphi 0, %s136
      %s140 = sphi 0, %s139
      %s156 = sphi 0, %s140
      %s162 = sphi 0, %s164
      %s165 = sphi 0, %s162
      %s166 = sphi 0, %s165
      %s182 = sphi 0, %s166
      %s188 = sphi 0, %s190
      %s191 = sphi 0, %s188
      %s192 = sphi 0, %s191
      %s208 = sphi 0, %s192
      %s212 = sphi 0, %s212
      %s214 = sphi 0, %s212
      %s215 = sphi 0, %s214
      %s229 = sphi 0, %s215
    $region4: #{transformer_forward.1} parent=1 // loop_header_branch
      %19 = sbr.rel (%p17) target = $region8
    $region5: #{transformer_forward.1} parent=1 // loop_body
      %s21 = ssub.s32 %s16, 1
      %s22 = ssub.s32 %s16, 2
      %s23 = sadd.s32 %s16, 1
      %s25 = sadd.s32 %s24, 1
      %p28 = scmp.eq.s32.totalorder %s16, 1
      %p29 = scmp.ne.s32.totalorder %s24, %s26
      %p30 = scmp.eq.s32.totalorder %s16, 0
      %p31 = por %p29, %p30
      %p32 = scmp.ne.s32.totalorder %s24, %s26
      %p33 = scmp.eq.s32.totalorder %s21, 1
      %p34 = por %p32, %p33
      %p35 = scmp.ne.s32.totalorder %s26, %s27
      %p36 = scmp.eq.s32.totalorder %s21, 0
      %p37 = por %p35, %p36
      %p38 = scmp.ne.s32.totalorder %s26, %s27
      %p39 = scmp.eq.s32.totalorder %s22, 1
      %p40 = por %p38, %p39
      %p42 = scmp.ne.s32.totalorder %s27, %s41
      %p43 = scmp.eq.s32.totalorder %s22, 0
      %p44 = por %p42, %p43
      %s46 = sadd.s32 %s45, 1
      %p49 = scmp.eq.s32.totalorder %s16, 1
      %p50 = scmp.ne.s32.totalorder %s45, %s47
      %p51 = scmp.eq.s32.totalorder %s16, 0
      %p52 = por %p50, %p51
      %p53 = scmp.ne.s32.totalorder %s45, %s47
      %p54 = scmp.eq.s32.totalorder %s21, 1
      %p55 = por %p53, %p54
      %p56 = scmp.ne.s32.totalorder %s47, %s48
      %p57 = scmp.eq.s32.totalorder %s21, 0
      %p58 = por %p56, %p57
      %p59 = scmp.ne.s32.totalorder %s47, %s48
      %p60 = scmp.eq.s32.totalorder %s22, 1
      %p61 = por %p59, %p60
      %p63 = scmp.ne.s32.totalorder %s48, %s62
      %p64 = scmp.eq.s32.totalorder %s22, 0
      %p65 = por %p63, %p64
      %s67 = sadd.s32 %s66, 1
      %p70 = scmp.eq.s32.totalorder %s16, 1
      %p71 = scmp.ne.s32.totalorder %s66, %s68
      %p72 = scmp.eq.s32.totalorder %s16, 0
      %p73 = por %p71, %p72
      %p74 = scmp.ne.s32.totalorder %s66, %s68
      %p75 = scmp.eq.s32.totalorder %s21, 1
      %p76 = por %p74, %p75
      %p77 = scmp.ne.s32.totalorder %s68, %s69
      %p78 = scmp.eq.s32.totalorder %s21, 0
      %p79 = por %p77, %p78
      %p80 = scmp.ne.s32.totalorder %s68, %s69
      %p81 = scmp.eq.s32.totalorder %s22, 1
      %p82 = por %p80, %p81
      %p84 = scmp.ne.s32.totalorder %s69, %s83
      %p85 = scmp.eq.s32.totalorder %s22, 0
      %p86 = por %p84, %p85
      %s88 = sadd.s32 %s87, 1
      %p91 = scmp.eq.s32.totalorder %s16, 1
      %p92 = scmp.ne.s32.totalorder %s87, %s89
      %p93 = scmp.eq.s32.totalorder %s16, 0
      %p94 = por %p92, %p93
      %p95 = scmp.ne.s32.totalorder %s87, %s89
      %p96 = scmp.eq.s32.totalorder %s21, 1
      %p97 = por %p95, %p96
      %p98 = scmp.ne.s32.totalorder %s89, %s90
      %p99 = scmp.eq.s32.totalorder %s21, 0
      %p100 = por %p98, %p99
      %p101 = scmp.ne.s32.totalorder %s89, %s90
      %p102 = scmp.eq.s32.totalorder %s22, 1
      %p103 = por %p101, %p102
      %p105 = scmp.ne.s32.totalorder %s90, %s104
      %p106 = scmp.eq.s32.totalorder %s22, 0
      %p107 = por %p105, %p106
      %s108 = ssub.s32 %s16, %s23
      %p109 = scmp.eq.s32.totalorder %s108, 0
      %s111 = sadd.s32 %s110, 1
      %s112 = scalar_select %p109, %s110, %s111
      %p115 = pneg %p109
      %p116 = scmp.eq.s32.totalorder %s16, 1
      %p117 = por %p115, %p116
      %p118 = scmp.ne.s32.totalorder %s110, %s113
      %p119 = scmp.eq.s32.totalorder %s16, 0
      %p120 = por %p118, %p119
      %p121 = scmp.ne.s32.totalorder %s110, %s113
      %p122 = scmp.eq.s32.totalorder %s21, 1
      %p123 = por %p121, %p122
      %p124 = scmp.ne.s32.totalorder %s113, %s114
      %p125 = scmp.eq.s32.totalorder %s21, 0
      %p126 = por %p124, %p125
      %p127 = scmp.ne.s32.totalorder %s113, %s114
      %p128 = scmp.eq.s32.totalorder %s22, 1
      %p129 = por %p127, %p128
      %p131 = scmp.ne.s32.totalorder %s114, %s130
      %p132 = scmp.eq.s32.totalorder %s22, 0
      %p133 = por %p131, %p132
      %s134 = ssub.s32 %s16, %s23
      %p135 = scmp.eq.s32.totalorder %s134, 0
      %s137 = sadd.s32 %s136, 1
      %s138 = scalar_select %p135, %s136, %s137
      %p141 = pneg %p135
      %p142 = scmp.eq.s32.totalorder %s16, 1
      %p143 = por %p141, %p142
      %p144 = scmp.ne.s32.totalorder %s136, %s139
      %p145 = scmp.eq.s32.totalorder %s16, 0
      %p146 = por %p144, %p145
      %p147 = scmp.ne.s32.totalorder %s136, %s139
      %p148 = scmp.eq.s32.totalorder %s21, 1
      %p149 = por %p147, %p148
      %p150 = scmp.ne.s32.totalorder %s139, %s140
      %p151 = scmp.eq.s32.totalorder %s21, 0
      %p152 = por %p150, %p151
      %p153 = scmp.ne.s32.totalorder %s139, %s140
      %p154 = scmp.eq.s32.totalorder %s22, 1
      %p155 = por %p153, %p154
      %p157 = scmp.ne.s32.totalorder %s140, %s156
      %p158 = scmp.eq.s32.totalorder %s22, 0
      %p159 = por %p157, %p158
      %s160 = ssub.s32 %s16, %s23
      %p161 = scmp.eq.s32.totalorder %s160, 0
      %s163 = sadd.s32 %s162, 1
      %s164 = scalar_select %p161, %s162, %s163
      %p167 = pneg %p161
      %p168 = scmp.eq.s32.totalorder %s16, 1
      %p169 = por %p167, %p168
      %p170 = scmp.ne.s32.totalorder %s162, %s165
      %p171 = scmp.eq.s32.totalorder %s16, 0
      %p172 = por %p170, %p171
      %p173 = scmp.ne.s32.totalorder %s162, %s165
      %p174 = scmp.eq.s32.totalorder %s21, 1
      %p175 = por %p173, %p174
      %p176 = scmp.ne.s32.totalorder %s165, %s166
      %p177 = scmp.eq.s32.totalorder %s21, 0
      %p178 = por %p176, %p177
      %p179 = scmp.ne.s32.totalorder %s165, %s166
      %p180 = scmp.eq.s32.totalorder %s22, 1
      %p181 = por %p179, %p180
      %p183 = scmp.ne.s32.totalorder %s166, %s182
      %p184 = scmp.eq.s32.totalorder %s22, 0
      %p185 = por %p183, %p184
      %s186 = ssub.s32 %s16, %s23
      %p187 = scmp.eq.s32.totalorder %s186, 0
      %s189 = sadd.s32 %s188, 1
      %s190 = scalar_select %p187, %s188, %s189
      %p193 = pneg %p187
      %p194 = scmp.eq.s32.totalorder %s16, 1
      %p195 = por %p193, %p194
      %p196 = scmp.ne.s32.totalorder %s188, %s191
      %p197 = scmp.eq.s32.totalorder %s16, 0
      %p198 = por %p196, %p197
      %p199 = scmp.ne.s32.totalorder %s188, %s191
      %p200 = scmp.eq.s32.totalorder %s21, 1
      %p201 = por %p199, %p200
      %p202 = scmp.ne.s32.totalorder %s191, %s192
      %p203 = scmp.eq.s32.totalorder %s21, 0
      %p204 = por %p202, %p203
      %p205 = scmp.ne.s32.totalorder %s191, %s192
      %p206 = scmp.eq.s32.totalorder %s22, 1
      %p207 = por %p205, %p206
      %p209 = scmp.ne.s32.totalorder %s192, %s208
      %p210 = scmp.eq.s32.totalorder %s22, 0
      %p211 = por %p209, %p210
      %s213 = sadd.s32 %s212, 1
      %p216 = scmp.eq.s32.totalorder %s16, 1
      %p217 = scmp.ne.s32.totalorder %s212, %s214
      %p218 = scmp.eq.s32.totalorder %s16, 0
      %p219 = por %p217, %p218
      %p220 = scmp.ne.s32.totalorder %s212, %s214
      %p221 = scmp.eq.s32.totalorder %s21, 1
      %p222 = por %p220, %p221
      %p223 = scmp.ne.s32.totalorder %s214, %s215
      %p224 = scmp.eq.s32.totalorder %s21, 0
      %p225 = por %p223, %p224
      %p226 = scmp.ne.s32.totalorder %s214, %s215
      %p227 = scmp.eq.s32.totalorder %s22, 1
      %p228 = por %p226, %p227
      %p230 = scmp.ne.s32.totalorder %s215, %s229
      %p231 = scmp.eq.s32.totalorder %s22, 0
      %p232 = por %p230, %p231
      %p233 = scmp.le.s32.totalorder 1, %s16
      %p234 = scmp.lt.s32.totalorder %s16, 3
      %p235 = pnand %p233, %p234
      %p236 = pneg %p235
      // Predicated region
      $region9: #{transformer_forward.1} parent=5 // pred_check
        _
      $region10: #{transformer_forward.1} parent=5 // pred_check_branch
        %238 = sbr.rel (%p235) target = $region12
      $region11: #{transformer_forward.1} parent=5 // pred_region
        %s239 = ssub.s32 %s16, 1
        // Predicated region
        $region13: #{transformer_forward.1} parent=11 // pred_check
          %p240 = pneg %p37
        $region14: #{transformer_forward.1} parent=11 // pred_check_branch
          %242 = sbr.rel (%p240) target = $region16
        $region15: #{transformer_forward.1} parent=11 // pred_region
          %s244 = ssub.s32 128, 128
          %245 = vsyncadd [#allocation4], %s244
          %s247 = sshll.u32 [#allocation3], 4
          %s248 = int_to_ptr.vmem [resolvable:$true] %s247
          %250 = dma.hbm_to_vmem [thread:$0]  %s0, 128, %s248, [#allocation4]
        $region16: #{transformer_forward.1} parent=11 // pred_fallthru
          _
        // Predicated region
        $region17: #{transformer_forward.1} parent=11 // pred_check
          %p251 = pneg %p58
        $region18: #{transformer_forward.1} parent=11 // pred_check_branch
          %253 = sbr.rel (%p251) target = $region20
        $region19: #{transformer_forward.1} parent=11 // pred_region
          _
        $region20: #{transformer_forward.1} parent=11 // pred_fallthru
          _
        // Predicated region
        $region21: #{transformer_forward.1} parent=11 // pred_check
          %p254 = pneg %p79
        $region22: #{transformer_forward.1} parent=11 // pred_check_branch
          %256 = sbr.rel (%p254) target = $region24
        $region23: #{transformer_forward.1} parent=11 // pred_region
          _
        $region24: #{transformer_forward.1} parent=11 // pred_fallthru
          _
        // Predicated region
        $region25: #{transformer_forward.1} parent=11 // pred_check
          %p257 = pneg %p100
        $region26: #{transformer_forward.1} parent=11 // pred_check_branch
          %259 = sbr.rel (%p257) target = $region28
        $region27: #{transformer_forward.1} parent=11 // pred_region
          %s261 = ssub.s32 512, 512
          %262 = vsyncadd [#allocation6], %s261
          %s264 = sshll.u32 [#allocation5], 4
          %s265 = int_to_ptr.vmem [resolvable:$true] %s264
          %267 = dma.hbm_to_vmem [thread:$0]  %s3, 512, %s265, [#allocation6]
        $region28: #{transformer_forward.1} parent=11 // pred_fallthru
          _
      $region12: #{transformer_forward.1} parent=5 // pred_fallthru
        _
      %p268 = scmp.lt.s32.totalorder %s16, 2
      // Predicated region
      $region29: #{transformer_forward.1} parent=5 // pred_check
        %p269 = pneg %p268
      $region30: #{transformer_forward.1} parent=5 // pred_check_branch
        %271 = sbr.rel (%p269) target = $region32
      $region31: #{transformer_forward.1} parent=5 // pred_region
        // Predicated region
        $region33: #{transformer_forward.1} parent=31 // pred_check
          %p272 = pneg %p120
        $region34: #{transformer_forward.1} parent=31 // pred_check_branch
          %274 = sbr.rel (%p272) target = $region36
        $region35: #{transformer_forward.1} parent=31 // pred_region
          %s275 = sand.u32 %s16, 1
          %s276 = scalar_lea.sflag [#allocation4], %s275
          %s277 = sand.u32 %s110, 1
          %s278 = smul.addr %s277, 128
          %s279 = scalar_lea.vmem [#allocation7], %s278
          %s281 = ssub.s32 2048, 2048
          %282 = vsyncadd %s276, %s281
          %s283 = smul.addr %s16, 16
          %s284 = smul.addr %s283, 128
          %s285 = scalar_lea.hbm %s4, %s284
          %s286 = sshll.u32 %s279, 4
          %s287 = int_to_ptr.vmem [resolvable:$true] %s286
          %292 = dma.hbm_to_vmem [thread:$0]  %s285, 2048, %s287, %s276, 256, 256, 16
        $region36: #{transformer_forward.1} parent=31 // pred_fallthru
          _
        // Predicated region
        $region37: #{transformer_forward.1} parent=31 // pred_check
          %p293 = pneg %p146
        $region38: #{transformer_forward.1} parent=31 // pred_check_branch
          %295 = sbr.rel (%p293) target = $region40
        $region39: #{transformer_forward.1} parent=31 // pred_region
          %s296 = sand.u32 %s16, 1
          %s297 = scalar_lea.sflag [#allocation4], %s296
          %s298 = sand.u32 %s136, 1
          %s299 = smul.addr %s298, 16
          %s300 = scalar_lea.vmem [#allocation8], %s299
          %s302 = ssub.s32 256, 256
          %303 = vsyncadd %s297, %s302
          %s304 = smul.addr %s16, 2
          %s305 = smul.addr %s304, 128
          %s306 = scalar_lea.hbm %s5, %s305
          %s308 = sshll.u32 %s300, 4
          %s309 = int_to_ptr.vmem [resolvable:$true] %s308
          %311 = dma.hbm_to_vmem [thread:$0]  %s306, 256, %s309, %s297
        $region40: #{transformer_forward.1} parent=31 // pred_fallthru
          _
        // Predicated region
        $region41: #{transformer_forward.1} parent=31 // pred_check
          %p312 = pneg %p172
        $region42: #{transformer_forward.1} parent=31 // pred_check_branch
          %314 = sbr.rel (%p312) target = $region44
        $region43: #{transformer_forward.1} parent=31 // pred_region
          %s315 = sand.u32 %s16, 1
          %s316 = scalar_lea.sflag [#allocation4], %s315
          %s317 = sand.u32 %s162, 1
          %s318 = smul.addr %s317, 512
          %s319 = scalar_lea.vmem [#allocation9], %s318
          %s321 = ssub.s32 8192, 8192
          %322 = vsyncadd %s316, %s321
          %s323 = smul.addr %s16, 128
          %s324 = smul.addr %s323, 64
          %s325 = scalar_lea.hbm %s6, %s324
          %s326 = sshll.u32 %s319, 4
          %s327 = int_to_ptr.vmem [resolvable:$true] %s326
          %332 = dma.hbm_to_vmem [thread:$0]  %s325, 8192, %s327, %s316, 1024, 1024, 64
        $region44: #{transformer_forward.1} parent=31 // pred_fallthru
          _
        // Predicated region
        $region45: #{transformer_forward.1} parent=31 // pred_check
          %p333 = pneg %p198
        $region46: #{transformer_forward.1} parent=31 // pred_check_branch
          %335 = sbr.rel (%p333) target = $region48
        $region47: #{transformer_forward.1} parent=31 // pred_region
          %s336 = sand.u32 %s16, 1
          %s337 = scalar_lea.sflag [#allocation4], %s336
          %s338 = sand.u32 %s188, 1
          %s339 = smul.addr %s338, 512
          %s340 = scalar_lea.vmem [#allocation10], %s339
          %s342 = ssub.s32 8192, 8192
          %343 = vsyncadd %s337, %s342
          %s344 = smul.addr %s16, 128
          %s345 = smul.addr %s344, 64
          %s346 = scalar_lea.hbm %s7, %s345
          %s347 = sshll.u32 %s340, 4
          %s348 = int_to_ptr.vmem [resolvable:$true] %s347
          %353 = dma.hbm_to_vmem [thread:$0]  %s346, 8192, %s348, %s337, 1024, 1024, 64
        $region48: #{transformer_forward.1} parent=31 // pred_fallthru
          _
      $region32: #{transformer_forward.1} parent=5 // pred_fallthru
        _
      %p354 = scmp.le.s32.totalorder 1, %s16
      %p355 = scmp.lt.s32.totalorder %s16, 3
      %p356 = pnand %p354, %p355
      %p357 = pneg %p356
      // Predicated region
      $region49: #{transformer_forward.1} parent=5 // pred_check
        _
      $region50: #{transformer_forward.1} parent=5 // pred_check_branch
        %359 = sbr.rel (%p356) target = $region52
      $region51: #{transformer_forward.1} parent=5 // pred_region
        %s360 = ssub.s32 %s16, 1
        // Predicated region
        $region53: #{transformer_forward.1} parent=51 // pred_check
          %p361 = pneg %p37
        $region54: #{transformer_forward.1} parent=51 // pred_check_branch
          %363 = sbr.rel (%p361) target = $region56
        $region55: #{transformer_forward.1} parent=51 // pred_region
          %364 = dma.done [#allocation4], 128
        $region56: #{transformer_forward.1} parent=51 // pred_fallthru
          _
        // Predicated region
        $region57: #{transformer_forward.1} parent=51 // pred_check
          %p365 = pneg %p100
        $region58: #{transformer_forward.1} parent=51 // pred_check_branch
          %367 = sbr.rel (%p365) target = $region60
        $region59: #{transformer_forward.1} parent=51 // pred_region
          %368 = dma.done [#allocation6], 512
        $region60: #{transformer_forward.1} parent=51 // pred_fallthru
          _
        %s369 = sand.u32 %s21, 1
        %s370 = scalar_lea.sflag [#allocation4], %s369
        %s371 = sand.u32 %s113, 1
        %s372 = smul.addr %s371, 128
        %s373 = scalar_lea.vmem [#allocation7], %s372
        // Predicated region
        $region61: #{transformer_forward.1} parent=51 // pred_check
          %p374 = pneg %p126
        $region62: #{transformer_forward.1} parent=51 // pred_check_branch
          %376 = sbr.rel (%p374) target = $region64
        $region63: #{transformer_forward.1} parent=51 // pred_region
          %377 = dma.done %s370, 2048
        $region64: #{transformer_forward.1} parent=51 // pred_fallthru
          _
        %s378 = sand.u32 %s21, 1
        %s379 = scalar_lea.sflag [#allocation4], %s378
        %s380 = sand.u32 %s139, 1
        %s381 = smul.addr %s380, 16
        %s382 = scalar_lea.vmem [#allocation8], %s381
        // Predicated region
        $region65: #{transformer_forward.1} parent=51 // pred_check
          %p383 = pneg %p152
        $region66: #{transformer_forward.1} parent=51 // pred_check_branch
          %385 = sbr.rel (%p383) target = $region68
        $region67: #{transformer_forward.1} parent=51 // pred_region
          %386 = dma.done %s379, 256
        $region68: #{transformer_forward.1} parent=51 // pred_fallthru
          _
        %s387 = sand.u32 %s21, 1
        %s388 = scalar_lea.sflag [#allocation4], %s387
        %s389 = sand.u32 %s165, 1
        %s390 = smul.addr %s389, 512
        %s391 = scalar_lea.vmem [#allocation9], %s390
        // Predicated region
        $region69: #{transformer_forward.1} parent=51 // pred_check
          %p392 = pneg %p178
        $region70: #{transformer_forward.1} parent=51 // pred_check_branch
          %394 = sbr.rel (%p392) target = $region72
        $region71: #{transformer_forward.1} parent=51 // pred_region
          %395 = dma.done %s388, 8192
        $region72: #{transformer_forward.1} parent=51 // pred_fallthru
          _
        %s396 = sand.u32 %s21, 1
        %s397 = scalar_lea.sflag [#allocation4], %s396
        %s398 = sand.u32 %s191, 1
        %s399 = smul.addr %s398, 512
        %s400 = scalar_lea.vmem [#allocation10], %s399
        // Predicated region
        $region73: #{transformer_forward.1} parent=51 // pred_check
          %p401 = pneg %p204
        $region74: #{transformer_forward.1} parent=51 // pred_check_branch
          %403 = sbr.rel (%p401) target = $region76
        $region75: #{transformer_forward.1} parent=51 // pred_region
          %404 = dma.done %s397, 8192
        $region76: #{transformer_forward.1} parent=51 // pred_fallthru
          _
        %p405 = pneg %p37
        %p406 = pneg %p34
        %p407 = pneg %p58
        %p408 = pneg %p55
        %p409 = pneg %p79
        %p410 = pneg %p76
        %p411 = pneg %p100
        %p412 = pneg %p97
        %s413 = sand.u32 %s21, 1
        %s414 = scalar_lea.sflag [#allocation4], %s413
        %s415 = sand.u32 %s113, 1
        %s416 = smul.addr %s415, 128
        %s417 = scalar_lea.vmem [#allocation7], %s416
        %p418 = pneg %p126
        %p419 = pneg %p123
        %s420 = sand.u32 %s21, 1
        %s421 = scalar_lea.sflag [#allocation4], %s420
        %s422 = sand.u32 %s139, 1
        %s423 = smul.addr %s422, 16
        %s424 = scalar_lea.vmem [#allocation8], %s423
        %p425 = pneg %p152
        %p426 = pneg %p149
        %s427 = sand.u32 %s21, 1
        %s428 = scalar_lea.sflag [#allocation4], %s427
        %s429 = sand.u32 %s165, 1
        %s430 = smul.addr %s429, 512
        %s431 = scalar_lea.vmem [#allocation9], %s430
        %p432 = pneg %p178
        %p433 = pneg %p175
        %s434 = sand.u32 %s21, 1
        %s435 = scalar_lea.sflag [#allocation4], %s434
        %s436 = sand.u32 %s191, 1
        %s437 = smul.addr %s436, 512
        %s438 = scalar_lea.vmem [#allocation10], %s437
        %p439 = pneg %p204
        %p440 = pneg %p201
        %p441 = pneg %p225
        %p442 = pneg %p222
        %p444 = scmp.eq.s32.totalorder %s21, 0
        // Predicated region
        $region77: #{transformer_forward.1} parent=51 // pred_check
          %p445 = pneg %p444
        $region78: #{transformer_forward.1} parent=51 // pred_check_branch
          %447 = sbr.rel (%p445) target = $region80
        $region79: #{transformer_forward.1} parent=51 // pred_region
          %v448 = vld [vmem:[#allocation3] sm:$0xff]
          %v449 = vld [vmem:[%s1] sm:$0xff]
          %v450 = vld [vmem:[%s1 + $0x8] sm:$0xff]
          %v451 = vld [vmem:[%s2] sm:$0x1]
          %v452 = vlaneseq
          %v453 = vshrl.u32 %v452, 7
          %v454 = vsub.s32 0, %v453
          %v455 = vrot.slane %v451, %v454
          %vm456 = vcmask 130048
          %v458 = vsel %vm456, %v448, 0
          %460 = vmatprep.subr.mxu0 0.0
          %461 = vmatpush1.msra.mxu0 %v449
          %462 = vmatprep.subr.mxu0 0.0
          %463 = vmatpush1.msra.mxu0 %v450
          %464 = vmatprep.subr.mxu0 0.0
          %465 = vmatpush1.msra.mxu0 0.0
          %466 = vmatprep.subr.mxu0 0.0
          %467 = vmatpush1.msra.mxu0 0.0
          %468 = vmatprep.subr.mxu0 0.0
          %469 = vmatpush1.msra.mxu0 0.0
          %470 = vmatprep.subr.mxu0 0.0
          %471 = vmatpush1.msra.mxu0 0.0
          %472 = vmatprep.subr.mxu0 0.0
          %473 = vmatpush1.msra.mxu0 0.0
          %474 = vmatprep.subr.mxu0 0.0
          %475 = vmatpush1.msra.mxu0 0.0
          %476 = vmatprep.subr.mxu0 0.0
          %477 = vmatpush1.msra.mxu0 0.0
          %478 = vmatprep.subr.mxu0 0.0
          %479 = vmatpush1.msra.mxu0 0.0
          %480 = vmatprep.subr.mxu0 0.0
          %481 = vmatpush1.msra.mxu0 0.0
          %482 = vmatprep.subr.mxu0 0.0
          %483 = vmatpush1.msra.mxu0 0.0
          %484 = vmatprep.subr.mxu0 0.0
          %485 = vmatpush1.msra.mxu0 0.0
          %486 = vmatprep.subr.mxu0 0.0
          %487 = vmatpush1.msra.mxu0 0.0
          %488 = vmatprep.subr.mxu0 0.0
          %489 = vmatpush1.msra.mxu0 0.0
          %490 = vmatprep.subr.mxu0 0.0
          %491 = vmatpush1.msra.mxu0 0.0
          %492 = vmatprep.subr.mxu0 0.0
          %493 = vmatpush1.msra.mxu0 0.0
          %494 = vmatprep.subr.mxu0 0.0
          %495 = vmatpush1.msra.mxu0 0.0
          %496 = vmatprep.subr.mxu0 0.0
          %497 = vmatpush1.msra.mxu0 0.0
          %498 = vmatprep.subr.mxu0 0.0
          %499 = vmatpush1.msra.mxu0 0.0
          %500 = vmatprep.subr.mxu0 0.0
          %501 = vmatpush1.msra.mxu0 0.0
          %502 = vmatprep.subr.mxu0 0.0
          %503 = vmatpush1.msra.mxu0 0.0
          %504 = vmatprep.subr.mxu0 0.0
          %505 = vmatpush1.msra.mxu0 0.0
          %506 = vmatprep.subr.mxu0 0.0
          %507 = vmatpush1.msra.mxu0 0.0
          %508 = vmatprep.subr.mxu0 0.0
          %509 = vmatpush1.msra.mxu0 0.0
          %510 = vmatprep.subr.mxu0 0.0
          %511 = vmatpush1.msra.mxu0 0.0
          %512 = vmatprep.subr.mxu0 0.0
          %513 = vmatpush1.msra.mxu0 0.0
          %514 = vmatprep.subr.mxu0 0.0
          %515 = vmatpush1.msra.mxu0 0.0
          %516 = vmatprep.subr.mxu0 0.0
          %517 = vmatpush1.msra.mxu0 0.0
          %518 = vmatprep.subr.mxu0 0.0
          %519 = vmatpush1.msra.mxu0 0.0
          %520 = vmatprep.subr.mxu0 0.0
          %521 = vmatpush1.msra.mxu0 0.0
          %522 = vmatprep.subr.mxu0 0.0
          %523 = vmatpush1.msra.mxu0 0.0
          %524 = vmatprep.mubr.f32.mxu0 0.0
          %525 = vmatmul.mubr.f32.gmra.mrb[0].mxu0 %v458
          %v526 = vpop.f32.mrb[0].mxu0
          %v527 = vadd.f32 %v455, %v526
          %v528 = vpop.f32.mrb[0].mxu0
          %529 = vdwg.mxu0
          %vm530 = vcmask 523264
          %531 = vst.msk [vmem:[#allocation2] sm:$0xff] %vm530, %v527
        $region80: #{transformer_forward.1} parent=51 // pred_fallthru
          _
        %v532 = vld [vmem:[#allocation2] sm:$0xff]
        %v533 = vld [vmem:[%s373] sm:$0xff]
        %v534 = vld [vmem:[%s373 + $0x8] sm:$0xff]
        %v535 = vld [vmem:[%s373 + $0x10] sm:$0xff]
        %v536 = vld [vmem:[%s373 + $0x18] sm:$0xff]
        %v537 = vld [vmem:[%s373 + $0x20] sm:$0xff]
        %v538 = vld [vmem:[%s373 + $0x28] sm:$0xff]
        %v539 = vld [vmem:[%s373 + $0x30] sm:$0xff]
        %v540 = vld [vmem:[%s373 + $0x38] sm:$0xff]
        %v541 = vld [vmem:[%s373 + $0x40] sm:$0xff]
        %v542 = vld [vmem:[%s373 + $0x48] sm:$0xff]
        %v543 = vld [vmem:[%s373 + $0x50] sm:$0xff]
        %v544 = vld [vmem:[%s373 + $0x58] sm:$0xff]
        %v545 = vld [vmem:[%s373 + $0x60] sm:$0xff]
        %v546 = vld [vmem:[%s373 + $0x68] sm:$0xff]
        %v547 = vld [vmem:[%s373 + $0x70] sm:$0xff]
        %v548 = vld [vmem:[%s373 + $0x78] sm:$0xff]
        %v549 = vld [vmem:[%s382] sm:$0xff]
        %v550 = vld [vmem:[%s382 + $0x8] sm:$0xff]
        %v551 = vlaneseq
        %v552 = vshrl.u32 %v551, 7
        %v553 = vsub.s32 0, %v552
        %v554 = vrot.slane %v549, %v553
        %v555 = vlaneseq
        %v556 = vshrl.u32 %v555, 7
        %v557 = vsub.s32 0, %v556
        %v558 = vrot.slane %v550, %v557
        %vm559 = vcmask 523264
        %v561 = vsel %vm559, %v532, 0
        %563 = vmatprep.subr.mxu0 %v534
        %564 = vmatpush1.msra.mxu0 %v533
        %565 = vmatprep.subr.mxu0 %v536
        %566 = vmatpush1.msra.mxu0 %v535
        %567 = vmatprep.subr.mxu0 %v538
        %568 = vmatpush1.msra.mxu0 %v537
        %569 = vmatprep.subr.mxu0 %v540
        %570 = vmatpush1.msra.mxu0 %v539
        %571 = vmatprep.subr.mxu0 %v542
        %572 = vmatpush1.msra.mxu0 %v541
        %573 = vmatprep.subr.mxu0 %v544
        %574 = vmatpush1.msra.mxu0 %v543
        %575 = vmatprep.subr.mxu0 %v546
        %576 = vmatpush1.msra.mxu0 %v545
        %577 = vmatprep.subr.mxu0 %v548
        %578 = vmatpush1.msra.mxu0 %v547
        %579 = vmatprep.subr.mxu0 0.0
        %580 = vmatpush1.msra.mxu0 0.0
        %581 = vmatprep.subr.mxu0 0.0
        %582 = vmatpush1.msra.mxu0 0.0
        %583 = vmatprep.subr.mxu0 0.0
        %584 = vmatpush1.msra.mxu0 0.0
        %585 = vmatprep.subr.mxu0 0.0
        %586 = vmatpush1.msra.mxu0 0.0
        %587 = vmatprep.subr.mxu0 0.0
        %588 = vmatpush1.msra.mxu0 0.0
        %589 = vmatprep.subr.mxu0 0.0
        %590 = vmatpush1.msra.mxu0 0.0
        %591 = vmatprep.subr.mxu0 0.0
        %592 = vmatpush1.msra.mxu0 0.0
        %593 = vmatprep.subr.mxu0 0.0
        %594 = vmatpush1.msra.mxu0 0.0
        %595 = vmatprep.subr.mxu0 0.0
        %596 = vmatpush1.msra.mxu0 0.0
        %597 = vmatprep.subr.mxu0 0.0
        %598 = vmatpush1.msra.mxu0 0.0
        %599 = vmatprep.subr.mxu0 0.0
        %600 = vmatpush1.msra.mxu0 0.0
        %601 = vmatprep.subr.mxu0 0.0
        %602 = vmatpush1.msra.mxu0 0.0
        %603 = vmatprep.subr.mxu0 0.0
        %604 = vmatpush1.msra.mxu0 0.0
        %605 = vmatprep.subr.mxu0 0.0
        %606 = vmatpush1.msra.mxu0 0.0
        %607 = vmatprep.subr.mxu0 0.0
        %608 = vmatpush1.msra.mxu0 0.0
        %609 = vmatprep.subr.mxu0 0.0
        %610 = vmatpush1.msra.mxu0 0.0
        %611 = vmatprep.subr.mxu0 0.0
        %612 = vmatpush1.msra.mxu0 0.0
        %613 = vmatprep.subr.mxu0 0.0
        %614 = vmatpush1.msra.mxu0 0.0
        %615 = vmatprep.subr.mxu0 0.0
        %616 = vmatpush1.msra.mxu0 0.0
        %617 = vmatprep.subr.mxu0 0.0
        %618 = vmatpush1.msra.mxu0 0.0
        %619 = vmatprep.subr.mxu0 0.0
        %620 = vmatpush1.msra.mxu0 0.0
        %621 = vmatprep.subr.mxu0 0.0
        %622 = vmatpush1.msra.mxu0 0.0
        %623 = vmatprep.subr.mxu0 0.0
        %624 = vmatpush1.msra.mxu0 0.0
        %625 = vmatprep.subr.mxu0 0.0
        %626 = vmatpush1.msra.mxu0 0.0
        %627 = vmatprep.mubr.f32.mxu0 0.0
        %628 = vmatmul.mubr.f32.gmra.mrb[0].mxu0 %v561
        %v629 = vpop.f32.mrb[0].mxu0
        %v630 = vadd.f32 %v554, %v629
        %v631 = vpop.f32.mrb[0].mxu0
        %v632 = vadd.f32 %v558, %v631
        %633 = vdwg.mxu0
        %635 = vrot.lane.b32.xlu0 %v630, 64
        %v636 = vpop.permute.xlu0 %635
        %vm637 = vcmask 130048
        %v638 = vsel %vm637, %v630, 0
        %v640 = vsel %vm637, %v636, 0
        %642 = vmatprep.subr.mxu0 0.0
        %643 = vmatpush1.xpose.msra.mxu0 %v640
        %644 = vmatprep.subr.mxu0 0.0
        %645 = vmatpush1.xpose.msra.mxu0 0.0
        %646 = vmatprep.subr.mxu0 0.0
        %647 = vmatpush1.xpose.msra.mxu0 0.0
        %648 = vmatprep.subr.mxu0 0.0
        %649 = vmatpush1.xpose.msra.mxu0 0.0
        %650 = vmatprep.subr.mxu0 0.0
        %651 = vmatpush1.xpose.msra.mxu0 0.0
        %652 = vmatprep.subr.mxu0 0.0
        %653 = vmatpush1.xpose.msra.mxu0 0.0
        %654 = vmatprep.subr.mxu0 0.0
        %655 = vmatpush1.xpose.msra.mxu0 0.0
        %656 = vmatprep.subr.mxu0 0.0
        %657 = vmatpush1.xpose.msra.mxu0 0.0
        %658 = vmatprep.subr.mxu0 0.0
        %659 = vmatpush1.xpose.msra.mxu0 0.0
        %660 = vmatprep.subr.mxu0 0.0
        %661 = vmatpush1.xpose.msra.mxu0 0.0
        %662 = vmatprep.subr.mxu0 0.0
        %663 = vmatpush1.xpose.msra.mxu0 0.0
        %664 = vmatprep.subr.mxu0 0.0
        %665 = vmatpush1.xpose.msra.mxu0 0.0
        %666 = vmatprep.subr.mxu0 0.0
        %667 = vmatpush1.xpose.msra.mxu0 0.0
        %668 = vmatprep.subr.mxu0 0.0
        %669 = vmatpush1.xpose.msra.mxu0 0.0
        %670 = vmatprep.subr.mxu0 0.0
        %671 = vmatpush1.xpose.msra.mxu0 0.0
        %672 = vmatprep.subr.mxu0 0.0
        %673 = vmatpush1.xpose.msra.mxu0 0.0
        %674 = vmatprep.subr.mxu0 0.0
        %675 = vmatpush1.xpose.msra.mxu0 0.0
        %676 = vmatprep.subr.mxu0 0.0
        %677 = vmatpush1.xpose.msra.mxu0 0.0
        %678 = vmatprep.subr.mxu0 0.0
        %679 = vmatpush1.xpose.msra.mxu0 0.0
        %680 = vmatprep.subr.mxu0 0.0
        %681 = vmatpush1.xpose.msra.mxu0 0.0
        %682 = vmatprep.subr.mxu0 0.0
        %683 = vmatpush1.xpose.msra.mxu0 0.0
        %684 = vmatprep.subr.mxu0 0.0
        %685 = vmatpush1.xpose.msra.mxu0 0.0
        %686 = vmatprep.subr.mxu0 0.0
        %687 = vmatpush1.xpose.msra.mxu0 0.0
        %688 = vmatprep.subr.mxu0 0.0
        %689 = vmatpush1.xpose.msra.mxu0 0.0
        %690 = vmatprep.subr.mxu0 0.0
        %691 = vmatpush1.xpose.msra.mxu0 0.0
        %692 = vmatprep.subr.mxu0 0.0
        %693 = vmatpush1.xpose.msra.mxu0 0.0
        %694 = vmatprep.subr.mxu0 0.0
        %695 = vmatpush1.xpose.msra.mxu0 0.0
        %696 = vmatprep.subr.mxu0 0.0
        %697 = vmatpush1.xpose.msra.mxu0 0.0
        %698 = vmatprep.subr.mxu0 0.0
        %699 = vmatpush1.xpose.msra.mxu0 0.0
        %700 = vmatprep.subr.mxu0 0.0
        %701 = vmatpush1.xpose.msra.mxu0 0.0
        %702 = vmatprep.subr.mxu0 0.0
        %703 = vmatpush1.xpose.msra.mxu0 0.0
        %704 = vmatprep.subr.mxu0 0.0
        %705 = vmatpush1.xpose.msra.mxu0 0.0
        %706 = vmatprep.mubr.f32.mxu0 0.0
        %707 = vmatmul.mubr.f32.gmra.mrb[0].mxu0 %v638
        %v708 = vpop.f32.mrb[0].mxu0
        %v709 = vadd.f32 0.0, %v708
        %v710 = vpop.f32.mrb[0].mxu0
        %711 = vdwg.mxu0
        %vm712 = vcmask 64512
        %v713 = vsel %vm712, %v709, -inf
        %714 = vmax.xlane.f32.xlu0 %v713
        %v715 = vpop.xlane.xlu0 %714
        %v716 = vsub.f32 %v709, %v715
        %v717 = vmul.f32 %v716, 1.442695
        %v718 = vpow.pop %v717
        %v719 = vsel %vm712, %v718, 0.0
        %720 = vadd.xlane.f32.xlu0 %v719
        %v721 = vpop.xlane.xlu0 %720
        %v722 = vrcp.pop %v721
        %v723 = vmul.f32 %v718, %v722
        %v725 = vsel %vm712, %v723, 0
        %727 = vmatprep.subr.mxu0 0.0
        %728 = vmatpush1.msra.mxu0 %v632
        %729 = vmatprep.subr.mxu0 0.0
        %730 = vmatpush1.msra.mxu0 0.0
        %731 = vmatprep.subr.mxu0 0.0
        %732 = vmatpush1.msra.mxu0 0.0
        %733 = vmatprep.subr.mxu0 0.0
        %734 = vmatpush1.msra.mxu0 0.0
        %735 = vmatprep.subr.mxu0 0.0
        %736 = vmatpush1.msra.mxu0 0.0
        %737 = vmatprep.subr.mxu0 0.0
        %738 = vmatpush1.msra.mxu0 0.0
        %739 = vmatprep.subr.mxu0 0.0
        %740 = vmatpush1.msra.mxu0 0.0
        %741 = vmatprep.subr.mxu0 0.0
        %742 = vmatpush1.msra.mxu0 0.0
        %743 = vmatprep.subr.mxu0 0.0
        %744 = vmatpush1.msra.mxu0 0.0
        %745 = vmatprep.subr.mxu0 0.0
        %746 = vmatpush1.msra.mxu0 0.0
        %747 = vmatprep.subr.mxu0 0.0
        %748 = vmatpush1.msra.mxu0 0.0
        %749 = vmatprep.subr.mxu0 0.0
        %750 = vmatpush1.msra.mxu0 0.0
        %751 = vmatprep.subr.mxu0 0.0
        %752 = vmatpush1.msra.mxu0 0.0
        %753 = vmatprep.subr.mxu0 0.0
        %754 = vmatpush1.msra.mxu0 0.0
        %755 = vmatprep.subr.mxu0 0.0
        %756 = vmatpush1.msra.mxu0 0.0
        %757 = vmatprep.subr.mxu0 0.0
        %758 = vmatpush1.msra.mxu0 0.0
        %759 = vmatprep.subr.mxu0 0.0
        %760 = vmatpush1.msra.mxu0 0.0
        %761 = vmatprep.subr.mxu0 0.0
        %762 = vmatpush1.msra.mxu0 0.0
        %763 = vmatprep.subr.mxu0 0.0
        %764 = vmatpush1.msra.mxu0 0.0
        %765 = vmatprep.subr.mxu0 0.0
        %766 = vmatpush1.msra.mxu0 0.0
        %767 = vmatprep.subr.mxu0 0.0
        %768 = vmatpush1.msra.mxu0 0.0
        %769 = vmatprep.subr.mxu0 0.0
        %770 = vmatpush1.msra.mxu0 0.0
        %771 = vmatprep.subr.mxu0 0.0
        %772 = vmatpush1.msra.mxu0 0.0
        %773 = vmatprep.subr.mxu0 0.0
        %774 = vmatpush1.msra.mxu0 0.0
        %775 = vmatprep.subr.mxu0 0.0
        %776 = vmatpush1.msra.mxu0 0.0
        %777 = vmatprep.subr.mxu0 0.0
        %778 = vmatpush1.msra.mxu0 0.0
        %779 = vmatprep.subr.mxu0 0.0
        %780 = vmatpush1.msra.mxu0 0.0
        %781 = vmatprep.subr.mxu0 0.0
        %782 = vmatpush1.msra.mxu0 0.0
        %783 = vmatprep.subr.mxu0 0.0
        %784 = vmatpush1.msra.mxu0 0.0
        %785 = vmatprep.subr.mxu0 0.0
        %786 = vmatpush1.msra.mxu0 0.0
        %787 = vmatprep.subr.mxu0 0.0
        %788 = vmatpush1.msra.mxu0 0.0
        %789 = vmatprep.subr.mxu0 0.0
        %790 = vmatpush1.msra.mxu0 0.0
        %791 = vmatprep.mubr.f32.mxu0 0.0
        %792 = vmatmul.mubr.f32.gmra.mrb[0].mxu0 %v725
        %v793 = vpop.f32.mrb[0].mxu0
        %v794 = vadd.f32 0.0, %v793
        %v795 = vpop.f32.mrb[0].mxu0
        %796 = vdwg.mxu0
        %797 = vrot.lane.b32.xlu0 %v630, 112
        %v798 = vpop.permute.xlu0 %797
        %799 = vrot.lane.b32.xlu0 %v630, 48
        %v800 = vpop.permute.xlu0 %799
        %v801 = vsel %vm637, %v798, 0
        %v803 = vsel %vm637, %v800, 0
        %805 = vmatprep.subr.mxu0 0.0
        %806 = vmatpush1.xpose.msra.mxu0 %v803
        %807 = vmatprep.subr.mxu0 0.0
        %808 = vmatpush1.xpose.msra.mxu0 0.0
        %809 = vmatprep.subr.mxu0 0.0
        %810 = vmatpush1.xpose.msra.mxu0 0.0
        %811 = vmatprep.subr.mxu0 0.0
        %812 = vmatpush1.xpose.msra.mxu0 0.0
        %813 = vmatprep.subr.mxu0 0.0
        %814 = vmatpush1.xpose.msra.mxu0 0.0
        %815 = vmatprep.subr.mxu0 0.0
        %816 = vmatpush1.xpose.msra.mxu0 0.0
        %817 = vmatprep.subr.mxu0 0.0
        %818 = vmatpush1.xpose.msra.mxu0 0.0
        %819 = vmatprep.subr.mxu0 0.0
        %820 = vmatpush1.xpose.msra.mxu0 0.0
        %821 = vmatprep.subr.mxu0 0.0
        %822 = vmatpush1.xpose.msra.mxu0 0.0
        %823 = vmatprep.subr.mxu0 0.0
        %824 = vmatpush1.xpose.msra.mxu0 0.0
        %825 = vmatprep.subr.mxu0 0.0
        %826 = vmatpush1.xpose.msra.mxu0 0.0
        %827 = vmatprep.subr.mxu0 0.0
        %828 = vmatpush1.xpose.msra.mxu0 0.0
        %829 = vmatprep.subr.mxu0 0.0
        %830 = vmatpush1.xpose.msra.mxu0 0.0
        %831 = vmatprep.subr.mxu0 0.0
        %832 = vmatpush1.xpose.msra.mxu0 0.0
        %833 = vmatprep.subr.mxu0 0.0
        %834 = vmatpush1.xpose.msra.mxu0 0.0
        %835 = vmatprep.subr.mxu0 0.0
        %836 = vmatpush1.xpose.msra.mxu0 0.0
        %837 = vmatprep.subr.mxu0 0.0
        %838 = vmatpush1.xpose.msra.mxu0 0.0
        %839 = vmatprep.subr.mxu0 0.0
        %840 = vmatpush1.xpose.msra.mxu0 0.0
        %841 = vmatprep.subr.mxu0 0.0
        %842 = vmatpush1.xpose.msra.mxu0 0.0
        %843 = vmatprep.subr.mxu0 0.0
        %844 = vmatpush1.xpose.msra.mxu0 0.0
        %845 = vmatprep.subr.mxu0 0.0
        %846 = vmatpush1.xpose.msra.mxu0 0.0
        %847 = vmatprep.subr.mxu0 0.0
        %848 = vmatpush1.xpose.msra.mxu0 0.0
        %849 = vmatprep.subr.mxu0 0.0
        %850 = vmatpush1.xpose.msra.mxu0 0.0
        %851 = vmatprep.subr.mxu0 0.0
        %852 = vmatpush1.xpose.msra.mxu0 0.0
        %853 = vmatprep.subr.mxu0 0.0
        %854 = vmatpush1.xpose.msra.mxu0 0.0
        %855 = vmatprep.subr.mxu0 0.0
        %856 = vmatpush1.xpose.msra.mxu0 0.0
        %857 = vmatprep.subr.mxu0 0.0
        %858 = vmatpush1.xpose.msra.mxu0 0.0
        %859 = vmatprep.subr.mxu0 0.0
        %860 = vmatpush1.xpose.msra.mxu0 0.0
        %861 = vmatprep.subr.mxu0 0.0
        %862 = vmatpush1.xpose.msra.mxu0 0.0
        %863 = vmatprep.subr.mxu0 0.0
        %864 = vmatpush1.xpose.msra.mxu0 0.0
        %865 = vmatprep.subr.mxu0 0.0
        %866 = vmatpush1.xpose.msra.mxu0 0.0
        %867 = vmatprep.subr.mxu0 0.0
        %868 = vmatpush1.xpose.msra.mxu0 0.0
        %869 = vmatprep.mubr.f32.mxu0 0.0
        %870 = vmatmul.mubr.f32.gmra.mrb[0].mxu0 %v801
        %v871 = vpop.f32.mrb[0].mxu0
        %v872 = vadd.f32 0.0, %v871
        %v873 = vpop.f32.mrb[0].mxu0
        %874 = vdwg.mxu0
        %v875 = vsel %vm712, %v872, -inf
        %876 = vmax.xlane.f32.xlu0 %v875
        %v877 = vpop.xlane.xlu0 %876
        %v878 = vsub.f32 %v872, %v877
        %v879 = vmul.f32 %v878, 1.442695
        %v880 = vpow.pop %v879
        %v881 = vsel %vm712, %v880, 0.0
        %882 = vadd.xlane.f32.xlu0 %v881
        %v883 = vpop.xlane.xlu0 %882
        %v884 = vrcp.pop %v883
        %v885 = vmul.f32 %v880, %v884
        %887 = vrot.lane.b32.xlu0 %v632, 112
        %v888 = vpop.permute.xlu0 %887
        %v891 = vsel %vm712, %v885, 0
        %893 = vmatprep.subr.mxu0 0.0
        %894 = vmatpush1.msra.mxu0 %v888
        %895 = vmatprep.subr.mxu0 0.0
        %896 = vmatpush1.msra.mxu0 0.0
        %897 = vmatprep.subr.mxu0 0.0
        %898 = vmatpush1.msra.mxu0 0.0
        %899 = vmatprep.subr.mxu0 0.0
        %900 = vmatpush1.msra.mxu0 0.0
        %901 = vmatprep.subr.mxu0 0.0
        %902 = vmatpush1.msra.mxu0 0.0
        %903 = vmatprep.subr.mxu0 0.0
        %904 = vmatpush1.msra.mxu0 0.0
        %905 = vmatprep.subr.mxu0 0.0
        %906 = vmatpush1.msra.mxu0 0.0
        %907 = vmatprep.subr.mxu0 0.0
        %908 = vmatpush1.msra.mxu0 0.0
        %909 = vmatprep.subr.mxu0 0.0
        %910 = vmatpush1.msra.mxu0 0.0
        %911 = vmatprep.subr.mxu0 0.0
        %912 = vmatpush1.msra.mxu0 0.0
        %913 = vmatprep.subr.mxu0 0.0
        %914 = vmatpush1.msra.mxu0 0.0
        %915 = vmatprep.subr.mxu0 0.0
        %916 = vmatpush1.msra.mxu0 0.0
        %917 = vmatprep.subr.mxu0 0.0
        %918 = vmatpush1.msra.mxu0 0.0
        %919 = vmatprep.subr.mxu0 0.0
        %920 = vmatpush1.msra.mxu0 0.0
        %921 = vmatprep.subr.mxu0 0.0
        %922 = vmatpush1.msra.mxu0 0.0
        %923 = vmatprep.subr.mxu0 0.0
        %924 = vmatpush1.msra.mxu0 0.0
        %925 = vmatprep.subr.mxu0 0.0
        %926 = vmatpush1.msra.mxu0 0.0
        %927 = vmatprep.subr.mxu0 0.0
        %928 = vmatpush1.msra.mxu0 0.0
        %929 = vmatprep.subr.mxu0 0.0
        %930 = vmatpush1.msra.mxu0 0.0
        %931 = vmatprep.subr.mxu0 0.0
        %932 = vmatpush1.msra.mxu0 0.0
        %933 = vmatprep.subr.mxu0 0.0
        %934 = vmatpush1.msra.mxu0 0.0
        %935 = vmatprep.subr.mxu0 0.0
        %936 = vmatpush1.msra.mxu0 0.0
        %937 = vmatprep.subr.mxu0 0.0
        %938 = vmatpush1.msra.mxu0 0.0
        %939 = vmatprep.subr.mxu0 0.0
        %940 = vmatpush1.msra.mxu0 0.0
        %941 = vmatprep.subr.mxu0 0.0
        %942 = vmatpush1.msra.mxu0 0.0
        %943 = vmatprep.subr.mxu0 0.0
        %944 = vmatpush1.msra.mxu0 0.0
        %945 = vmatprep.subr.mxu0 0.0
        %946 = vmatpush1.msra.mxu0 0.0
        %947 = vmatprep.subr.mxu0 0.0
        %948 = vmatpush1.msra.mxu0 0.0
        %949 = vmatprep.subr.mxu0 0.0
        %950 = vmatpush1.msra.mxu0 0.0
        %951 = vmatprep.subr.mxu0 0.0
        %952 = vmatpush1.msra.mxu0 0.0
        %953 = vmatprep.subr.mxu0 0.0
        %954 = vmatpush1.msra.mxu0 0.0
        %955 = vmatprep.subr.mxu0 0.0
        %956 = vmatpush1.msra.mxu0 0.0
        %957 = vmatprep.mubr.f32.mxu0 0.0
        %958 = vmatmul.mubr.f32.gmra.mrb[0].mxu0 %v891
        %v959 = vpop.f32.mrb[0].mxu0
        %v960 = vadd.f32 0.0, %v959
        %v961 = vpop.f32.mrb[0].mxu0
        %962 = vdwg.mxu0
        %963 = vrot.lane.b32.xlu0 %v630, 96
        %v964 = vpop.permute.xlu0 %963
        %965 = vrot.lane.b32.xlu0 %v630, 32
        %v966 = vpop.permute.xlu0 %965
        %v967 = vsel %vm637, %v964, 0
        %v969 = vsel %vm637, %v966, 0
        %971 = vmatprep.subr.mxu0 0.0
        %972 = vmatpush1.xpose.msra.mxu0 %v969
        %973 = vmatprep.subr.mxu0 0.0
        %974 = vmatpush1.xpose.msra.mxu0 0.0
        %975 = vmatprep.subr.mxu0 0.0
        %976 = vmatpush1.xpose.msra.mxu0 0.0
        %977 = vmatprep.subr.mxu0 0.0
        %978 = vmatpush1.xpose.msra.mxu0 0.0
        %979 = vmatprep.subr.mxu0 0.0
        %980 = vmatpush1.xpose.msra.mxu0 0.0
        %981 = vmatprep.subr.mxu0 0.0
        %982 = vmatpush1.xpose.msra.mxu0 0.0
        %983 = vmatprep.subr.mxu0 0.0
        %984 = vmatpush1.xpose.msra.mxu0 0.0
        %985 = vmatprep.subr.mxu0 0.0
        %986 = vmatpush1.xpose.msra.mxu0 0.0
        %987 = vmatprep.subr.mxu0 0.0
        %988 = vmatpush1.xpose.msra.mxu0 0.0
        %989 = vmatprep.subr.mxu0 0.0
        %990 = vmatpush1.xpose.msra.mxu0 0.0
        %991 = vmatprep.subr.mxu0 0.0
        %992 = vmatpush1.xpose.msra.mxu0 0.0
        %993 = vmatprep.subr.mxu0 0.0
        %994 = vmatpush1.xpose.msra.mxu0 0.0
        %995 = vmatprep.subr.mxu0 0.0
        %996 = vmatpush1.xpose.msra.mxu0 0.0
        %997 = vmatprep.subr.mxu0 0.0
        %998 = vmatpush1.xpose.msra.mxu0 0.0
        %999 = vmatprep.subr.mxu0 0.0
        %1000 = vmatpush1.xpose.msra.mxu0 0.0
        %1001 = vmatprep.subr.mxu0 0.0
        %1002 = vmatpush1.xpose.msra.mxu0 0.0
        %1003 = vmatprep.subr.mxu0 0.0
        %1004 = vmatpush1.xpose.msra.mxu0 0.0
        %1005 = vmatprep.subr.mxu0 0.0
        %1006 = vmatpush1.xpose.msra.mxu0 0.0
        %1007 = vmatprep.subr.mxu0 0.0
        %1008 = vmatpush1.xpose.msra.mxu0 0.0
        %1009 = vmatprep.subr.mxu0 0.0
        %1010 = vmatpush1.xpose.msra.mxu0 0.0
        %1011 = vmatprep.subr.mxu0 0.0
        %1012 = vmatpush1.xpose.msra.mxu0 0.0
        %1013 = vmatprep.subr.mxu0 0.0
        %1014 = vmatpush1.xpose.msra.mxu0 0.0
        %1015 = vmatprep.subr.mxu0 0.0
        %1016 = vmatpush1.xpose.msra.mxu0 0.0
        %1017 = vmatprep.subr.mxu0 0.0
        %1018 = vmatpush1.xpose.msra.mxu0 0.0
        %1019 = vmatprep.subr.mxu0 0.0
        %1020 = vmatpush1.xpose.msra.mxu0 0.0
        %1021 = vmatprep.subr.mxu0 0.0
        %1022 = vmatpush1.xpose.msra.mxu0 0.0
        %1023 = vmatprep.subr.mxu0 0.0
        %1024 = vmatpush1.xpose.msra.mxu0 0.0
        %1025 = vmatprep.subr.mxu0 0.0
        %1026 = vmatpush1.xpose.msra.mxu0 0.0
        %1027 = vmatprep.subr.mxu0 0.0
        %1028 = vmatpush1.xpose.msra.mxu0 0.0
        %1029 = vmatprep.subr.mxu0 0.0
        %1030 = vmatpush1.xpose.msra.mxu0 0.0
        %1031 = vmatprep.subr.mxu0 0.0
        %1032 = vmatpush1.xpose.msra.mxu0 0.0
        %1033 = vmatprep.subr.mxu0 0.0
        %1034 = vmatpush1.xpose.msra.mxu0 0.0
        %1035 = vmatprep.mubr.f32.mxu0 0.0
        %1036 = vmatmul.mubr.f32.gmra.mrb[0].mxu0 %v967
        %v1037 = vpop.f32.mrb[0].mxu0
        %v1038 = vadd.f32 0.0, %v1037
        %v1039 = vpop.f32.mrb[0].mxu0
        %1040 = vdwg.mxu0
        %v1041 = vsel %vm712, %v1038, -inf
        %1042 = vmax.xlane.f32.xlu0 %v1041
        %v1043 = vpop.xlane.xlu0 %1042
        %v1044 = vsub.f32 %v1038, %v1043
        %v1045 = vmul.f32 %v1044, 1.442695
        %v1046 = vpow.pop %v1045
        %v1047 = vsel %vm712, %v1046, 0.0
        %1048 = vadd.xlane.f32.xlu0 %v1047
        %v1049 = vpop.xlane.xlu0 %1048
        %v1050 = vrcp.pop %v1049
        %v1051 = vmul.f32 %v1046, %v1050
        %1052 = vrot.lane.b32.xlu0 %v632, 96
        %v1053 = vpop.permute.xlu0 %1052
        %v1056 = vsel %vm712, %v1051, 0
        %1058 = vmatprep.subr.mxu0 0.0
        %1059 = vmatpush1.msra.mxu0 %v1053
        %1060 = vmatprep.subr.mxu0 0.0
        %1061 = vmatpush1.msra.mxu0 0.0
        %1062 = vmatprep.subr.mxu0 0.0
        %1063 = vmatpush1.msra.mxu0 0.0
        %1064 = vmatprep.subr.mxu0 0.0
        %1065 = vmatpush1.msra.mxu0 0.0
        %1066 = vmatprep.subr.mxu0 0.0
        %1067 = vmatpush1.msra.mxu0 0.0
        %1068 = vmatprep.subr.mxu0 0.0
        %1069 = vmatpush1.msra.mxu0 0.0
        %1070 = vmatprep.subr.mxu0 0.0
        %1071 = vmatpush1.msra.mxu0 0.0
        %1072 = vmatprep.subr.mxu0 0.0
        %1073 = vmatpush1.msra.mxu0 0.0
        %1074 = vmatprep.subr.mxu0 0.0
        %1075 = vmatpush1.msra.mxu0 0.0
        %1076 = vmatprep.subr.mxu0 0.0
        %1077 = vmatpush1.msra.mxu0 0.0
        %1078 = vmatprep.subr.mxu0 0.0
        %1079 = vmatpush1.msra.mxu0 0.0
        %1080 = vmatprep.subr.mxu0 0.0
        %1081 = vmatpush1.msra.mxu0 0.0
        %1082 = vmatprep.subr.mxu0 0.0
        %1083 = vmatpush1.msra.mxu0 0.0
        %1084 = vmatprep.subr.mxu0 0.0
        %1085 = vmatpush1.msra.mxu0 0.0
        %1086 = vmatprep.subr.mxu0 0.0
        %1087 = vmatpush1.msra.mxu0 0.0
        %1088 = vmatprep.subr.mxu0 0.0
        %1089 = vmatpush1.msra.mxu0 0.0
        %1090 = vmatprep.subr.mxu0 0.0
        %1091 = vmatpush1.msra.mxu0 0.0
        %1092 = vmatprep.subr.mxu0 0.0
        %1093 = vmatpush1.msra.mxu0 0.0
        %1094 = vmatprep.subr.mxu0 0.0
        %1095 = vmatpush1.msra.mxu0 0.0
        %1096 = vmatprep.subr.mxu0 0.0
        %1097 = vmatpush1.msra.mxu0 0.0
        %1098 = vmatprep.subr.mxu0 0.0
        %1099 = vmatpush1.msra.mxu0 0.0
        %1100 = vmatprep.subr.mxu0 0.0
        %1101 = vmatpush1.msra.mxu0 0.0
        %1102 = vmatprep.subr.mxu0 0.0
        %1103 = vmatpush1.msra.mxu0 0.0
        %1104 = vmatprep.subr.mxu0 0.0
        %1105 = vmatpush1.msra.mxu0 0.0
        %1106 = vmatprep.subr.mxu0 0.0
        %1107 = vmatpush1.msra.mxu0 0.0
        %1108 = vmatprep.subr.mxu0 0.0
        %1109 = vmatpush1.msra.mxu0 0.0
        %1110 = vmatprep.subr.mxu0 0.0
        %1111 = vmatpush1.msra.mxu0 0.0
        %1112 = vmatprep.subr.mxu0 0.0
        %1113 = vmatpush1.msra.mxu0 0.0
        %1114 = vmatprep.subr.mxu0 0.0
        %1115 = vmatpush1.msra.mxu0 0.0
        %1116 = vmatprep.subr.mxu0 0.0
        %1117 = vmatpush1.msra.mxu0 0.0
        %1118 = vmatprep.subr.mxu0 0.0
        %1119 = vmatpush1.msra.mxu0 0.0
        %1120 = vmatprep.subr.mxu0 0.0
        %1121 = vmatpush1.msra.mxu0 0.0
        %1122 = vmatprep.mubr.f32.mxu0 0.0
        %1123 = vmatmul.mubr.f32.gmra.mrb[0].mxu0 %v1056
        %v1124 = vpop.f32.mrb[0].mxu0
        %v1125 = vadd.f32 0.0, %v1124
        %v1126 = vpop.f32.mrb[0].mxu0
        %1127 = vdwg.mxu0
        %1128 = vrot.lane.b32.xlu0 %v630, 80
        %v1129 = vpop.permute.xlu0 %1128
        %1130 = vrot.lane.b32.xlu0 %v630, 16
        %v1131 = vpop.permute.xlu0 %1130
        %v1132 = vsel %vm637, %v1129, 0
        %v1134 = vsel %vm637, %v1131, 0
        %1136 = vmatprep.subr.mxu0 0.0
        %1137 = vmatpush1.xpose.msra.mxu0 %v1134
        %1138 = vmatprep.subr.mxu0 0.0
        %1139 = vmatpush1.xpose.msra.mxu0 0.0
        %1140 = vmatprep.subr.mxu0 0.0
        %1141 = vmatpush1.xpose.msra.mxu0 0.0
        %1142 = vmatprep.subr.mxu0 0.0
        %1143 = vmatpush1.xpose.msra.mxu0 0.0
        %1144 = vmatprep.subr.mxu0 0.0
        %1145 = vmatpush1.xpose.msra.mxu0 0.0
        %1146 = vmatprep.subr.mxu0 0.0
        %1147 = vmatpush1.xpose.msra.mxu0 0.0
        %1148 = vmatprep.subr.mxu0 0.0
        %1149 = vmatpush1.xpose.msra.mxu0 0.0
        %1150 = vmatprep.subr.mxu0 0.0
        %1151 = vmatpush1.xpose.msra.mxu0 0.0
        %1152 = vmatprep.subr.mxu0 0.0
        %1153 = vmatpush1.xpose.msra.mxu0 0.0
        %1154 = vmatprep.subr.mxu0 0.0
        %1155 = vmatpush1.xpose.msra.mxu0 0.0
        %1156 = vmatprep.subr.mxu0 0.0
        %1157 = vmatpush1.xpose.msra.mxu0 0.0
        %1158 = vmatprep.subr.mxu0 0.0
        %1159 = vmatpush1.xpose.msra.mxu0 0.0
        %1160 = vmatprep.subr.mxu0 0.0
        %1161 = vmatpush1.xpose.msra.mxu0 0.0
        %1162 = vmatprep.subr.mxu0 0.0
        %1163 = vmatpush1.xpose.msra.mxu0 0.0
        %1164 = vmatprep.subr.mxu0 0.0
        %1165 = vmatpush1.xpose.msra.mxu0 0.0
        %1166 = vmatprep.subr.mxu0 0.0
        %1167 = vmatpush1.xpose.msra.mxu0 0.0
        %1168 = vmatprep.subr.mxu0 0.0
        %1169 = vmatpush1.xpose.msra.mxu0 0.0
        %1170 = vmatprep.subr.mxu0 0.0
        %1171 = vmatpush1.xpose.msra.mxu0 0.0
        %1172 = vmatprep.subr.mxu0 0.0
        %1173 = vmatpush1.xpose.msra.mxu0 0.0
        %1174 = vmatprep.subr.mxu0 0.0
        %1175 = vmatpush1.xpose.msra.mxu0 0.0
        %1176 = vmatprep.subr.mxu0 0.0
        %1177 = vmatpush1.xpose.msra.mxu0 0.0
        %1178 = vmatprep.subr.mxu0 0.0
        %1179 = vmatpush1.xpose.msra.mxu0 0.0
        %1180 = vmatprep.subr.mxu0 0.0
        %1181 = vmatpush1.xpose.msra.mxu0 0.0
        %1182 = vmatprep.subr.mxu0 0.0
        %1183 = vmatpush1.xpose.msra.mxu0 0.0
        %1184 = vmatprep.subr.mxu0 0.0
        %1185 = vmatpush1.xpose.msra.mxu0 0.0
        %1186 = vmatprep.subr.mxu0 0.0
        %1187 = vmatpush1.xpose.msra.mxu0 0.0
        %1188 = vmatprep.subr.mxu0 0.0
        %1189 = vmatpush1.xpose.msra.mxu0 0.0
        %1190 = vmatprep.subr.mxu0 0.0
        %1191 = vmatpush1.xpose.msra.mxu0 0.0
        %1192 = vmatprep.subr.mxu0 0.0
        %1193 = vmatpush1.xpose.msra.mxu0 0.0
        %1194 = vmatprep.subr.mxu0 0.0
        %1195 = vmatpush1.xpose.msra.mxu0 0.0
        %1196 = vmatprep.subr.mxu0 0.0
        %1197 = vmatpush1.xpose.msra.mxu0 0.0
        %1198 = vmatprep.subr.mxu0 0.0
        %1199 = vmatpush1.xpose.msra.mxu0 0.0
        %1200 = vmatprep.mubr.f32.mxu0 0.0
        %1201 = vmatmul.mubr.f32.gmra.mrb[0].mxu0 %v1132
        %v1202 = vpop.f32.mrb[0].mxu0
        %v1203 = vadd.f32 0.0, %v1202
        %v1204 = vpop.f32.mrb[0].mxu0
        %1205 = vdwg.mxu0
        %v1206 = vsel %vm712, %v1203, -inf
        %1207 = vmax.xlane.f32.xlu0 %v1206
        %v1208 = vpop.xlane.xlu0 %1207
        %v1209 = vsub.f32 %v1203, %v1208
        %v1210 = vmul.f32 %v1209, 1.442695
        %v1211 = vpow.pop %v1210
        %v1212 = vsel %vm712, %v1211, 0.0
        %1213 = vadd.xlane.f32.xlu0 %v1212
        %v1214 = vpop.xlane.xlu0 %1213
        %v1215 = vrcp.pop %v1214
        %v1216 = vmul.f32 %v1211, %v1215
        %1217 = vrot.lane.b32.xlu0 %v632, 80
        %v1218 = vpop.permute.xlu0 %1217
        %v1221 = vsel %vm712, %v1216, 0
        %1223 = vmatprep.subr.mxu0 0.0
        %1224 = vmatpush1.msra.mxu0 %v1218
        %1225 = vmatprep.subr.mxu0 0.0
        %1226 = vmatpush1.msra.mxu0 0.0
        %1227 = vmatprep.subr.mxu0 0.0
        %1228 = vmatpush1.msra.mxu0 0.0
        %1229 = vmatprep.subr.mxu0 0.0
        %1230 = vmatpush1.msra.mxu0 0.0
        %1231 = vmatprep.subr.mxu0 0.0
        %1232 = vmatpush1.msra.mxu0 0.0
        %1233 = vmatprep.subr.mxu0 0.0
        %1234 = vmatpush1.msra.mxu0 0.0
        %1235 = vmatprep.subr.mxu0 0.0
        %1236 = vmatpush1.msra.mxu0 0.0
        %1237 = vmatprep.subr.mxu0 0.0
        %1238 = vmatpush1.msra.mxu0 0.0
        %1239 = vmatprep.subr.mxu0 0.0
        %1240 = vmatpush1.msra.mxu0 0.0
        %1241 = vmatprep.subr.mxu0 0.0
        %1242 = vmatpush1.msra.mxu0 0.0
        %1243 = vmatprep.subr.mxu0 0.0
        %1244 = vmatpush1.msra.mxu0 0.0
        %1245 = vmatprep.subr.mxu0 0.0
        %1246 = vmatpush1.msra.mxu0 0.0
        %1247 = vmatprep.subr.mxu0 0.0
        %1248 = vmatpush1.msra.mxu0 0.0
        %1249 = vmatprep.subr.mxu0 0.0
        %1250 = vmatpush1.msra.mxu0 0.0
        %1251 = vmatprep.subr.mxu0 0.0
        %1252 = vmatpush1.msra.mxu0 0.0
        %1253 = vmatprep.subr.mxu0 0.0
        %1254 = vmatpush1.msra.mxu0 0.0
        %1255 = vmatprep.subr.mxu0 0.0
        %1256 = vmatpush1.msra.mxu0 0.0
        %1257 = vmatprep.subr.mxu0 0.0
        %1258 = vmatpush1.msra.mxu0 0.0
        %1259 = vmatprep.subr.mxu0 0.0
        %1260 = vmatpush1.msra.mxu0 0.0
        %1261 = vmatprep.subr.mxu0 0.0
        %1262 = vmatpush1.msra.mxu0 0.0
        %1263 = vmatprep.subr.mxu0 0.0
        %1264 = vmatpush1.msra.mxu0 0.0
        %1265 = vmatprep.subr.mxu0 0.0
        %1266 = vmatpush1.msra.mxu0 0.0
        %1267 = vmatprep.subr.mxu0 0.0
        %1268 = vmatpush1.msra.mxu0 0.0
        %1269 = vmatprep.subr.mxu0 0.0
        %1270 = vmatpush1.msra.mxu0 0.0
        %1271 = vmatprep.subr.mxu0 0.0
        %1272 = vmatpush1.msra.mxu0 0.0
        %1273 = vmatprep.subr.mxu0 0.0
        %1274 = vmatpush1.msra.mxu0 0.0
        %1275 = vmatprep.subr.mxu0 0.0
        %1276 = vmatpush1.msra.mxu0 0.0
        %1277 = vmatprep.subr.mxu0 0.0
        %1278 = vmatpush1.msra.mxu0 0.0
        %1279 = vmatprep.subr.mxu0 0.0
        %1280 = vmatpush1.msra.mxu0 0.0
        %1281 = vmatprep.subr.mxu0 0.0
        %1282 = vmatpush1.msra.mxu0 0.0
        %1283 = vmatprep.subr.mxu0 0.0
        %1284 = vmatpush1.msra.mxu0 0.0
        %1285 = vmatprep.subr.mxu0 0.0
        %1286 = vmatpush1.msra.mxu0 0.0
        %1287 = vmatprep.mubr.f32.mxu0 0.0
        %1288 = vmatmul.mubr.f32.gmra.mrb[0].mxu0 %v1221
        %v1289 = vpop.f32.mrb[0].mxu0
        %v1290 = vadd.f32 0.0, %v1289
        %v1291 = vpop.f32.mrb[0].mxu0
        %1292 = vdwg.mxu0
        %1294 = vrot.lane.b32.xlu0 %v960, 16
        %v1295 = vpop.permute.xlu0 %1294
        %1298 = vrot.lane.b32.xlu0 %v1125, 32
        %v1299 = vpop.permute.xlu0 %1298
        %1302 = vrot.lane.b32.xlu0 %v1290, 48
        %v1303 = vpop.permute.xlu0 %1302
        %v1305 = vsel %vm637, %v794, %v1295
        %vm1306 = vcmask 261120
        %v1307 = vsel %vm1306, %v1305, %v1299
        %vm1308 = vcmask 392192
        %v1309 = vsel %vm1308, %v1307, %v1303
        %1318 = vrot.lane.b32.xlu0 %v534, 64
        %v1319 = vpop.permute.xlu0 %1318
        %1320 = vrot.lane.b32.xlu0 %v536, 64
        %v1321 = vpop.permute.xlu0 %1320
        %1322 = vrot.lane.b32.xlu0 %v538, 64
        %v1323 = vpop.permute.xlu0 %1322
        %1324 = vrot.lane.b32.xlu0 %v540, 64
        %v1325 = vpop.permute.xlu0 %1324
        %1326 = vrot.lane.b32.xlu0 %v542, 64
        %v1327 = vpop.permute.xlu0 %1326
        %1328 = vrot.lane.b32.xlu0 %v544, 64
        %v1329 = vpop.permute.xlu0 %1328
        %1330 = vrot.lane.b32.xlu0 %v546, 64
        %v1331 = vpop.permute.xlu0 %1330
        %1332 = vrot.lane.b32.xlu0 %v548, 64
        %v1333 = vpop.permute.xlu0 %1332
        %1343 = vrot.lane.b32.xlu0 %v558, 64
        %v1344 = vpop.permute.xlu0 %1343
        %v1347 = vsel %vm559, %v1309, 0
        %1349 = vmatprep.subr.mxu0 0.0
        %1350 = vmatpush1.msra.mxu0 %v1319
        %1351 = vmatprep.subr.mxu0 0.0
        %1352 = vmatpush1.msra.mxu0 %v1321
        %1353 = vmatprep.subr.mxu0 0.0
        %1354 = vmatpush1.msra.mxu0 %v1323
        %1355 = vmatprep.subr.mxu0 0.0
        %1356 = vmatpush1.msra.mxu0 %v1325
        %1357 = vmatprep.subr.mxu0 0.0
        %1358 = vmatpush1.msra.mxu0 %v1327
        %1359 = vmatprep.subr.mxu0 0.0
        %1360 = vmatpush1.msra.mxu0 %v1329
        %1361 = vmatprep.subr.mxu0 0.0
        %1362 = vmatpush1.msra.mxu0 %v1331
        %1363 = vmatprep.subr.mxu0 0.0
        %1364 = vmatpush1.msra.mxu0 %v1333
        %1365 = vmatprep.subr.mxu0 0.0
        %1366 = vmatpush1.msra.mxu0 0.0
        %1367 = vmatprep.subr.mxu0 0.0
        %1368 = vmatpush1.msra.mxu0 0.0
        %1369 = vmatprep.subr.mxu0 0.0
        %1370 = vmatpush1.msra.mxu0 0.0
        %1371 = vmatprep.subr.mxu0 0.0
        %1372 = vmatpush1.msra.mxu0 0.0
        %1373 = vmatprep.subr.mxu0 0.0
        %1374 = vmatpush1.msra.mxu0 0.0
        %1375 = vmatprep.subr.mxu0 0.0
        %1376 = vmatpush1.msra.mxu0 0.0
        %1377 = vmatprep.subr.mxu0 0.0
        %1378 = vmatpush1.msra.mxu0 0.0
        %1379 = vmatprep.subr.mxu0 0.0
        %1380 = vmatpush1.msra.mxu0 0.0
        %1381 = vmatprep.subr.mxu0 0.0
        %1382 = vmatpush1.msra.mxu0 0.0
        %1383 = vmatprep.subr.mxu0 0.0
        %1384 = vmatpush1.msra.mxu0 0.0
        %1385 = vmatprep.subr.mxu0 0.0
        %1386 = vmatpush1.msra.mxu0 0.0
        %1387 = vmatprep.subr.mxu0 0.0
        %1388 = vmatpush1.msra.mxu0 0.0
        %1389 = vmatprep.subr.mxu0 0.0
        %1390 = vmatpush1.msra.mxu0 0.0
        %1391 = vmatprep.subr.mxu0 0.0
        %1392 = vmatpush1.msra.mxu0 0.0
        %1393 = vmatprep.subr.mxu0 0.0
        %1394 = vmatpush1.msra.mxu0 0.0
        %1395 = vmatprep.subr.mxu0 0.0
        %1396 = vmatpush1.msra.mxu0 0.0
        %1397 = vmatprep.subr.mxu0 0.0
        %1398 = vmatpush1.msra.mxu0 0.0
        %1399 = vmatprep.subr.mxu0 0.0
        %1400 = vmatpush1.msra.mxu0 0.0
        %1401 = vmatprep.subr.mxu0 0.0
        %1402 = vmatpush1.msra.mxu0 0.0
        %1403 = vmatprep.subr.mxu0 0.0
        %1404 = vmatpush1.msra.mxu0 0.0
        %1405 = vmatprep.subr.mxu0 0.0
        %1406 = vmatpush1.msra.mxu0 0.0
        %1407 = vmatprep.subr.mxu0 0.0
        %1408 = vmatpush1.msra.mxu0 0.0
        %1409 = vmatprep.subr.mxu0 0.0
        %1410 = vmatpush1.msra.mxu0 0.0
        %1411 = vmatprep.subr.mxu0 0.0
        %1412 = vmatpush1.msra.mxu0 0.0
        %1413 = vmatprep.mubr.f32.mxu0 0.0
        %1414 = vmatmul.mubr.f32.gmra.mrb[0].mxu0 %v1347
        %v1415 = vpop.f32.mrb[0].mxu0
        %v1416 = vadd.f32 %v1344, %v1415
        %v1417 = vpop.f32.mrb[0].mxu0
        %1418 = vdwg.mxu0
        %v1419 = vadd.f32 %v532, %v1416
        %v1420 = vsel %vm559, %v1419, 0.0
        %1421 = vadd.xlane.f32.xlu0 %v1420
        %v1422 = vpop.xlane.xlu0 %1421
        %v1423 = vrcp.pop 64.0
        %v1424 = vmul.f32 %v1422, %v1423
        %v1425 = vsub.f32 %v1419, %v1424
        %v1426 = vmul.f32 %v1425, %v1425
        %v1427 = vsel %vm559, %v1426, 0.0
        %1428 = vadd.xlane.f32.xlu0 %v1427
        %v1429 = vpop.xlane.xlu0 %1428
        %v1430 = vmul.f32 %v1429, %v1423
        %v1431 = vadd.f32 %v1430, 1e-05
        %v1432 = vrsqrt.pop %v1431
        %v1433 = vmul.f32 %v1425, %v1432
        %v1434 = vlaneseq
        %v1435 = vshrl.u32 %v1434, 7
        %v1436 = vsub.s32 1, %v1435
        %v1437 = vrot.slane %v549, %v1436
        %v1438 = vmul.f32 %v1433, %v1437
        %1440 = vrot.lane.b32.xlu0 %v1437, 64
        %v1441 = vpop.permute.xlu0 %1440
        %v1443 = vadd.f32 %v1438, %v1441
        %s1444 = sshra.s32 %s21, 1
        %s1445 = sand.u32 %s21, 1
        %s1446 = sshra.s32 %s21, 1
        %s1447 = sand.u32 %s21, 1
        %s1448 = smul.u32 %s1444, 16
        %s1449 = smul.u32 %s1448, 2
        %s1450 = sadd.s32 %s1449, %s1447
        %s1451 = scalar_lea.vmem [#allocation5], %s1450
        %v1452 = vld [vmem:[%s1451] ss:$2 sm:$0xff]
        %s1453 = sadd.s32 %s1448, 8
        %s1454 = smul.u32 %s1453, 2
        %s1455 = sadd.s32 %s1454, %s1447
        %s1456 = scalar_lea.vmem [#allocation5], %s1455
        %v1457 = vld [vmem:[%s1456] ss:$2 sm:$0xff]
        %v1458 = vpack.c.bf16 %v1443, %v1443
        %v1459 = vld [vmem:[%s391] sm:$0xff]
        %v1460 = vld [vmem:[%s391 + $0x8] sm:$0xff]
        %v1461 = vld [vmem:[%s391 + $0x10] sm:$0xff]
        %v1462 = vld [vmem:[%s391 + $0x18] sm:$0xff]
        %v1463 = vld [vmem:[%s391 + $0x20] sm:$0xff]
        %v1464 = vld [vmem:[%s391 + $0x28] sm:$0xff]
        %v1465 = vld [vmem:[%s391 + $0x30] sm:$0xff]
        %v1466 = vld [vmem:[%s391 + $0x38] sm:$0xff]
        %v1467 = vld [vmem:[%s391 + $0x40] sm:$0xff]
        %v1468 = vld [vmem:[%s391 + $0x48] sm:$0xff]
        %v1469 = vld [vmem:[%s391 + $0x50] sm:$0xff]
        %v1470 = vld [vmem:[%s391 + $0x58] sm:$0xff]
        %v1471 = vld [vmem:[%s391 + $0x60] sm:$0xff]
        %v1472 = vld [vmem:[%s391 + $0x68] sm:$0xff]
        %v1473 = vld [vmem:[%s391 + $0x70] sm:$0xff]
        %v1474 = vld [vmem:[%s391 + $0x78] sm:$0xff]
        %v1475 = vld [vmem:[%s391 + $0x80] sm:$0xff]
        %v1476 = vld [vmem:[%s391 + $0x88] sm:$0xff]
        %v1477 = vld [vmem:[%s391 + $0x90] sm:$0xff]
        %v1478 = vld [vmem:[%s391 + $0x98] sm:$0xff]
        %v1479 = vld [vmem:[%s391 + $0xa0] sm:$0xff]
        %v1480 = vld [vmem:[%s391 + $0xa8] sm:$0xff]
        %v1481 = vld [vmem:[%s391 + $0xb0] sm:$0xff]
        %v1482 = vld [vmem:[%s391 + $0xb8] sm:$0xff]
        %v1483 = vld [vmem:[%s391 + $0xc0] sm:$0xff]
        %v1484 = vld [vmem:[%s391 + $0xc8] sm:$0xff]
        %v1485 = vld [vmem:[%s391 + $0xd0] sm:$0xff]
        %v1486 = vld [vmem:[%s391 + $0xd8] sm:$0xff]
        %v1487 = vld [vmem:[%s391 + $0xe0] sm:$0xff]
        %v1488 = vld [vmem:[%s391 + $0xe8] sm:$0xff]
        %v1489 = vld [vmem:[%s391 + $0xf0] sm:$0xff]
        %v1490 = vld [vmem:[%s391 + $0xf8] sm:$0xff]
        %v1491 = vld [vmem:[%s391 + $0x100] sm:$0xff]
        %v1492 = vld [vmem:[%s391 + $0x108] sm:$0xff]
        %v1493 = vld [vmem:[%s391 + $0x110] sm:$0xff]
        %v1494 = vld [vmem:[%s391 + $0x118] sm:$0xff]
        %v1495 = vld [vmem:[%s391 + $0x120] sm:$0xff]
        %v1496 = vld [vmem:[%s391 + $0x128] sm:$0xff]
        %v1497 = vld [vmem:[%s391 + $0x130] sm:$0xff]
        %v1498 = vld [vmem:[%s391 + $0x138] sm:$0xff]
        %v1499 = vld [vmem:[%s391 + $0x140] sm:$0xff]
        %v1500 = vld [vmem:[%s391 + $0x148] sm:$0xff]
        %v1501 = vld [vmem:[%s391 + $0x150] sm:$0xff]
        %v1502 = vld [vmem:[%s391 + $0x158] sm:$0xff]
        %v1503 = vld [vmem:[%s391 + $0x160] sm:$0xff]
        %v1504 = vld [vmem:[%s391 + $0x168] sm:$0xff]
        %v1505 = vld [vmem:[%s391 + $0x170] sm:$0xff]
        %v1506 = vld [vmem:[%s391 + $0x178] sm:$0xff]
        %v1507 = vld [vmem:[%s391 + $0x180] sm:$0xff]
        %v1508 = vld [vmem:[%s391 + $0x188] sm:$0xff]
        %v1509 = vld [vmem:[%s391 + $0x190] sm:$0xff]
        %v1510 = vld [vmem:[%s391 + $0x198] sm:$0xff]
        %v1511 = vld [vmem:[%s391 + $0x1a0] sm:$0xff]
        %v1512 = vld [vmem:[%s391 + $0x1a8] sm:$0xff]
        %v1513 = vld [vmem:[%s391 + $0x1b0] sm:$0xff]
        %v1514 = vld [vmem:[%s391 + $0x1b8] sm:$0xff]
        %v1515 = vld [vmem:[%s391 + $0x1c0] sm:$0xff]
        %v1516 = vld [vmem:[%s391 + $0x1c8] sm:$0xff]
        %v1517 = vld [vmem:[%s391 + $0x1d0] sm:$0xff]
        %v1518 = vld [vmem:[%s391 + $0x1d8] sm:$0xff]
        %v1519 = vld [vmem:[%s391 + $0x1e0] sm:$0xff]
        %v1520 = vld [vmem:[%s391 + $0x1e8] sm:$0xff]
        %v1521 = vld [vmem:[%s391 + $0x1f0] sm:$0xff]
        %v1522 = vld [vmem:[%s391 + $0x1f8] sm:$0xff]
        %v1525 = vlaneseq
        %v1526 = vshrl.u32 %v1525, 7
        %v1527 = vsub.s32 0, %v1526
        %v1528 = vrot.slane %v1452, %v1527
        %v1529 = vlaneseq
        %v1530 = vshrl.u32 %v1529, 7
        %v1531 = vsub.s32 1, %v1530
        %v1532 = vrot.slane %v1452, %v1531
        %v1533 = vlaneseq
        %v1534 = vshrl.u32 %v1533, 7
        %v1535 = vsub.s32 2, %v1534
        %v1536 = vrot.slane %v1452, %v1535
        %v1537 = vlaneseq
        %v1538 = vshrl.u32 %v1537, 7
        %v1539 = vsub.s32 3, %v1538
        %v1540 = vrot.slane %v1452, %v1539
        %v1541 = vlaneseq
        %v1542 = vshrl.u32 %v1541, 7
        %v1543 = vsub.s32 4, %v1542
        %v1544 = vrot.slane %v1452, %v1543
        %v1545 = vlaneseq
        %v1546 = vshrl.u32 %v1545, 7
        %v1547 = vsub.s32 5, %v1546
        %v1548 = vrot.slane %v1452, %v1547
        %v1549 = vlaneseq
        %v1550 = vshrl.u32 %v1549, 7
        %v1551 = vsub.s32 6, %v1550
        %v1552 = vrot.slane %v1452, %v1551
        %v1553 = vlaneseq
        %v1554 = vshrl.u32 %v1553, 7
        %v1555 = vsub.s32 7, %v1554
        %v1556 = vrot.slane %v1452, %v1555
        %v1557 = vlaneseq
        %v1558 = vshrl.u32 %v1557, 7
        %v1559 = vsub.s32 0, %v1558
        %v1560 = vrot.slane %v1457, %v1559
        %v1561 = vlaneseq
        %v1562 = vshrl.u32 %v1561, 7
        %v1563 = vsub.s32 1, %v1562
        %v1564 = vrot.slane %v1457, %v1563
        %v1565 = vlaneseq
        %v1566 = vshrl.u32 %v1565, 7
        %v1567 = vsub.s32 2, %v1566
        %v1568 = vrot.slane %v1457, %v1567
        %v1569 = vlaneseq
        %v1570 = vshrl.u32 %v1569, 7
        %v1571 = vsub.s32 3, %v1570
        %v1572 = vrot.slane %v1457, %v1571
        %v1573 = vlaneseq
        %v1574 = vshrl.u32 %v1573, 7
        %v1575 = vsub.s32 4, %v1574
        %v1576 = vrot.slane %v1457, %v1575
        %v1577 = vlaneseq
        %v1578 = vshrl.u32 %v1577, 7
        %v1579 = vsub.s32 5, %v1578
        %v1580 = vrot.slane %v1457, %v1579
        %v1581 = vlaneseq
        %v1582 = vshrl.u32 %v1581, 7
        %v1583 = vsub.s32 6, %v1582
        %v1584 = vrot.slane %v1457, %v1583
        %v1585 = vlaneseq
        %v1586 = vshrl.u32 %v1585, 7
        %v1587 = vsub.s32 7, %v1586
        %v1588 = vrot.slane %v1457, %v1587
        %v1669 = vunpack.c.l.b16 %v1459
        %v1670 = vunpack.c.h.b16 %v1459
        %v1671 = vunpack.c.l.b16 %v1460
        %v1672 = vunpack.c.h.b16 %v1460
        %v1673 = vunpack.c.l.b16 %v1461
        %v1674 = vunpack.c.h.b16 %v1461
        %v1675 = vunpack.c.l.b16 %v1462
        %v1676 = vunpack.c.h.b16 %v1462
        %v1677 = vunpack.c.l.b16 %v1463
        %v1678 = vunpack.c.h.b16 %v1463
        %v1679 = vunpack.c.l.b16 %v1464
        %v1680 = vunpack.c.h.b16 %v1464
        %v1681 = vunpack.c.l.b16 %v1465
        %v1682 = vunpack.c.h.b16 %v1465
        %v1683 = vunpack.c.l.b16 %v1466
        %v1684 = vunpack.c.h.b16 %v1466
        %v1685 = vunpack.c.l.b16 %v1467
        %v1686 = vunpack.c.h.b16 %v1467
        %v1687 = vunpack.c.l.b16 %v1468
        %v1688 = vunpack.c.h.b16 %v1468
        %v1689 = vunpack.c.l.b16 %v1469
        %v1690 = vunpack.c.h.b16 %v1469
        %v1691 = vunpack.c.l.b16 %v1470
        %v1692 = vunpack.c.h.b16 %v1470
        %v1693 = vunpack.c.l.b16 %v1471
        %v1694 = vunpack.c.h.b16 %v1471
        %v1695 = vunpack.c.l.b16 %v1472
        %v1696 = vunpack.c.h.b16 %v1472
        %v1697 = vunpack.c.l.b16 %v1473
        %v1698 = vunpack.c.h.b16 %v1473
        %v1699 = vunpack.c.l.b16 %v1474
        %v1700 = vunpack.c.h.b16 %v1474
        %v1701 = vunpack.c.l.b16 %v1475
        %v1702 = vunpack.c.h.b16 %v1475
        %v1703 = vunpack.c.l.b16 %v1476
        %v1704 = vunpack.c.h.b16 %v1476
        %v1705 = vunpack.c.l.b16 %v1477
        %v1706 = vunpack.c.h.b16 %v1477
        %v1707 = vunpack.c.l.b16 %v1478
        %v1708 = vunpack.c.h.b16 %v1478
        %v1709 = vunpack.c.l.b16 %v1479
        %v1710 = vunpack.c.h.b16 %v1479
        %v1711 = vunpack.c.l.b16 %v1480
        %v1712 = vunpack.c.h.b16 %v1480
        %v1713 = vunpack.c.l.b16 %v1481
        %v1714 = vunpack.c.h.b16 %v1481
        %v1715 = vunpack.c.l.b16 %v1482
        %v1716 = vunpack.c.h.b16 %v1482
        %v1717 = vunpack.c.l.b16 %v1483
        %v1718 = vunpack.c.h.b16 %v1483
        %v1719 = vunpack.c.l.b16 %v1484
        %v1720 = vunpack.c.h.b16 %v1484
        %v1721 = vunpack.c.l.b16 %v1485
        %v1722 = vunpack.c.h.b16 %v1485
        %v1723 = vunpack.c.l.b16 %v1486
        %v1724 = vunpack.c.h.b16 %v1486
        %v1725 = vunpack.c.l.b16 %v1487
        %v1726 = vunpack.c.h.b16 %v1487
        %v1727 = vunpack.c.l.b16 %v1488
        %v1728 = vunpack.c.h.b16 %v1488
        %v1729 = vunpack.c.l.b16 %v1489
        %v1730 = vunpack.c.h.b16 %v1489
        %v1731 = vunpack.c.l.b16 %v1490
        %v1732 = vunpack.c.h.b16 %v1490
        %v1733 = vunpack.c.l.b16 %v1491
        %v1734 = vunpack.c.h.b16 %v1491
        %v1735 = vunpack.c.l.b16 %v1492
        %v1736 = vunpack.c.h.b16 %v1492
        %v1737 = vunpack.c.l.b16 %v1493
        %v1738 = vunpack.c.h.b16 %v1493
        %v1739 = vunpack.c.l.b16 %v1494
        %v1740 = vunpack.c.h.b16 %v1494
        %v1741 = vunpack.c.l.b16 %v1495
        %v1742 = vunpack.c.h.b16 %v1495
        %v1743 = vunpack.c.l.b16 %v1496
        %v1744 = vunpack.c.h.b16 %v1496
        %v1745 = vunpack.c.l.b16 %v1497
        %v1746 = vunpack.c.h.b16 %v1497
        %v1747 = vunpack.c.l.b16 %v1498
        %v1748 = vunpack.c.h.b16 %v1498
        %v1749 = vunpack.c.l.b16 %v1499
        %v1750 = vunpack.c.h.b16 %v1499
        %v1751 = vunpack.c.l.b16 %v1500
        %v1752 = vunpack.c.h.b16 %v1500
        %v1753 = vunpack.c.l.b16 %v1501
        %v1754 = vunpack.c.h.b16 %v1501
        %v1755 = vunpack.c.l.b16 %v1502
        %v1756 = vunpack.c.h.b16 %v1502
        %v1757 = vunpack.c.l.b16 %v1503
        %v1758 = vunpack.c.h.b16 %v1503
        %v1759 = vunpack.c.l.b16 %v1504
        %v1760 = vunpack.c.h.b16 %v1504
        %v1761 = vunpack.c.l.b16 %v1505
        %v1762 = vunpack.c.h.b16 %v1505
        %v1763 = vunpack.c.l.b16 %v1506
        %v1764 = vunpack.c.h.b16 %v1506
        %v1765 = vunpack.c.l.b16 %v1507
        %v1766 = vunpack.c.h.b16 %v1507
        %v1767 = vunpack.c.l.b16 %v1508
        %v1768 = vunpack.c.h.b16 %v1508
        %v1769 = vunpack.c.l.b16 %v1509
        %v1770 = vunpack.c.h.b16 %v1509
        %v1771 = vunpack.c.l.b16 %v1510
        %v1772 = vunpack.c.h.b16 %v1510
        %v1773 = vunpack.c.l.b16 %v1511
        %v1774 = vunpack.c.h.b16 %v1511
        %v1775 = vunpack.c.l.b16 %v1512
        %v1776 = vunpack.c.h.b16 %v1512
        %v1777 = vunpack.c.l.b16 %v1513
        %v1778 = vunpack.c.h.b16 %v1513
        %v1779 = vunpack.c.l.b16 %v1514
        %v1780 = vunpack.c.h.b16 %v1514
        %v1781 = vunpack.c.l.b16 %v1515
        %v1782 = vunpack.c.h.b16 %v1515
        %v1783 = vunpack.c.l.b16 %v1516
        %v1784 = vunpack.c.h.b16 %v1516
        %v1785 = vunpack.c.l.b16 %v1517
        %v1786 = vunpack.c.h.b16 %v1517
        %v1787 = vunpack.c.l.b16 %v1518
        %v1788 = vunpack.c.h.b16 %v1518
        %v1789 = vunpack.c.l.b16 %v1519
        %v1790 = vunpack.c.h.b16 %v1519
        %v1791 = vunpack.c.l.b16 %v1520
        %v1792 = vunpack.c.h.b16 %v1520
        %v1793 = vunpack.c.l.b16 %v1521
        %v1794 = vunpack.c.h.b16 %v1521
        %v1795 = vunpack.c.l.b16 %v1522
        %v1796 = vunpack.c.h.b16 %v1522
        %v1797 = vpack.c.b16 %v1685, %v1669
        %v1798 = vpack.c.b16 %v1686, %v1670
        %v1799 = vpack.c.b16 %v1687, %v1671
        %v1800 = vpack.c.b16 %v1688, %v1672
        %v1801 = vpack.c.b16 %v1689, %v1673
        %v1802 = vpack.c.b16 %v1690, %v1674
        %v1803 = vpack.c.b16 %v1691, %v1675
        %v1804 = vpack.c.b16 %v1692, %v1676
        %v1805 = vpack.c.b16 %v1693, %v1677
        %v1806 = vpack.c.b16 %v1694, %v1678
        %v1807 = vpack.c.b16 %v1695, %v1679
        %v1808 = vpack.c.b16 %v1696, %v1680
        %v1809 = vpack.c.b16 %v1697, %v1681
        %v1810 = vpack.c.b16 %v1698, %v1682
        %v1811 = vpack.c.b16 %v1699, %v1683
        %v1812 = vpack.c.b16 %v1700, %v1684
        %v1813 = vpack.c.b16 %v1717, %v1701
        %v1814 = vpack.c.b16 %v1718, %v1702
        %v1815 = vpack.c.b16 %v1719, %v1703
        %v1816 = vpack.c.b16 %v1720, %v1704
        %v1817 = vpack.c.b16 %v1721, %v1705
        %v1818 = vpack.c.b16 %v1722, %v1706
        %v1819 = vpack.c.b16 %v1723, %v1707
        %v1820 = vpack.c.b16 %v1724, %v1708
        %v1821 = vpack.c.b16 %v1725, %v1709
        %v1822 = vpack.c.b16 %v1726, %v1710
        %v1823 = vpack.c.b16 %v1727, %v1711
        %v1824 = vpack.c.b16 %v1728, %v1712
        %v1825 = vpack.c.b16 %v1729, %v1713
        %v1826 = vpack.c.b16 %v1730, %v1714
        %v1827 = vpack.c.b16 %v1731, %v1715
        %v1828 = vpack.c.b16 %v1732, %v1716
        %v1829 = vpack.c.b16 %v1749, %v1733
        %v1830 = vpack.c.b16 %v1750, %v1734
        %v1831 = vpack.c.b16 %v1751, %v1735
        %v1832 = vpack.c.b16 %v1752, %v1736
        %v1833 = vpack.c.b16 %v1753, %v1737
        %v1834 = vpack.c.b16 %v1754, %v1738
        %v1835 = vpack.c.b16 %v1755, %v1739
        %v1836 = vpack.c.b16 %v1756, %v1740
        %v1837 = vpack.c.b16 %v1757, %v1741
        %v1838 = vpack.c.b16 %v1758, %v1742
        %v1839 = vpack.c.b16 %v1759, %v1743
        %v1840 = vpack.c.b16 %v1760, %v1744
        %v1841 = vpack.c.b16 %v1761, %v1745
        %v1842 = vpack.c.b16 %v1762, %v1746
        %v1843 = vpack.c.b16 %v1763, %v1747
        %v1844 = vpack.c.b16 %v1764, %v1748
        %v1845 = vpack.c.b16 %v1781, %v1765
        %v1846 = vpack.c.b16 %v1782, %v1766
        %v1847 = vpack.c.b16 %v1783, %v1767
        %v1848 = vpack.c.b16 %v1784, %v1768
        %v1849 = vpack.c.b16 %v1785, %v1769
        %v1850 = vpack.c.b16 %v1786, %v1770
        %v1851 = vpack.c.b16 %v1787, %v1771
        %v1852 = vpack.c.b16 %v1788, %v1772
        %v1853 = vpack.c.b16 %v1789, %v1773
        %v1854 = vpack.c.b16 %v1790, %v1774
        %v1855 = vpack.c.b16 %v1791, %v1775
        %v1856 = vpack.c.b16 %v1792, %v1776
        %v1857 = vpack.c.b16 %v1793, %v1777
        %v1858 = vpack.c.b16 %v1794, %v1778
        %v1859 = vpack.c.b16 %v1795, %v1779
        %v1860 = vpack.c.b16 %v1796, %v1780
        %v1926 = vsel %vm559, %v1458, 0
        %1928 = vmatprep.subr.bf16.mxu0 %v1798
        %1929 = vmatpush1.bf16.msra.mxu0 %v1797
        %1930 = vmatprep.subr.bf16.mxu0 %v1814
        %1931 = vmatpush1.bf16.msra.mxu0 %v1813
        %1932 = vmatprep.subr.bf16.mxu0 %v1830
        %1933 = vmatpush1.bf16.msra.mxu0 %v1829
        %1934 = vmatprep.subr.bf16.mxu0 %v1846
        %1935 = vmatpush1.bf16.msra.mxu0 %v1845
        %1936 = vmatprep.subr.bf16.mxu0 0
        %1937 = vmatpush1.bf16.msra.mxu0 0
        %1938 = vmatprep.subr.bf16.mxu0 0
        %1939 = vmatpush1.bf16.msra.mxu0 0
        %1940 = vmatprep.subr.bf16.mxu0 0
        %1941 = vmatpush1.bf16.msra.mxu0 0
        %1942 = vmatprep.subr.bf16.mxu0 0
        %1943 = vmatpush1.bf16.msra.mxu0 0
        %1944 = vmatprep.subr.bf16.mxu0 0
        %1945 = vmatpush1.bf16.msra.mxu0 0
        %1946 = vmatprep.subr.bf16.mxu0 0
        %1947 = vmatpush1.bf16.msra.mxu0 0
        %1948 = vmatprep.subr.bf16.mxu0 0
        %1949 = vmatpush1.bf16.msra.mxu0 0
        %1950 = vmatprep.subr.bf16.mxu0 0
        %1951 = vmatpush1.bf16.msra.mxu0 0
        %1952 = vmatprep.subr.bf16.mxu0 0
        %1953 = vmatpush1.bf16.msra.mxu0 0
        %1954 = vmatprep.subr.bf16.mxu0 0
        %1955 = vmatpush1.bf16.msra.mxu0 0
        %1956 = vmatprep.subr.bf16.mxu0 0
        %1957 = vmatpush1.bf16.msra.mxu0 0
        %1958 = vmatprep.subr.bf16.mxu0 0
        %1959 = vmatpush1.bf16.msra.mxu0 0
        %1960 = vmatprep.mubr.bf16.mxu0 0
        %1961 = vmatmul.mubr.bf16.gmra.mrb[0].mxu0 %v1926
        %v1962 = vpop.f32.mrb[0].mxu0
        %v1963 = vadd.f32 %v1528, %v1962
        %v1964 = vpop.f32.mrb[0].mxu0
        %v1965 = vadd.f32 %v1532, %v1964
        %v1966 = vpop.f32.mrb[0].mxu0
        %v1967 = vpop.f32.mrb[0].mxu0
        %1968 = vdwg.mxu0
        %1969 = vmatprep.subr.bf16.mxu0 %v1800
        %1970 = vmatpush1.bf16.msra.mxu0 %v1799
        %1971 = vmatprep.subr.bf16.mxu0 %v1816
        %1972 = vmatpush1.bf16.msra.mxu0 %v1815
        %1973 = vmatprep.subr.bf16.mxu0 %v1832
        %1974 = vmatpush1.bf16.msra.mxu0 %v1831
        %1975 = vmatprep.subr.bf16.mxu0 %v1848
        %1976 = vmatpush1.bf16.msra.mxu0 %v1847
        %1977 = vmatprep.subr.bf16.mxu0 0
        %1978 = vmatpush1.bf16.msra.mxu0 0
        %1979 = vmatprep.subr.bf16.mxu0 0
        %1980 = vmatpush1.bf16.msra.mxu0 0
        %1981 = vmatprep.subr.bf16.mxu0 0
        %1982 = vmatpush1.bf16.msra.mxu0 0
        %1983 = vmatprep.subr.bf16.mxu0 0
        %1984 = vmatpush1.bf16.msra.mxu0 0
        %1985 = vmatprep.subr.bf16.mxu0 0
        %1986 = vmatpush1.bf16.msra.mxu0 0
        %1987 = vmatprep.subr.bf16.mxu0 0
        %1988 = vmatpush1.bf16.msra.mxu0 0
        %1989 = vmatprep.subr.bf16.mxu0 0
        %1990 = vmatpush1.bf16.msra.mxu0 0
        %1991 = vmatprep.subr.bf16.mxu0 0
        %1992 = vmatpush1.bf16.msra.mxu0 0
        %1993 = vmatprep.subr.bf16.mxu0 0
        %1994 = vmatpush1.bf16.msra.mxu0 0
        %1995 = vmatprep.subr.bf16.mxu0 0
        %1996 = vmatpush1.bf16.msra.mxu0 0
        %1997 = vmatprep.subr.bf16.mxu0 0
        %1998 = vmatpush1.bf16.msra.mxu0 0
        %1999 = vmatprep.subr.bf16.mxu0 0
        %2000 = vmatpush1.bf16.msra.mxu0 0
        %2001 = vmatprep.mubr.bf16.mxu0 0
        %2002 = vmatmul.mubr.bf16.gmra.mrb[0].mxu0 %v1926
        %v2003 = vpop.f32.mrb[0].mxu0
        %v2004 = vadd.f32 %v1536, %v2003
        %v2005 = vpop.f32.mrb[0].mxu0
        %v2006 = vadd.f32 %v1540, %v2005
        %v2007 = vpop.f32.mrb[0].mxu0
        %v2008 = vpop.f32.mrb[0].mxu0
        %2009 = vdwg.mxu0
        %2010 = vmatprep.subr.bf16.mxu0 %v1802
        %2011 = vmatpush1.bf16.msra.mxu0 %v1801
        %2012 = vmatprep.subr.bf16.mxu0 %v1818
        %2013 = vmatpush1.bf16.msra.mxu0 %v1817
        %2014 = vmatprep.subr.bf16.mxu0 %v1834
        %2015 = vmatpush1.bf16.msra.mxu0 %v1833
        %2016 = vmatprep.subr.bf16.mxu0 %v1850
        %2017 = vmatpush1.bf16.msra.mxu0 %v1849
        %2018 = vmatprep.subr.bf16.mxu0 0
        %2019 = vmatpush1.bf16.msra.mxu0 0
        %2020 = vmatprep.subr.bf16.mxu0 0
        %2021 = vmatpush1.bf16.msra.mxu0 0
        %2022 = vmatprep.subr.bf16.mxu0 0
        %2023 = vmatpush1.bf16.msra.mxu0 0
        %2024 = vmatprep.subr.bf16.mxu0 0
        %2025 = vmatpush1.bf16.msra.mxu0 0
        %2026 = vmatprep.subr.bf16.mxu0 0
        %2027 = vmatpush1.bf16.msra.mxu0 0
        %2028 = vmatprep.subr.bf16.mxu0 0
        %2029 = vmatpush1.bf16.msra.mxu0 0
        %2030 = vmatprep.subr.bf16.mxu0 0
        %2031 = vmatpush1.bf16.msra.mxu0 0
        %2032 = vmatprep.subr.bf16.mxu0 0
        %2033 = vmatpush1.bf16.msra.mxu0 0
        %2034 = vmatprep.subr.bf16.mxu0 0
        %2035 = vmatpush1.bf16.msra.mxu0 0
        %2036 = vmatprep.subr.bf16.mxu0 0
        %2037 = vmatpush1.bf16.msra.mxu0 0
        %2038 = vmatprep.subr.bf16.mxu0 0
        %2039 = vmatpush1.bf16.msra.mxu0 0
        %2040 = vmatprep.subr.bf16.mxu0 0
        %2041 = vmatpush1.bf16.msra.mxu0 0
        %2042 = vmatprep.mubr.bf16.mxu0 0
        %2043 = vmatmul.mubr.bf16.gmra.mrb[0].mxu0 %v1926
        %v2044 = vpop.f32.mrb[0].mxu0
        %v2045 = vadd.f32 %v1544, %v2044
        %v2046 = vpop.f32.mrb[0].mxu0
        %v2047 = vadd.f32 %v1548, %v2046
        %v2048 = vpop.f32.mrb[0].mxu0
        %v2049 = vpop.f32.mrb[0].mxu0
        %2050 = vdwg.mxu0
        %2051 = vmatprep.subr.bf16.mxu0 %v1804
        %2052 = vmatpush1.bf16.msra.mxu0 %v1803
        %2053 = vmatprep.subr.bf16.mxu0 %v1820
        %2054 = vmatpush1.bf16.msra.mxu0 %v1819
        %2055 = vmatprep.subr.bf16.mxu0 %v1836
        %2056 = vmatpush1.bf16.msra.mxu0 %v1835
        %2057 = vmatprep.subr.bf16.mxu0 %v1852
        %2058 = vmatpush1.bf16.msra.mxu0 %v1851
        %2059 = vmatprep.subr.bf16.mxu0 0
        %2060 = vmatpush1.bf16.msra.mxu0 0
        %2061 = vmatprep.subr.bf16.mxu0 0
        %2062 = vmatpush1.bf16.msra.mxu0 0
        %2063 = vmatprep.subr.bf16.mxu0 0
        %2064 = vmatpush1.bf16.msra.mxu0 0
        %2065 = vmatprep.subr.bf16.mxu0 0
        %2066 = vmatpush1.bf16.msra.mxu0 0
        %2067 = vmatprep.subr.bf16.mxu0 0
        %2068 = vmatpush1.bf16.msra.mxu0 0
        %2069 = vmatprep.subr.bf16.mxu0 0
        %2070 = vmatpush1.bf16.msra.mxu0 0
        %2071 = vmatprep.subr.bf16.mxu0 0
        %2072 = vmatpush1.bf16.msra.mxu0 0
        %2073 = vmatprep.subr.bf16.mxu0 0
        %2074 = vmatpush1.bf16.msra.mxu0 0
        %2075 = vmatprep.subr.bf16.mxu0 0
        %2076 = vmatpush1.bf16.msra.mxu0 0
        %2077 = vmatprep.subr.bf16.mxu0 0
        %2078 = vmatpush1.bf16.msra.mxu0 0
        %2079 = vmatprep.subr.bf16.mxu0 0
        %2080 = vmatpush1.bf16.msra.mxu0 0
        %2081 = vmatprep.subr.bf16.mxu0 0
        %2082 = vmatpush1.bf16.msra.mxu0 0
        %2083 = vmatprep.mubr.bf16.mxu0 0
        %2084 = vmatmul.mubr.bf16.gmra.mrb[0].mxu0 %v1926
        %v2085 = vpop.f32.mrb[0].mxu0
        %v2086 = vadd.f32 %v1552, %v2085
        %v2087 = vpop.f32.mrb[0].mxu0
        %v2088 = vadd.f32 %v1556, %v2087
        %v2089 = vpop.f32.mrb[0].mxu0
        %v2090 = vpop.f32.mrb[0].mxu0
        %2091 = vdwg.mxu0
        %2092 = vmatprep.subr.bf16.mxu0 %v1806
        %2093 = vmatpush1.bf16.msra.mxu0 %v1805
        %2094 = vmatprep.subr.bf16.mxu0 %v1822
        %2095 = vmatpush1.bf16.msra.mxu0 %v1821
        %2096 = vmatprep.subr.bf16.mxu0 %v1838
        %2097 = vmatpush1.bf16.msra.mxu0 %v1837
        %2098 = vmatprep.subr.bf16.mxu0 %v1854
        %2099 = vmatpush1.bf16.msra.mxu0 %v1853
        %2100 = vmatprep.subr.bf16.mxu0 0
        %2101 = vmatpush1.bf16.msra.mxu0 0
        %2102 = vmatprep.subr.bf16.mxu0 0
        %2103 = vmatpush1.bf16.msra.mxu0 0
        %2104 = vmatprep.subr.bf16.mxu0 0
        %2105 = vmatpush1.bf16.msra.mxu0 0
        %2106 = vmatprep.subr.bf16.mxu0 0
        %2107 = vmatpush1.bf16.msra.mxu0 0
        %2108 = vmatprep.subr.bf16.mxu0 0
        %2109 = vmatpush1.bf16.msra.mxu0 0
        %2110 = vmatprep.subr.bf16.mxu0 0
        %2111 = vmatpush1.bf16.msra.mxu0 0
        %2112 = vmatprep.subr.bf16.mxu0 0
        %2113 = vmatpush1.bf16.msra.mxu0 0
        %2114 = vmatprep.subr.bf16.mxu0 0
        %2115 = vmatpush1.bf16.msra.mxu0 0
        %2116 = vmatprep.subr.bf16.mxu0 0
        %2117 = vmatpush1.bf16.msra.mxu0 0
        %2118 = vmatprep.subr.bf16.mxu0 0
        %2119 = vmatpush1.bf16.msra.mxu0 0
        %2120 = vmatprep.subr.bf16.mxu0 0
        %2121 = vmatpush1.bf16.msra.mxu0 0
        %2122 = vmatprep.subr.bf16.mxu0 0
        %2123 = vmatpush1.bf16.msra.mxu0 0
        %2124 = vmatprep.mubr.bf16.mxu0 0
        %2125 = vmatmul.mubr.bf16.gmra.mrb[0].mxu0 %v1926
        %v2126 = vpop.f32.mrb[0].mxu0
        %v2127 = vadd.f32 %v1560, %v2126
        %v2128 = vpop.f32.mrb[0].mxu0
        %v2129 = vadd.f32 %v1564, %v2128
        %v2130 = vpop.f32.mrb[0].mxu0
        %v2131 = vpop.f32.mrb[0].mxu0
        %2132 = vdwg.mxu0
        %2133 = vmatprep.subr.bf16.mxu0 %v1808
        %2134 = vmatpush1.bf16.msra.mxu0 %v1807
        %2135 = vmatprep.subr.bf16.mxu0 %v1824
        %2136 = vmatpush1.bf16.msra.mxu0 %v1823
        %2137 = vmatprep.subr.bf16.mxu0 %v1840
        %2138 = vmatpush1.bf16.msra.mxu0 %v1839
        %2139 = vmatprep.subr.bf16.mxu0 %v1856
        %2140 = vmatpush1.bf16.msra.mxu0 %v1855
        %2141 = vmatprep.subr.bf16.mxu0 0
        %2142 = vmatpush1.bf16.msra.mxu0 0
        %2143 = vmatprep.subr.bf16.mxu0 0
        %2144 = vmatpush1.bf16.msra.mxu0 0
        %2145 = vmatprep.subr.bf16.mxu0 0
        %2146 = vmatpush1.bf16.msra.mxu0 0
        %2147 = vmatprep.subr.bf16.mxu0 0
        %2148 = vmatpush1.bf16.msra.mxu0 0
        %2149 = vmatprep.subr.bf16.mxu0 0
        %2150 = vmatpush1.bf16.msra.mxu0 0
        %2151 = vmatprep.subr.bf16.mxu0 0
        %2152 = vmatpush1.bf16.msra.mxu0 0
        %2153 = vmatprep.subr.bf16.mxu0 0
        %2154 = vmatpush1.bf16.msra.mxu0 0
        %2155 = vmatprep.subr.bf16.mxu0 0
        %2156 = vmatpush1.bf16.msra.mxu0 0
        %2157 = vmatprep.subr.bf16.mxu0 0
        %2158 = vmatpush1.bf16.msra.mxu0 0
        %2159 = vmatprep.subr.bf16.mxu0 0
        %2160 = vmatpush1.bf16.msra.mxu0 0
        %2161 = vmatprep.subr.bf16.mxu0 0
        %2162 = vmatpush1.bf16.msra.mxu0 0
        %2163 = vmatprep.subr.bf16.mxu0 0
        %2164 = vmatpush1.bf16.msra.mxu0 0
        %2165 = vmatprep.mubr.bf16.mxu0 0
        %2166 = vmatmul.mubr.bf16.gmra.mrb[0].mxu0 %v1926
        %v2167 = vpop.f32.mrb[0].mxu0
        %v2168 = vadd.f32 %v1568, %v2167
        %v2169 = vpop.f32.mrb[0].mxu0
        %v2170 = vadd.f32 %v1572, %v2169
        %v2171 = vpop.f32.mrb[0].mxu0
        %v2172 = vpop.f32.mrb[0].mxu0
        %2173 = vdwg.mxu0
        %2174 = vmatprep.subr.bf16.mxu0 %v1810
        %2175 = vmatpush1.bf16.msra.mxu0 %v1809
        %2176 = vmatprep.subr.bf16.mxu0 %v1826
        %2177 = vmatpush1.bf16.msra.mxu0 %v1825
        %2178 = vmatprep.subr.bf16.mxu0 %v1842
        %2179 = vmatpush1.bf16.msra.mxu0 %v1841
        %2180 = vmatprep.subr.bf16.mxu0 %v1858
        %2181 = vmatpush1.bf16.msra.mxu0 %v1857
        %2182 = vmatprep.subr.bf16.mxu0 0
        %2183 = vmatpush1.bf16.msra.mxu0 0
        %2184 = vmatprep.subr.bf16.mxu0 0
        %2185 = vmatpush1.bf16.msra.mxu0 0
        %2186 = vmatprep.subr.bf16.mxu0 0
        %2187 = vmatpush1.bf16.msra.mxu0 0
        %2188 = vmatprep.subr.bf16.mxu0 0
        %2189 = vmatpush1.bf16.msra.mxu0 0
        %2190 = vmatprep.subr.bf16.mxu0 0
        %2191 = vmatpush1.bf16.msra.mxu0 0
        %2192 = vmatprep.subr.bf16.mxu0 0
        %2193 = vmatpush1.bf16.msra.mxu0 0
        %2194 = vmatprep.subr.bf16.mxu0 0
        %2195 = vmatpush1.bf16.msra.mxu0 0
        %2196 = vmatprep.subr.bf16.mxu0 0
        %2197 = vmatpush1.bf16.msra.mxu0 0
        %2198 = vmatprep.subr.bf16.mxu0 0
        %2199 = vmatpush1.bf16.msra.mxu0 0
        %2200 = vmatprep.subr.bf16.mxu0 0
        %2201 = vmatpush1.bf16.msra.mxu0 0
        %2202 = vmatprep.subr.bf16.mxu0 0
        %2203 = vmatpush1.bf16.msra.mxu0 0
        %2204 = vmatprep.subr.bf16.mxu0 0
        %2205 = vmatpush1.bf16.msra.mxu0 0
        %2206 = vmatprep.mubr.bf16.mxu0 0
        %2207 = vmatmul.mubr.bf16.gmra.mrb[0].mxu0 %v1926
        %v2208 = vpop.f32.mrb[0].mxu0
        %v2209 = vadd.f32 %v1576, %v2208
        %v2210 = vpop.f32.mrb[0].mxu0
        %v2211 = vadd.f32 %v1580, %v2210
        %v2212 = vpop.f32.mrb[0].mxu0
        %v2213 = vpop.f32.mrb[0].mxu0
        %2214 = vdwg.mxu0
        %2215 = vmatprep.subr.bf16.mxu0 %v1812
        %2216 = vmatpush1.bf16.msra.mxu0 %v1811
        %2217 = vmatprep.subr.bf16.mxu0 %v1828
        %2218 = vmatpush1.bf16.msra.mxu0 %v1827
        %2219 = vmatprep.subr.bf16.mxu0 %v1844
        %2220 = vmatpush1.bf16.msra.mxu0 %v1843
        %2221 = vmatprep.subr.bf16.mxu0 %v1860
        %2222 = vmatpush1.bf16.msra.mxu0 %v1859
        %2223 = vmatprep.subr.bf16.mxu0 0
        %2224 = vmatpush1.bf16.msra.mxu0 0
        %2225 = vmatprep.subr.bf16.mxu0 0
        %2226 = vmatpush1.bf16.msra.mxu0 0
        %2227 = vmatprep.subr.bf16.mxu0 0
        %2228 = vmatpush1.bf16.msra.mxu0 0
        %2229 = vmatprep.subr.bf16.mxu0 0
        %2230 = vmatpush1.bf16.msra.mxu0 0
        %2231 = vmatprep.subr.bf16.mxu0 0
        %2232 = vmatpush1.bf16.msra.mxu0 0
        %2233 = vmatprep.subr.bf16.mxu0 0
        %2234 = vmatpush1.bf16.msra.mxu0 0
        %2235 = vmatprep.subr.bf16.mxu0 0
        %2236 = vmatpush1.bf16.msra.mxu0 0
        %2237 = vmatprep.subr.bf16.mxu0 0
        %2238 = vmatpush1.bf16.msra.mxu0 0
        %2239 = vmatprep.subr.bf16.mxu0 0
        %2240 = vmatpush1.bf16.msra.mxu0 0
        %2241 = vmatprep.subr.bf16.mxu0 0
        %2242 = vmatpush1.bf16.msra.mxu0 0
        %2243 = vmatprep.subr.bf16.mxu0 0
        %2244 = vmatpush1.bf16.msra.mxu0 0
        %2245 = vmatprep.subr.bf16.mxu0 0
        %2246 = vmatpush1.bf16.msra.mxu0 0
        %2247 = vmatprep.mubr.bf16.mxu0 0
        %2248 = vmatmul.mubr.bf16.gmra.mrb[0].mxu0 %v1926
        %v2249 = vpop.f32.mrb[0].mxu0
        %v2250 = vadd.f32 %v1584, %v2249
        %v2251 = vpop.f32.mrb[0].mxu0
        %v2252 = vadd.f32 %v1588, %v2251
        %v2253 = vpop.f32.mrb[0].mxu0
        %v2254 = vpop.f32.mrb[0].mxu0
        %2255 = vdwg.mxu0
        %v2256 = vmax.f32 %v1963, 0.0
        %v2257 = vmax.f32 %v1965, 0.0
        %v2258 = vmax.f32 %v2004, 0.0
        %v2259 = vmax.f32 %v2006, 0.0
        %v2260 = vmax.f32 %v2045, 0.0
        %v2261 = vmax.f32 %v2047, 0.0
        %v2262 = vmax.f32 %v2086, 0.0
        %v2263 = vmax.f32 %v2088, 0.0
        %v2264 = vmax.f32 %v2127, 0.0
        %v2265 = vmax.f32 %v2129, 0.0
        %v2266 = vmax.f32 %v2168, 0.0
        %v2267 = vmax.f32 %v2170, 0.0
        %v2268 = vmax.f32 %v2209, 0.0
        %v2269 = vmax.f32 %v2211, 0.0
        %v2270 = vmax.f32 %v2250, 0.0
        %v2271 = vmax.f32 %v2252, 0.0
        %v2272 = vpack.c.bf16 %v2256, %v2256
        %v2273 = vpack.c.bf16 %v2257, %v2257
        %v2274 = vpack.c.bf16 %v2258, %v2258
        %v2275 = vpack.c.bf16 %v2259, %v2259
        %v2276 = vpack.c.bf16 %v2260, %v2260
        %v2277 = vpack.c.bf16 %v2261, %v2261
        %v2278 = vpack.c.bf16 %v2262, %v2262
        %v2279 = vpack.c.bf16 %v2263, %v2263
        %v2280 = vpack.c.bf16 %v2264, %v2264
        %v2281 = vpack.c.bf16 %v2265, %v2265
        %v2282 = vpack.c.bf16 %v2266, %v2266
        %v2283 = vpack.c.bf16 %v2267, %v2267
        %v2284 = vpack.c.bf16 %v2268, %v2268
        %v2285 = vpack.c.bf16 %v2269, %v2269
        %v2286 = vpack.c.bf16 %v2270, %v2270
        %v2287 = vpack.c.bf16 %v2271, %v2271
        %v2288 = vld [vmem:[%s400] sm:$0xff]
        %v2289 = vld [vmem:[%s400 + $0x8] sm:$0xff]
        %v2290 = vld [vmem:[%s400 + $0x10] sm:$0xff]
        %v2291 = vld [vmem:[%s400 + $0x18] sm:$0xff]
        %v2292 = vld [vmem:[%s400 + $0x20] sm:$0xff]
        %v2293 = vld [vmem:[%s400 + $0x28] sm:$0xff]
        %v2294 = vld [vmem:[%s400 + $0x30] sm:$0xff]
        %v2295 = vld [vmem:[%s400 + $0x38] sm:$0xff]
        %v2296 = vld [vmem:[%s400 + $0x40] sm:$0xff]
        %v2297 = vld [vmem:[%s400 + $0x48] sm:$0xff]
        %v2298 = vld [vmem:[%s400 + $0x50] sm:$0xff]
        %v2299 = vld [vmem:[%s400 + $0x58] sm:$0xff]
        %v2300 = vld [vmem:[%s400 + $0x60] sm:$0xff]
        %v2301 = vld [vmem:[%s400 + $0x68] sm:$0xff]
        %v2302 = vld [vmem:[%s400 + $0x70] sm:$0xff]
        %v2303 = vld [vmem:[%s400 + $0x78] sm:$0xff]
        %v2304 = vld [vmem:[%s400 + $0x80] sm:$0xff]
        %v2305 = vld [vmem:[%s400 + $0x88] sm:$0xff]
        %v2306 = vld [vmem:[%s400 + $0x90] sm:$0xff]
        %v2307 = vld [vmem:[%s400 + $0x98] sm:$0xff]
        %v2308 = vld [vmem:[%s400 + $0xa0] sm:$0xff]
        %v2309 = vld [vmem:[%s400 + $0xa8] sm:$0xff]
        %v2310 = vld [vmem:[%s400 + $0xb0] sm:$0xff]
        %v2311 = vld [vmem:[%s400 + $0xb8] sm:$0xff]
        %v2312 = vld [vmem:[%s400 + $0xc0] sm:$0xff]
        %v2313 = vld [vmem:[%s400 + $0xc8] sm:$0xff]
        %v2314 = vld [vmem:[%s400 + $0xd0] sm:$0xff]
        %v2315 = vld [vmem:[%s400 + $0xd8] sm:$0xff]
        %v2316 = vld [vmem:[%s400 + $0xe0] sm:$0xff]
        %v2317 = vld [vmem:[%s400 + $0xe8] sm:$0xff]
        %v2318 = vld [vmem:[%s400 + $0xf0] sm:$0xff]
        %v2319 = vld [vmem:[%s400 + $0xf8] sm:$0xff]
        %v2320 = vld [vmem:[%s400 + $0x100] sm:$0xff]
        %v2321 = vld [vmem:[%s400 + $0x108] sm:$0xff]
        %v2322 = vld [vmem:[%s400 + $0x110] sm:$0xff]
        %v2323 = vld [vmem:[%s400 + $0x118] sm:$0xff]
        %v2324 = vld [vmem:[%s400 + $0x120] sm:$0xff]
        %v2325 = vld [vmem:[%s400 + $0x128] sm:$0xff]
        %v2326 = vld [vmem:[%s400 + $0x130] sm:$0xff]
        %v2327 = vld [vmem:[%s400 + $0x138] sm:$0xff]
        %v2328 = vld [vmem:[%s400 + $0x140] sm:$0xff]
        %v2329 = vld [vmem:[%s400 + $0x148] sm:$0xff]
        %v2330 = vld [vmem:[%s400 + $0x150] sm:$0xff]
        %v2331 = vld [vmem:[%s400 + $0x158] sm:$0xff]
        %v2332 = vld [vmem:[%s400 + $0x160] sm:$0xff]
        %v2333 = vld [vmem:[%s400 + $0x168] sm:$0xff]
        %v2334 = vld [vmem:[%s400 + $0x170] sm:$0xff]
        %v2335 = vld [vmem:[%s400 + $0x178] sm:$0xff]
        %v2336 = vld [vmem:[%s400 + $0x180] sm:$0xff]
        %v2337 = vld [vmem:[%s400 + $0x188] sm:$0xff]
        %v2338 = vld [vmem:[%s400 + $0x190] sm:$0xff]
        %v2339 = vld [vmem:[%s400 + $0x198] sm:$0xff]
        %v2340 = vld [vmem:[%s400 + $0x1a0] sm:$0xff]
        %v2341 = vld [vmem:[%s400 + $0x1a8] sm:$0xff]
        %v2342 = vld [vmem:[%s400 + $0x1b0] sm:$0xff]
        %v2343 = vld [vmem:[%s400 + $0x1b8] sm:$0xff]
        %v2344 = vld [vmem:[%s400 + $0x1c0] sm:$0xff]
        %v2345 = vld [vmem:[%s400 + $0x1c8] sm:$0xff]
        %v2346 = vld [vmem:[%s400 + $0x1d0] sm:$0xff]
        %v2347 = vld [vmem:[%s400 + $0x1d8] sm:$0xff]
        %v2348 = vld [vmem:[%s400 + $0x1e0] sm:$0xff]
        %v2349 = vld [vmem:[%s400 + $0x1e8] sm:$0xff]
        %v2350 = vld [vmem:[%s400 + $0x1f0] sm:$0xff]
        %v2351 = vld [vmem:[%s400 + $0x1f8] sm:$0xff]
        %v2352 = vlaneseq
        %v2353 = vshrl.u32 %v2352, 7
        %v2354 = vsub.s32 2, %v2353
        %v2355 = vrot.slane %v549, %v2354
        %v2420 = vunpack.c.l.b16 %v2288
        %v2421 = vunpack.c.h.b16 %v2288
        %v2422 = vunpack.c.l.b16 %v2289
        %v2423 = vunpack.c.h.b16 %v2289
        %v2424 = vunpack.c.l.b16 %v2290
        %v2425 = vunpack.c.h.b16 %v2290
        %v2426 = vunpack.c.l.b16 %v2291
        %v2427 = vunpack.c.h.b16 %v2291
        %v2428 = vunpack.c.l.b16 %v2292
        %v2429 = vunpack.c.h.b16 %v2292
        %v2430 = vunpack.c.l.b16 %v2293
        %v2431 = vunpack.c.h.b16 %v2293
        %v2432 = vunpack.c.l.b16 %v2294
        %v2433 = vunpack.c.h.b16 %v2294
        %v2434 = vunpack.c.l.b16 %v2295
        %v2435 = vunpack.c.h.b16 %v2295
        %v2436 = vunpack.c.l.b16 %v2296
        %v2437 = vunpack.c.h.b16 %v2296
        %v2438 = vunpack.c.l.b16 %v2297
        %v2439 = vunpack.c.h.b16 %v2297
        %v2440 = vunpack.c.l.b16 %v2298
        %v2441 = vunpack.c.h.b16 %v2298
        %v2442 = vunpack.c.l.b16 %v2299
        %v2443 = vunpack.c.h.b16 %v2299
        %v2444 = vunpack.c.l.b16 %v2300
        %v2445 = vunpack.c.h.b16 %v2300
        %v2446 = vunpack.c.l.b16 %v2301
        %v2447 = vunpack.c.h.b16 %v2301
        %v2448 = vunpack.c.l.b16 %v2302
        %v2449 = vunpack.c.h.b16 %v2302
        %v2450 = vunpack.c.l.b16 %v2303
        %v2451 = vunpack.c.h.b16 %v2303
        %v2452 = vunpack.c.l.b16 %v2304
        %v2453 = vunpack.c.h.b16 %v2304
        %v2454 = vunpack.c.l.b16 %v2305
        %v2455 = vunpack.c.h.b16 %v2305
        %v2456 = vunpack.c.l.b16 %v2306
        %v2457 = vunpack.c.h.b16 %v2306
        %v2458 = vunpack.c.l.b16 %v2307
        %v2459 = vunpack.c.h.b16 %v2307
        %v2460 = vunpack.c.l.b16 %v2308
        %v2461 = vunpack.c.h.b16 %v2308
        %v2462 = vunpack.c.l.b16 %v2309
        %v2463 = vunpack.c.h.b16 %v2309
        %v2464 = vunpack.c.l.b16 %v2310
        %v2465 = vunpack.c.h.b16 %v2310
        %v2466 = vunpack.c.l.b16 %v2311
        %v2467 = vunpack.c.h.b16 %v2311
        %v2468 = vunpack.c.l.b16 %v2312
        %v2469 = vunpack.c.h.b16 %v2312
        %v2470 = vunpack.c.l.b16 %v2313
        %v2471 = vunpack.c.h.b16 %v2313
        %v2472 = vunpack.c.l.b16 %v2314
        %v2473 = vunpack.c.h.b16 %v2314
        %v2474 = vunpack.c.l.b16 %v2315
        %v2475 = vunpack.c.h.b16 %v2315
        %v2476 = vunpack.c.l.b16 %v2316
        %v2477 = vunpack.c.h.b16 %v2316
        %v2478 = vunpack.c.l.b16 %v2317
        %v2479 = vunpack.c.h.b16 %v2317
        %v2480 = vunpack.c.l.b16 %v2318
        %v2481 = vunpack.c.h.b16 %v2318
        %v2482 = vunpack.c.l.b16 %v2319
        %v2483 = vunpack.c.h.b16 %v2319
        %v2484 = vunpack.c.l.b16 %v2320
        %v2485 = vunpack.c.h.b16 %v2320
        %v2486 = vunpack.c.l.b16 %v2321
        %v2487 = vunpack.c.h.b16 %v2321
        %v2488 = vunpack.c.l.b16 %v2322
        %v2489 = vunpack.c.h.b16 %v2322
        %v2490 = vunpack.c.l.b16 %v2323
        %v2491 = vunpack.c.h.b16 %v2323
        %v2492 = vunpack.c.l.b16 %v2324
        %v2493 = vunpack.c.h.b16 %v2324
        %v2494 = vunpack.c.l.b16 %v2325
        %v2495 = vunpack.c.h.b16 %v2325
        %v2496 = vunpack.c.l.b16 %v2326
        %v2497 = vunpack.c.h.b16 %v2326
        %v2498 = vunpack.c.l.b16 %v2327
        %v2499 = vunpack.c.h.b16 %v2327
        %v2500 = vunpack.c.l.b16 %v2328
        %v2501 = vunpack.c.h.b16 %v2328
        %v2502 = vunpack.c.l.b16 %v2329
        %v2503 = vunpack.c.h.b16 %v2329
        %v2504 = vunpack.c.l.b16 %v2330
        %v2505 = vunpack.c.h.b16 %v2330
        %v2506 = vunpack.c.l.b16 %v2331
        %v2507 = vunpack.c.h.b16 %v2331
        %v2508 = vunpack.c.l.b16 %v2332
        %v2509 = vunpack.c.h.b16 %v2332
        %v2510 = vunpack.c.l.b16 %v2333
        %v2511 = vunpack.c.h.b16 %v2333
        %v2512 = vunpack.c.l.b16 %v2334
        %v2513 = vunpack.c.h.b16 %v2334
        %v2514 = vunpack.c.l.b16 %v2335
        %v2515 = vunpack.c.h.b16 %v2335
        %v2516 = vunpack.c.l.b16 %v2336
        %v2517 = vunpack.c.h.b16 %v2336
        %v2518 = vunpack.c.l.b16 %v2337
        %v2519 = vunpack.c.h.b16 %v2337
        %v2520 = vunpack.c.l.b16 %v2338
        %v2521 = vunpack.c.h.b16 %v2338
        %v2522 = vunpack.c.l.b16 %v2339
        %v2523 = vunpack.c.h.b16 %v2339
        %v2524 = vunpack.c.l.b16 %v2340
        %v2525 = vunpack.c.h.b16 %v2340
        %v2526 = vunpack.c.l.b16 %v2341
        %v2527 = vunpack.c.h.b16 %v2341
        %v2528 = vunpack.c.l.b16 %v2342
        %v2529 = vunpack.c.h.b16 %v2342
        %v2530 = vunpack.c.l.b16 %v2343
        %v2531 = vunpack.c.h.b16 %v2343
        %v2532 = vunpack.c.l.b16 %v2344
        %v2533 = vunpack.c.h.b16 %v2344
        %v2534 = vunpack.c.l.b16 %v2345
        %v2535 = vunpack.c.h.b16 %v2345
        %v2536 = vunpack.c.l.b16 %v2346
        %v2537 = vunpack.c.h.b16 %v2346
        %v2538 = vunpack.c.l.b16 %v2347
        %v2539 = vunpack.c.h.b16 %v2347
        %v2540 = vunpack.c.l.b16 %v2348
        %v2541 = vunpack.c.h.b16 %v2348
        %v2542 = vunpack.c.l.b16 %v2349
        %v2543 = vunpack.c.h.b16 %v2349
        %v2544 = vunpack.c.l.b16 %v2350
        %v2545 = vunpack.c.h.b16 %v2350
        %v2546 = vunpack.c.l.b16 %v2351
        %v2547 = vunpack.c.h.b16 %v2351
        %v2548 = vpack.c.b16 %v2436, %v2420
        %v2549 = vpack.c.b16 %v2437, %v2421
        %v2550 = vpack.c.b16 %v2438, %v2422
        %v2551 = vpack.c.b16 %v2439, %v2423
        %v2552 = vpack.c.b16 %v2440, %v2424
        %v2553 = vpack.c.b16 %v2441, %v2425
        %v2554 = vpack.c.b16 %v2442, %v2426
        %v2555 = vpack.c.b16 %v2443, %v2427
        %v2556 = vpack.c.b16 %v2444, %v2428
        %v2557 = vpack.c.b16 %v2445, %v2429
        %v2558 = vpack.c.b16 %v2446, %v2430
        %v2559 = vpack.c.b16 %v2447, %v2431
        %v2560 = vpack.c.b16 %v2448, %v2432
        %v2561 = vpack.c.b16 %v2449, %v2433
        %v2562 = vpack.c.b16 %v2450, %v2434
        %v2563 = vpack.c.b16 %v2451, %v2435
        %v2564 = vpack.c.b16 %v2468, %v2452
        %v2565 = vpack.c.b16 %v2469, %v2453
        %v2566 = vpack.c.b16 %v2470, %v2454
        %v2567 = vpack.c.b16 %v2471, %v2455
        %v2568 = vpack.c.b16 %v2472, %v2456
        %v2569 = vpack.c.b16 %v2473, %v2457
        %v2570 = vpack.c.b16 %v2474, %v2458
        %v2571 = vpack.c.b16 %v2475, %v2459
        %v2572 = vpack.c.b16 %v2476, %v2460
        %v2573 = vpack.c.b16 %v2477, %v2461
        %v2574 = vpack.c.b16 %v2478, %v2462
        %v2575 = vpack.c.b16 %v2479, %v2463
        %v2576 = vpack.c.b16 %v2480, %v2464
        %v2577 = vpack.c.b16 %v2481, %v2465
        %v2578 = vpack.c.b16 %v2482, %v2466
        %v2579 = vpack.c.b16 %v2483, %v2467
        %v2580 = vpack.c.b16 %v2500, %v2484
        %v2581 = vpack.c.b16 %v2501, %v2485
        %v2582 = vpack.c.b16 %v2502, %v2486
        %v2583 = vpack.c.b16 %v2503, %v2487
        %v2584 = vpack.c.b16 %v2504, %v2488
        %v2585 = vpack.c.b16 %v2505, %v2489
        %v2586 = vpack.c.b16 %v2506, %v2490
        %v2587 = vpack.c.b16 %v2507, %v2491
        %v2588 = vpack.c.b16 %v2508, %v2492
        %v2589 = vpack.c.b16 %v2509, %v2493
        %v2590 = vpack.c.b16 %v2510, %v2494
        %v2591 = vpack.c.b16 %v2511, %v2495
        %v2592 = vpack.c.b16 %v2512, %v2496
        %v2593 = vpack.c.b16 %v2513, %v2497
        %v2594 = vpack.c.b16 %v2514, %v2498
        %v2595 = vpack.c.b16 %v2515, %v2499
        %v2596 = vpack.c.b16 %v2532, %v2516
        %v2597 = vpack.c.b16 %v2533, %v2517
        %v2598 = vpack.c.b16 %v2534, %v2518
        %v2599 = vpack.c.b16 %v2535, %v2519
        %v2600 = vpack.c.b16 %v2536, %v2520
        %v2601 = vpack.c.b16 %v2537, %v2521
        %v2602 = vpack.c.b16 %v2538, %v2522
        %v2603 = vpack.c.b16 %v2539, %v2523
        %v2604 = vpack.c.b16 %v2540, %v2524
        %v2605 = vpack.c.b16 %v2541, %v2525
        %v2606 = vpack.c.b16 %v2542, %v2526
        %v2607 = vpack.c.b16 %v2543, %v2527
        %v2608 = vpack.c.b16 %v2544, %v2528
        %v2609 = vpack.c.b16 %v2545, %v2529
        %v2610 = vpack.c.b16 %v2546, %v2530
        %v2611 = vpack.c.b16 %v2547, %v2531
        %2676 = vmatprep.subr.bf16.mxu0 %v2549
        %2677 = vmatpush1.bf16.xpose.msra.mxu0 %v2548
        %2678 = vmatprep.subr.bf16.mxu0 %v2565
        %2679 = vmatpush1.bf16.xpose.msra.mxu0 %v2564
        %2680 = vmatprep.subr.bf16.mxu0 %v2581
        %2681 = vmatpush1.bf16.xpose.msra.mxu0 %v2580
        %2682 = vmatprep.subr.bf16.mxu0 %v2597
        %2683 = vmatpush1.bf16.xpose.msra.mxu0 %v2596
        %2684 = vmatprep.subr.bf16.mxu0 0
        %2685 = vmatpush1.bf16.xpose.msra.mxu0 0
        %2686 = vmatprep.subr.bf16.mxu0 0
        %2687 = vmatpush1.bf16.xpose.msra.mxu0 0
        %2688 = vmatprep.subr.bf16.mxu0 0
        %2689 = vmatpush1.bf16.xpose.msra.mxu0 0
        %2690 = vmatprep.subr.bf16.mxu0 0
        %2691 = vmatpush1.bf16.xpose.msra.mxu0 0
        %2692 = vmatprep.subr.bf16.mxu0 0
        %2693 = vmatpush1.bf16.xpose.msra.mxu0 0
        %2694 = vmatprep.subr.bf16.mxu0 0
        %2695 = vmatpush1.bf16.xpose.msra.mxu0 0
        %2696 = vmatprep.subr.bf16.mxu0 0
        %2697 = vmatpush1.bf16.xpose.msra.mxu0 0
        %2698 = vmatprep.subr.bf16.mxu0 0
        %2699 = vmatpush1.bf16.xpose.msra.mxu0 0
        %2700 = vmatprep.subr.bf16.mxu0 0
        %2701 = vmatpush1.bf16.xpose.msra.mxu0 0
        %2702 = vmatprep.subr.bf16.mxu0 0
        %2703 = vmatpush1.bf16.xpose.msra.mxu0 0
        %2704 = vmatprep.subr.bf16.mxu0 0
        %2705 = vmatpush1.bf16.xpose.msra.mxu0 0
        %2706 = vmatprep.subr.bf16.mxu0 0
        %2707 = vmatpush1.bf16.xpose.msra.mxu0 0
        %2708 = vmatprep.mubr.bf16.mxu0 %v2273
        %2709 = vmatmul.mubr.bf16.gmra.mrb[0].mxu0 %v2272
        %v2710 = vpop.f32.mrb[0].mxu0
        %v2711 = vadd.f32 %v2355, %v2710
        %v2712 = vpop.f32.mrb[0].mxu0
        %v2713 = vpop.f32.mrb[0].mxu0
        %v2714 = vpop.f32.mrb[0].mxu0
        %2715 = vdwg.mxu0
        %2716 = vmatprep.subr.bf16.mxu0 %v2551
        %2717 = vmatpush1.bf16.xpose.msra.mxu0 %v2550
        %2718 = vmatprep.subr.bf16.mxu0 %v2567
        %2719 = vmatpush1.bf16.xpose.msra.mxu0 %v2566
        %2720 = vmatprep.subr.bf16.mxu0 %v2583
        %2721 = vmatpush1.bf16.xpose.msra.mxu0 %v2582
        %2722 = vmatprep.subr.bf16.mxu0 %v2599
        %2723 = vmatpush1.bf16.xpose.msra.mxu0 %v2598
        %2724 = vmatprep.subr.bf16.mxu0 0
        %2725 = vmatpush1.bf16.xpose.msra.mxu0 0
        %2726 = vmatprep.subr.bf16.mxu0 0
        %2727 = vmatpush1.bf16.xpose.msra.mxu0 0
        %2728 = vmatprep.subr.bf16.mxu0 0
        %2729 = vmatpush1.bf16.xpose.msra.mxu0 0
        %2730 = vmatprep.subr.bf16.mxu0 0
        %2731 = vmatpush1.bf16.xpose.msra.mxu0 0
        %2732 = vmatprep.subr.bf16.mxu0 0
        %2733 = vmatpush1.bf16.xpose.msra.mxu0 0
        %2734 = vmatprep.subr.bf16.mxu0 0
        %2735 = vmatpush1.bf16.xpose.msra.mxu0 0
        %2736 = vmatprep.subr.bf16.mxu0 0
        %2737 = vmatpush1.bf16.xpose.msra.mxu0 0
        %2738 = vmatprep.subr.bf16.mxu0 0
        %2739 = vmatpush1.bf16.xpose.msra.mxu0 0
        %2740 = vmatprep.subr.bf16.mxu0 0
        %2741 = vmatpush1.bf16.xpose.msra.mxu0 0
        %2742 = vmatprep.subr.bf16.mxu0 0
        %2743 = vmatpush1.bf16.xpose.msra.mxu0 0
        %2744 = vmatprep.subr.bf16.mxu0 0
        %2745 = vmatpush1.bf16.xpose.msra.mxu0 0
        %2746 = vmatprep.subr.bf16.mxu0 0
        %2747 = vmatpush1.bf16.xpose.msra.mxu0 0
        %2748 = vmatprep.mubr.bf16.mxu0 %v2275
        %2749 = vmatmul.mubr.bf16.gmra.mrb[0].mxu0 %v2274
        %v2750 = vpop.f32.mrb[0].mxu0
        %v2751 = vadd.f32 %v2711, %v2750
        %v2752 = vpop.f32.mrb[0].mxu0
        %v2753 = vpop.f32.mrb[0].mxu0
        %v2754 = vpop.f32.mrb[0].mxu0
        %2755 = vdwg.mxu0
        %2756 = vmatprep.subr.bf16.mxu0 %v2553
        %2757 = vmatpush1.bf16.xpose.msra.mxu0 %v2552
        %2758 = vmatprep.subr.bf16.mxu0 %v2569
        %2759 = vmatpush1.bf16.xpose.msra.mxu0 %v2568
        %2760 = vmatprep.subr.bf16.mxu0 %v2585
        %2761 = vmatpush1.bf16.xpose.msra.mxu0 %v2584
        %2762 = vmatprep.subr.bf16.mxu0 %v2601
        %2763 = vmatpush1.bf16.xpose.msra.mxu0 %v2600
        %2764 = vmatprep.subr.bf16.mxu0 0
        %2765 = vmatpush1.bf16.xpose.msra.mxu0 0
        %2766 = vmatprep.subr.bf16.mxu0 0
        %2767 = vmatpush1.bf16.xpose.msra.mxu0 0
        %2768 = vmatprep.subr.bf16.mxu0 0
        %2769 = vmatpush1.bf16.xpose.msra.mxu0 0
        %2770 = vmatprep.subr.bf16.mxu0 0
        %2771 = vmatpush1.bf16.xpose.msra.mxu0 0
        %2772 = vmatprep.subr.bf16.mxu0 0
        %2773 = vmatpush1.bf16.xpose.msra.mxu0 0
        %2774 = vmatprep.subr.bf16.mxu0 0
        %2775 = vmatpush1.bf16.xpose.msra.mxu0 0
        %2776 = vmatprep.subr.bf16.mxu0 0
        %2777 = vmatpush1.bf16.xpose.msra.mxu0 0
        %2778 = vmatprep.subr.bf16.mxu0 0
        %2779 = vmatpush1.bf16.xpose.msra.mxu0 0
        %2780 = vmatprep.subr.bf16.mxu0 0
        %2781 = vmatpush1.bf16.xpose.msra.mxu0 0
        %2782 = vmatprep.subr.bf16.mxu0 0
        %2783 = vmatpush1.bf16.xpose.msra.mxu0 0
        %2784 = vmatprep.subr.bf16.mxu0 0
        %2785 = vmatpush1.bf16.xpose.msra.mxu0 0
        %2786 = vmatprep.subr.bf16.mxu0 0
        %2787 = vmatpush1.bf16.xpose.msra.mxu0 0
        %2788 = vmatprep.mubr.bf16.mxu0 %v2277
        %2789 = vmatmul.mubr.bf16.gmra.mrb[0].mxu0 %v2276
        %v2790 = vpop.f32.mrb[0].mxu0
        %v2791 = vadd.f32 %v2751, %v2790
        %v2792 = vpop.f32.mrb[0].mxu0
        %v2793 = vpop.f32.mrb[0].mxu0
        %v2794 = vpop.f32.mrb[0].mxu0
        %2795 = vdwg.mxu0
        %2796 = vmatprep.subr.bf16.mxu0 %v2555
        %2797 = vmatpush1.bf16.xpose.msra.mxu0 %v2554
        %2798 = vmatprep.subr.bf16.mxu0 %v2571
        %2799 = vmatpush1.bf16.xpose.msra.mxu0 %v2570
        %2800 = vmatprep.subr.bf16.mxu0 %v2587
        %2801 = vmatpush1.bf16.xpose.msra.mxu0 %v2586
        %2802 = vmatprep.subr.bf16.mxu0 %v2603
        %2803 = vmatpush1.bf16.xpose.msra.mxu0 %v2602
        %2804 = vmatprep.subr.bf16.mxu0 0
        %2805 = vmatpush1.bf16.xpose.msra.mxu0 0
        %2806 = vmatprep.subr.bf16.mxu0 0
        %2807 = vmatpush1.bf16.xpose.msra.mxu0 0
        %2808 = vmatprep.subr.bf16.mxu0 0
        %2809 = vmatpush1.bf16.xpose.msra.mxu0 0
        %2810 = vmatprep.subr.bf16.mxu0 0
        %2811 = vmatpush1.bf16.xpose.msra.mxu0 0
        %2812 = vmatprep.subr.bf16.mxu0 0
        %2813 = vmatpush1.bf16.xpose.msra.mxu0 0
        %2814 = vmatprep.subr.bf16.mxu0 0
        %2815 = vmatpush1.bf16.xpose.msra.mxu0 0
        %2816 = vmatprep.subr.bf16.mxu0 0
        %2817 = vmatpush1.bf16.xpose.msra.mxu0 0
        %2818 = vmatprep.subr.bf16.mxu0 0
        %2819 = vmatpush1.bf16.xpose.msra.mxu0 0
        %2820 = vmatprep.subr.bf16.mxu0 0
        %2821 = vmatpush1.bf16.xpose.msra.mxu0 0
        %2822 = vmatprep.subr.bf16.mxu0 0
        %2823 = vmatpush1.bf16.xpose.msra.mxu0 0
        %2824 = vmatprep.subr.bf16.mxu0 0
        %2825 = vmatpush1.bf16.xpose.msra.mxu0 0
        %2826 = vmatprep.subr.bf16.mxu0 0
        %2827 = vmatpush1.bf16.xpose.msra.mxu0 0
        %2828 = vmatprep.mubr.bf16.mxu0 %v2279
        %2829 = vmatmul.mubr.bf16.gmra.mrb[0].mxu0 %v2278
        %v2830 = vpop.f32.mrb[0].mxu0
        %v2831 = vadd.f32 %v2791, %v2830
        %v2832 = vpop.f32.mrb[0].mxu0
        %v2833 = vpop.f32.mrb[0].mxu0
        %v2834 = vpop.f32.mrb[0].mxu0
        %2835 = vdwg.mxu0
        %2836 = vmatprep.subr.bf16.mxu0 %v2557
        %2837 = vmatpush1.bf16.xpose.msra.mxu0 %v2556
        %2838 = vmatprep.subr.bf16.mxu0 %v2573
        %2839 = vmatpush1.bf16.xpose.msra.mxu0 %v2572
        %2840 = vmatprep.subr.bf16.mxu0 %v2589
        %2841 = vmatpush1.bf16.xpose.msra.mxu0 %v2588
        %2842 = vmatprep.subr.bf16.mxu0 %v2605
        %2843 = vmatpush1.bf16.xpose.msra.mxu0 %v2604
        %2844 = vmatprep.subr.bf16.mxu0 0
        %2845 = vmatpush1.bf16.xpose.msra.mxu0 0
        %2846 = vmatprep.subr.bf16.mxu0 0
        %2847 = vmatpush1.bf16.xpose.msra.mxu0 0
        %2848 = vmatprep.subr.bf16.mxu0 0
        %2849 = vmatpush1.bf16.xpose.msra.mxu0 0
        %2850 = vmatprep.subr.bf16.mxu0 0
        %2851 = vmatpush1.bf16.xpose.msra.mxu0 0
        %2852 = vmatprep.subr.bf16.mxu0 0
        %2853 = vmatpush1.bf16.xpose.msra.mxu0 0
        %2854 = vmatprep.subr.bf16.mxu0 0
        %2855 = vmatpush1.bf16.xpose.msra.mxu0 0
        %2856 = vmatprep.subr.bf16.mxu0 0
        %2857 = vmatpush1.bf16.xpose.msra.mxu0 0
        %2858 = vmatprep.subr.bf16.mxu0 0
        %2859 = vmatpush1.bf16.xpose.msra.mxu0 0
        %2860 = vmatprep.subr.bf16.mxu0 0
        %2861 = vmatpush1.bf16.xpose.msra.mxu0 0
        %2862 = vmatprep.subr.bf16.mxu0 0
        %2863 = vmatpush1.bf16.xpose.msra.mxu0 0
        %2864 = vmatprep.subr.bf16.mxu0 0
        %2865 = vmatpush1.bf16.xpose.msra.mxu0 0
        %2866 = vmatprep.subr.bf16.mxu0 0
        %2867 = vmatpush1.bf16.xpose.msra.mxu0 0
        %2868 = vmatprep.mubr.bf16.mxu0 %v2281
        %2869 = vmatmul.mubr.bf16.gmra.mrb[0].mxu0 %v2280
        %v2870 = vpop.f32.mrb[0].mxu0
        %v2871 = vadd.f32 %v2831, %v2870
        %v2872 = vpop.f32.mrb[0].mxu0
        %v2873 = vpop.f32.mrb[0].mxu0
        %v2874 = vpop.f32.mrb[0].mxu0
        %2875 = vdwg.mxu0
        %2876 = vmatprep.subr.bf16.mxu0 %v2559
        %2877 = vmatpush1.bf16.xpose.msra.mxu0 %v2558
        %2878 = vmatprep.subr.bf16.mxu0 %v2575
        %2879 = vmatpush1.bf16.xpose.msra.mxu0 %v2574
        %2880 = vmatprep.subr.bf16.mxu0 %v2591
        %2881 = vmatpush1.bf16.xpose.msra.mxu0 %v2590
        %2882 = vmatprep.subr.bf16.mxu0 %v2607
        %2883 = vmatpush1.bf16.xpose.msra.mxu0 %v2606
        %2884 = vmatprep.subr.bf16.mxu0 0
        %2885 = vmatpush1.bf16.xpose.msra.mxu0 0
        %2886 = vmatprep.subr.bf16.mxu0 0
        %2887 = vmatpush1.bf16.xpose.msra.mxu0 0
        %2888 = vmatprep.subr.bf16.mxu0 0
        %2889 = vmatpush1.bf16.xpose.msra.mxu0 0
        %2890 = vmatprep.subr.bf16.mxu0 0
        %2891 = vmatpush1.bf16.xpose.msra.mxu0 0
        %2892 = vmatprep.subr.bf16.mxu0 0
        %2893 = vmatpush1.bf16.xpose.msra.mxu0 0
        %2894 = vmatprep.subr.bf16.mxu0 0
        %2895 = vmatpush1.bf16.xpose.msra.mxu0 0
        %2896 = vmatprep.subr.bf16.mxu0 0
        %2897 = vmatpush1.bf16.xpose.msra.mxu0 0
        %2898 = vmatprep.subr.bf16.mxu0 0
        %2899 = vmatpush1.bf16.xpose.msra.mxu0 0
        %2900 = vmatprep.subr.bf16.mxu0 0
        %2901 = vmatpush1.bf16.xpose.msra.mxu0 0
        %2902 = vmatprep.subr.bf16.mxu0 0
        %2903 = vmatpush1.bf16.xpose.msra.mxu0 0
        %2904 = vmatprep.subr.bf16.mxu0 0
        %2905 = vmatpush1.bf16.xpose.msra.mxu0 0
        %2906 = vmatprep.subr.bf16.mxu0 0
        %2907 = vmatpush1.bf16.xpose.msra.mxu0 0
        %2908 = vmatprep.mubr.bf16.mxu0 %v2283
        %2909 = vmatmul.mubr.bf16.gmra.mrb[0].mxu0 %v2282
        %v2910 = vpop.f32.mrb[0].mxu0
        %v2911 = vadd.f32 %v2871, %v2910
        %v2912 = vpop.f32.mrb[0].mxu0
        %v2913 = vpop.f32.mrb[0].mxu0
        %v2914 = vpop.f32.mrb[0].mxu0
        %2915 = vdwg.mxu0
        %2916 = vmatprep.subr.bf16.mxu0 %v2561
        %2917 = vmatpush1.bf16.xpose.msra.mxu0 %v2560
        %2918 = vmatprep.subr.bf16.mxu0 %v2577
        %2919 = vmatpush1.bf16.xpose.msra.mxu0 %v2576
        %2920 = vmatprep.subr.bf16.mxu0 %v2593
        %2921 = vmatpush1.bf16.xpose.msra.mxu0 %v2592
        %2922 = vmatprep.subr.bf16.mxu0 %v2609
        %2923 = vmatpush1.bf16.xpose.msra.mxu0 %v2608
        %2924 = vmatprep.subr.bf16.mxu0 0
        %2925 = vmatpush1.bf16.xpose.msra.mxu0 0
        %2926 = vmatprep.subr.bf16.mxu0 0
        %2927 = vmatpush1.bf16.xpose.msra.mxu0 0
        %2928 = vmatprep.subr.bf16.mxu0 0
        %2929 = vmatpush1.bf16.xpose.msra.mxu0 0
        %2930 = vmatprep.subr.bf16.mxu0 0
        %2931 = vmatpush1.bf16.xpose.msra.mxu0 0
        %2932 = vmatprep.subr.bf16.mxu0 0
        %2933 = vmatpush1.bf16.xpose.msra.mxu0 0
        %2934 = vmatprep.subr.bf16.mxu0 0
        %2935 = vmatpush1.bf16.xpose.msra.mxu0 0
        %2936 = vmatprep.subr.bf16.mxu0 0
        %2937 = vmatpush1.bf16.xpose.msra.mxu0 0
        %2938 = vmatprep.subr.bf16.mxu0 0
        %2939 = vmatpush1.bf16.xpose.msra.mxu0 0
        %2940 = vmatprep.subr.bf16.mxu0 0
        %2941 = vmatpush1.bf16.xpose.msra.mxu0 0
        %2942 = vmatprep.subr.bf16.mxu0 0
        %2943 = vmatpush1.bf16.xpose.msra.mxu0 0
        %2944 = vmatprep.subr.bf16.mxu0 0
        %2945 = vmatpush1.bf16.xpose.msra.mxu0 0
        %2946 = vmatprep.subr.bf16.mxu0 0
        %2947 = vmatpush1.bf16.xpose.msra.mxu0 0
        %2948 = vmatprep.mubr.bf16.mxu0 %v2285
        %2949 = vmatmul.mubr.bf16.gmra.mrb[0].mxu0 %v2284
        %v2950 = vpop.f32.mrb[0].mxu0
        %v2951 = vadd.f32 %v2911, %v2950
        %v2952 = vpop.f32.mrb[0].mxu0
        %v2953 = vpop.f32.mrb[0].mxu0
        %v2954 = vpop.f32.mrb[0].mxu0
        %2955 = vdwg.mxu0
        %2956 = vmatprep.subr.bf16.mxu0 %v2563
        %2957 = vmatpush1.bf16.xpose.msra.mxu0 %v2562
        %2958 = vmatprep.subr.bf16.mxu0 %v2579
        %2959 = vmatpush1.bf16.xpose.msra.mxu0 %v2578
        %2960 = vmatprep.subr.bf16.mxu0 %v2595
        %2961 = vmatpush1.bf16.xpose.msra.mxu0 %v2594
        %2962 = vmatprep.subr.bf16.mxu0 %v2611
        %2963 = vmatpush1.bf16.xpose.msra.mxu0 %v2610
        %2964 = vmatprep.subr.bf16.mxu0 0
        %2965 = vmatpush1.bf16.xpose.msra.mxu0 0
        %2966 = vmatprep.subr.bf16.mxu0 0
        %2967 = vmatpush1.bf16.xpose.msra.mxu0 0
        %2968 = vmatprep.subr.bf16.mxu0 0
        %2969 = vmatpush1.bf16.xpose.msra.mxu0 0
        %2970 = vmatprep.subr.bf16.mxu0 0
        %2971 = vmatpush1.bf16.xpose.msra.mxu0 0
        %2972 = vmatprep.subr.bf16.mxu0 0
        %2973 = vmatpush1.bf16.xpose.msra.mxu0 0
        %2974 = vmatprep.subr.bf16.mxu0 0
        %2975 = vmatpush1.bf16.xpose.msra.mxu0 0
        %2976 = vmatprep.subr.bf16.mxu0 0
        %2977 = vmatpush1.bf16.xpose.msra.mxu0 0
        %2978 = vmatprep.subr.bf16.mxu0 0
        %2979 = vmatpush1.bf16.xpose.msra.mxu0 0
        %2980 = vmatprep.subr.bf16.mxu0 0
        %2981 = vmatpush1.bf16.xpose.msra.mxu0 0
        %2982 = vmatprep.subr.bf16.mxu0 0
        %2983 = vmatpush1.bf16.xpose.msra.mxu0 0
        %2984 = vmatprep.subr.bf16.mxu0 0
        %2985 = vmatpush1.bf16.xpose.msra.mxu0 0
        %2986 = vmatprep.subr.bf16.mxu0 0
        %2987 = vmatpush1.bf16.xpose.msra.mxu0 0
        %2988 = vmatprep.mubr.bf16.mxu0 %v2287
        %2989 = vmatmul.mubr.bf16.gmra.mrb[0].mxu0 %v2286
        %v2990 = vpop.f32.mrb[0].mxu0
        %v2991 = vadd.f32 %v2951, %v2990
        %v2992 = vpop.f32.mrb[0].mxu0
        %v2993 = vpop.f32.mrb[0].mxu0
        %v2994 = vpop.f32.mrb[0].mxu0
        %2995 = vdwg.mxu0
        %v2996 = vadd.f32 %v1443, %v2991
        %v2997 = vsel %vm559, %v2996, 0.0
        %2998 = vadd.xlane.f32.xlu0 %v2997
        %v2999 = vpop.xlane.xlu0 %2998
        %v3000 = vmul.f32 %v2999, %v1423
        %v3001 = vsub.f32 %v2996, %v3000
        %v3002 = vmul.f32 %v3001, %v3001
        %v3003 = vsel %vm559, %v3002, 0.0
        %3004 = vadd.xlane.f32.xlu0 %v3003
        %v3005 = vpop.xlane.xlu0 %3004
        %v3006 = vmul.f32 %v3005, %v1423
        %v3007 = vadd.f32 %v3006, 1e-05
        %v3008 = vrsqrt.pop %v3007
        %v3009 = vmul.f32 %v3001, %v3008
        %v3010 = vlaneseq
        %v3011 = vshrl.u32 %v3010, 7
        %v3012 = vsub.s32 1, %v3011
        %v3013 = vrot.slane %v550, %v3012
        %v3014 = vmul.f32 %v3009, %v3013
        %3016 = vrot.lane.b32.xlu0 %v3013, 64
        %v3017 = vpop.permute.xlu0 %3016
        %v3019 = vadd.f32 %v3014, %v3017
        %3020 = vst.msk [vmem:[#allocation2] sm:$0xff] %vm559, %v3019
        %p3021 = scmp.eq.s32.totalorder %s21, 1
        // Predicated region
        $region81: #{transformer_forward.1} parent=51 // pred_check
          %p3022 = pneg %p3021
        $region82: #{transformer_forward.1} parent=51 // pred_check_branch
          %3024 = sbr.rel (%p3022) target = $region84
        $region83: #{transformer_forward.1} parent=51 // pred_region
          %v3025 = vld [vmem:[%s2 + $0x1] sm:$0x3]
          %v3026 = vld [vmem:[%s2 + $0x3] sm:$0x1]
          %v3027 = vlaneseq
          %v3028 = vshrl.u32 %v3027, 7
          %v3029 = vsub.s32 0, %v3028
          %v3030 = vrot.slane %v3026, %v3029
          %v3032 = vsel %vm559, %v3019, 0
          %v3035 = vsel %vm559, %v3025, 0
          %3037 = vmatprep.subr.mxu0 0.0
          %3038 = vmatpush1.xpose.msra.mxu0 %v3035
          %3039 = vmatprep.subr.mxu0 0.0
          %3040 = vmatpush1.xpose.msra.mxu0 0.0
          %3041 = vmatprep.subr.mxu0 0.0
          %3042 = vmatpush1.xpose.msra.mxu0 0.0
          %3043 = vmatprep.subr.mxu0 0.0
          %3044 = vmatpush1.xpose.msra.mxu0 0.0
          %3045 = vmatprep.subr.mxu0 0.0
          %3046 = vmatpush1.xpose.msra.mxu0 0.0
          %3047 = vmatprep.subr.mxu0 0.0
          %3048 = vmatpush1.xpose.msra.mxu0 0.0
          %3049 = vmatprep.subr.mxu0 0.0
          %3050 = vmatpush1.xpose.msra.mxu0 0.0
          %3051 = vmatprep.subr.mxu0 0.0
          %3052 = vmatpush1.xpose.msra.mxu0 0.0
          %3053 = vmatprep.subr.mxu0 0.0
          %3054 = vmatpush1.xpose.msra.mxu0 0.0
          %3055 = vmatprep.subr.mxu0 0.0
          %3056 = vmatpush1.xpose.msra.mxu0 0.0
          %3057 = vmatprep.subr.mxu0 0.0
          %3058 = vmatpush1.xpose.msra.mxu0 0.0
          %3059 = vmatprep.subr.mxu0 0.0
          %3060 = vmatpush1.xpose.msra.mxu0 0.0
          %3061 = vmatprep.subr.mxu0 0.0
          %3062 = vmatpush1.xpose.msra.mxu0 0.0
          %3063 = vmatprep.subr.mxu0 0.0
          %3064 = vmatpush1.xpose.msra.mxu0 0.0
          %3065 = vmatprep.subr.mxu0 0.0
          %3066 = vmatpush1.xpose.msra.mxu0 0.0
          %3067 = vmatprep.subr.mxu0 0.0
          %3068 = vmatpush1.xpose.msra.mxu0 0.0
          %3069 = vmatprep.subr.mxu0 0.0
          %3070 = vmatpush1.xpose.msra.mxu0 0.0
          %3071 = vmatprep.subr.mxu0 0.0
          %3072 = vmatpush1.xpose.msra.mxu0 0.0
          %3073 = vmatprep.subr.mxu0 0.0
          %3074 = vmatpush1.xpose.msra.mxu0 0.0
          %3075 = vmatprep.subr.mxu0 0.0
          %3076 = vmatpush1.xpose.msra.mxu0 0.0
          %3077 = vmatprep.subr.mxu0 0.0
          %3078 = vmatpush1.xpose.msra.mxu0 0.0
          %3079 = vmatprep.subr.mxu0 0.0
          %3080 = vmatpush1.xpose.msra.mxu0 0.0
          %3081 = vmatprep.subr.mxu0 0.0
          %3082 = vmatpush1.xpose.msra.mxu0 0.0
          %3083 = vmatprep.subr.mxu0 0.0
          %3084 = vmatpush1.xpose.msra.mxu0 0.0
          %3085 = vmatprep.subr.mxu0 0.0
          %3086 = vmatpush1.xpose.msra.mxu0 0.0
          %3087 = vmatprep.subr.mxu0 0.0
          %3088 = vmatpush1.xpose.msra.mxu0 0.0
          %3089 = vmatprep.subr.mxu0 0.0
          %3090 = vmatpush1.xpose.msra.mxu0 0.0
          %3091 = vmatprep.subr.mxu0 0.0
          %3092 = vmatpush1.xpose.msra.mxu0 0.0
          %3093 = vmatprep.subr.mxu0 0.0
          %3094 = vmatpush1.xpose.msra.mxu0 0.0
          %3095 = vmatprep.subr.mxu0 0.0
          %3096 = vmatpush1.xpose.msra.mxu0 0.0
          %3097 = vmatprep.subr.mxu0 0.0
          %3098 = vmatpush1.xpose.msra.mxu0 0.0
          %3099 = vmatprep.subr.mxu0 0.0
          %3100 = vmatpush1.xpose.msra.mxu0 0.0
          %3101 = vmatprep.mubr.f32.mxu0 0.0
          %3102 = vmatmul.mubr.f32.gmra.mrb[0].mxu0 %v3032
          %v3103 = vpop.f32.mrb[0].mxu0
          %v3104 = vadd.f32 %v3030, %v3103
          %v3105 = vpop.f32.mrb[0].mxu0
          %3106 = vdwg.mxu0
          %vm3107 = vcmask 15360
          %3108 = vst.msk [vmem:[%s8] sm:$0xff] %vm3107, %v3104
        $region84: #{transformer_forward.1} parent=51 // pred_fallthru
          _
        // Predicated region
        $region85: #{transformer_forward.1} parent=51 // pred_check
          %p3109 = pneg %p222
        $region86: #{transformer_forward.1} parent=51 // pred_check_branch
          %3111 = sbr.rel (%p3109) target = $region88
        $region87: #{transformer_forward.1} parent=51 // pred_region
          _
        $region88: #{transformer_forward.1} parent=51 // pred_fallthru
          _
        // Predicated region
        $region89: #{transformer_forward.1} parent=51 // pred_check
          %p3112 = pneg %p222
        $region90: #{transformer_forward.1} parent=51 // pred_check_branch
          %3114 = sbr.rel (%p3112) target = $region92
        $region91: #{transformer_forward.1} parent=51 // pred_region
          _
        $region92: #{transformer_forward.1} parent=51 // pred_fallthru
          _
      $region52: #{transformer_forward.1} parent=5 // pred_fallthru
        _
      %p3115 = scmp.le.s32.totalorder 2, %s16
      // Predicated region
      $region93: #{transformer_forward.1} parent=5 // pred_check
        %p3116 = pneg %p3115
      $region94: #{transformer_forward.1} parent=5 // pred_check_branch
        %3118 = sbr.rel (%p3116) target = $region96
      $region95: #{transformer_forward.1} parent=5 // pred_region
        %s3119 = ssub.s32 %s16, 2
      $region96: #{transformer_forward.1} parent=5 // pred_fallthru
        _
    $region6: #{transformer_forward.1} parent=1 // loop_footer
      %s20 = sadd.s32 1, %s16
    $region7: #{transformer_forward.1} parent=1 // loop_footer_branch
      %15 = sbr.rel target = $region3
    $region8: #{transformer_forward.1} parent=1 // loop_exit
      _
    %3120 = vsyncpa [#allocation4], 1
    %s3121 = scalar_lea.sflag [#allocation4], 1
    %3122 = vsyncpa %s3121, 1
    %3123 = vsyncpa [#allocation6], 1

</llo_original>
